<compile_context>
chip_gen: v6e
topology: v6e:2x2x1
jax: 0.10.0
libtpu: 0.0.40
codegen_flags: <defaults>
</compile_context>

<pallas_src>
import functools

import jax
import jax.numpy as jnp
from jax import lax
from jax.experimental import pallas as pl
from jax.experimental.pallas import tpu as pltpu


# ----------------------------------------------------------------------------
# 1) Batched input projection: gi = x @ [W_ir|W_iz|W_in]^T + fused biases
#    x_flat: (M, Din) with M = T*B  ->  gi_flat: (M, 3H)
# ----------------------------------------------------------------------------
def input_proj_kernel(x_ref, wi_ref, bi_ref, gi_ref):
    gi_ref[...] = (
        jnp.dot(x_ref[...], wi_ref[...], preferred_element_type=jnp.float32)
        + bi_ref[...]
    )


def run_input_proj(x_flat, wi_fused, bi_fused):
    M, Din = x_flat.shape
    G = wi_fused.shape[1]  # 3H
    return pl.pallas_call(
        input_proj_kernel,
        out_shape=jax.ShapeDtypeStruct((M, G), jnp.float32),
        grid=(1,),
        in_specs=[
            pl.BlockSpec((M, Din), lambda i: (0, 0)),
            pl.BlockSpec((Din, G), lambda i: (0, 0)),
            pl.BlockSpec((1, G), lambda i: (0, 0)),
        ],
        out_specs=pl.BlockSpec((M, G), lambda i: (0, 0)),
        compiler_params=pltpu.CompilerParams(
            dimension_semantics=("arbitrary",)),
    )(x_flat, wi_fused, bi_fused)


# ----------------------------------------------------------------------------
# 2) Recurrence over time.  PyTorch GRU cell semantics:
#   r = sigmoid(gi_r + h W_hr^T)          (b_ir + b_hr folded into gi_r)
#   z = sigmoid(gi_z + h W_hz^T)          (b_iz + b_hz folded into gi_z)
#   n = tanh   (gi_n + r * (h W_hn^T + b_hn))   (gi_n carries b_in)
#   h = (1 - z) * n + z * h
# ----------------------------------------------------------------------------
def _gru_step(t, h_prev, gi_ref, wh, bhn, hidden_size):
    H = hidden_size
    gi = gi_ref[t]                                            # (B, 3H)
    gh = jnp.dot(h_prev, wh, preferred_element_type=jnp.float32)  # (B, 3H)
    r = jax.nn.sigmoid(gi[:, :H] + gh[:, :H])
    z = jax.nn.sigmoid(gi[:, H:2 * H] + gh[:, H:2 * H])
    n = jnp.tanh(gi[:, 2 * H:] + r * (gh[:, 2 * H:] + bhn))
    return (1.0 - z) * n + z * h_prev


def gru_recurrence_kernel(gi_ref, wh_ref, bhn_ref, hseq_ref, *, hidden_size):
    T, B, _ = gi_ref.shape
    wh = wh_ref[...]          # (H, 3H) loaded once, stays in registers/VMEM
    bhn = bhn_ref[...]        # (1, H)

    def body(t, h_prev):
        h_new = _gru_step(t, h_prev, gi_ref, wh, bhn, hidden_size)
        hseq_ref[t] = h_new.astype(hseq_ref.dtype)
        return h_new

    h0 = jnp.zeros((B, hidden_size), jnp.float32)
    lax.fori_loop(0, T, body, h0, unroll=True)


def gru_final_kernel(gi_ref, wh_ref, bhn_ref, wfc_ref, bfc_ref, out_ref,
                     *, hidden_size):
    T, B, _ = gi_ref.shape
    wh = wh_ref[...]
    bhn = bhn_ref[...]

    def body(t, h_prev):
        return _gru_step(t, h_prev, gi_ref, wh, bhn, hidden_size)

    h0 = jnp.zeros((B, hidden_size), jnp.float32)
    h_last = lax.fori_loop(0, T, body, h0, unroll=True)
    out_ref[...] = (
        jnp.dot(h_last, wfc_ref[...], preferred_element_type=jnp.float32)
        + bfc_ref[...]
    )


def run_gru_recurrence(gi, wh_fused, bhn):
    T, B, G = gi.shape
    H = G // 3
    kernel = functools.partial(gru_recurrence_kernel, hidden_size=H)
    return pl.pallas_call(
        kernel,
        out_shape=jax.ShapeDtypeStruct((T, B, H), jnp.float32),
        grid=(1,),
        in_specs=[
            pl.BlockSpec((T, B, G), lambda i: (0, 0, 0)),
            pl.BlockSpec((H, G), lambda i: (0, 0)),
            pl.BlockSpec((1, H), lambda i: (0, 0)),
        ],
        out_specs=pl.BlockSpec((T, B, H), lambda i: (0, 0, 0)),
        compiler_params=pltpu.CompilerParams(
            dimension_semantics=("arbitrary",)),
    )(gi, wh_fused, bhn)


def run_gru_final(gi, wh_fused, bhn, w_fc_t, b_fc):
    T, B, G = gi.shape
    H = G // 3
    kernel = functools.partial(gru_final_kernel, hidden_size=H)
    return pl.pallas_call(
        kernel,
        out_shape=jax.ShapeDtypeStruct((B, 1), jnp.float32),
        grid=(1,),
        in_specs=[
            pl.BlockSpec((T, B, G), lambda i: (0, 0, 0)),
            pl.BlockSpec((H, G), lambda i: (0, 0)),
            pl.BlockSpec((1, H), lambda i: (0, 0)),
            pl.BlockSpec((H, 1), lambda i: (0, 0)),
            pl.BlockSpec((1, 1), lambda i: (0, 0)),
        ],
        out_specs=pl.BlockSpec((B, 1), lambda i: (0, 0)),
        compiler_params=pltpu.CompilerParams(
            dimension_semantics=("arbitrary",)),
    )(gi, wh_fused, bhn, w_fc_t, b_fc)


# ----------------------------------------------------------------------------
# Parameter init (PyTorch layout: weight_ih (3H, Din), weight_hh (3H, H),
# biases (3H,), gate order [r; z; n]) then fused into the kernel layout.
# ----------------------------------------------------------------------------
def _pack_gru_layer(w_ih, w_hh, b_ih, b_hh):
    H = w_hh.shape[1]
    # (Din, 3H) / (H, 3H): columns ordered r | z | n  (== transposed torch wts)
    wi_fused = jnp.transpose(w_ih)
    wh_fused = jnp.transpose(w_hh)
    b_ir, b_iz, b_in_ = b_ih[:H], b_ih[H:2 * H], b_ih[2 * H:]
    b_hr, b_hz, b_hn = b_hh[:H], b_hh[H:2 * H], b_hh[2 * H:]
    bi_fused = jnp.concatenate([b_ir + b_hr, b_iz + b_hz, b_in_])[None, :]
    return {
        "wi_fused": wi_fused,            # (Din, 3H)
        "wh_fused": wh_fused,            # (H, 3H)
        "bi_fused": bi_fused,            # (1, 3H)
        "bhn": b_hn[None, :],            # (1, H)
    }


def init_params(key, input_size, hidden_size, num_layers):
    H = hidden_size
    k = 1.0 / (H ** 0.5)
    layers = []
    for layer in range(num_layers):
        din = input_size if layer == 0 else H
        key, k1, k2, k3, k4 = jax.random.split(key, 5)
        w_ih = jax.random.uniform(k1, (3 * H, din), jnp.float32, -k, k)
        w_hh = jax.random.uniform(k2, (3 * H, H), jnp.float32, -k, k)
        b_ih = jax.random.uniform(k3, (3 * H,), jnp.float32, -k, k)
        b_hh = jax.random.uniform(k4, (3 * H,), jnp.float32, -k, k)
        layers.append(_pack_gru_layer(w_ih, w_hh, b_ih, b_hh))
    key, k1, k2 = jax.random.split(key, 3)
    w_fc = jax.random.uniform(k1, (1, H), jnp.float32, -k, k)   # torch Linear
    b_fc = jax.random.uniform(k2, (1,), jnp.float32, -k, k)
    return {
        "layers": layers,
        "w_fc_t": jnp.transpose(w_fc),   # (H, 1)
        "b_fc": b_fc[None, :],           # (1, 1)
    }


# ----------------------------------------------------------------------------
# Full forward:   _, h_n = gru(x);  return fc(h_n[-1]).squeeze()
# ----------------------------------------------------------------------------
@jax.jit
def gru_forecast_forward(x_btd, params):
    # x_btd: (B, T, D) batch_first, matching the PyTorch module.
    # TODO(synk): nn.GRU inter-layer dropout is a training-only op; this is
    # the eval-mode forward (dropout == identity).
    x_tm = jnp.transpose(x_btd, (1, 0, 2)).astype(jnp.float32)   # (T, B, D)
    n_layers = len(params["layers"])
    h_in = x_tm
    out = None
    for li, lp in enumerate(params["layers"]):
        T, B, Din = h_in.shape
        G = lp["wi_fused"].shape[1]                              # 3H
        # Precompute input-gate projections for all timesteps (M = T*B).
        gi_flat = run_input_proj(h_in.reshape(T * B, Din),
                                 lp["wi_fused"], lp["bi_fused"])
        gi = gi_flat.reshape(T, B, G)                            # time-major
        if li < n_layers - 1:
            h_in = run_gru_recurrence(gi, lp["wh_fused"], lp["bhn"])
        else:
            out = run_gru_final(gi, lp["wh_fused"], lp["bhn"],
                                params["w_fc_t"], params["b_fc"])   # (B, 1)
    return jnp.squeeze(out)                                      # (B,)


if __name__ == "__main__":
    B, T, D, H, L = 2, 8, 4, 32, 2

    key = jax.random.PRNGKey(0)
    key, pkey, xkey = jax.random.split(key, 3)
    params = init_params(pkey, input_size=D, hidden_size=H, num_layers=L)
    x = jax.random.normal(xkey, (B, T, D), jnp.float32)

    y = gru_forecast_forward(x, params)
    jax.block_until_ready(y)
    assert y.shape == (B,), y.shape
    print("KERNEL_OK")
</pallas_src>

<mosaic_0001>
module attributes {stable_mosaic.version = 11 : i64} {
  func.func @input_proj_kernel(%arg0: i32, %arg1: memref<16x32xf32, #tpu.memory_space<vmem>>, %arg2: memref<32x96xf32, #tpu.memory_space<vmem>>, %arg3: memref<1x96xf32, #tpu.memory_space<vmem>>, %arg4: memref<16x96xf32, #tpu.memory_space<vmem>>) attributes {dimension_semantics = [#tpu.dimension_semantics<arbitrary>], iteration_bounds = array<i64: 1>, scalar_prefetch = 0 : i64, scratch_operands = 0 : i64, tpu.core_type = #tpu.core_type<tc>, window_params = [{pipeline_mode = #tpu.pipeline_mode<synchronous>, transform_indices = @transform_0, window_bounds = array<i64: 16, 32>}, {pipeline_mode = #tpu.pipeline_mode<synchronous>, transform_indices = @transform_1, window_bounds = array<i64: 32, 96>}, {pipeline_mode = #tpu.pipeline_mode<synchronous>, transform_indices = @transform_2, window_bounds = array<i64: 1, 96>}, {pipeline_mode = #tpu.pipeline_mode<synchronous>, transform_indices = @transform_3, window_bounds = array<i64: 16, 96>}]} {
    %c0 = arith.constant 0 : index
    %c0_0 = arith.constant 0 : index
    %0 = vector.load %arg1[%c0, %c0_0] : memref<16x32xf32, #tpu.memory_space<vmem>>, vector<16x32xf32>
    %c0_1 = arith.constant 0 : index
    %c0_2 = arith.constant 0 : index
    %1 = vector.load %arg2[%c0_1, %c0_2] : memref<32x96xf32, #tpu.memory_space<vmem>>, vector<32x96xf32>
    %cst = arith.constant dense<0.000000e+00> : vector<16x96xf32>
    %2 = tpu.matmul %0, %1, %cst {dimension_numbers = #tpu.dot_dimension_numbers<[1], [0], [0], [1], [0, 0, 1, 1], [], []>} : vector<16x32xf32>, vector<32x96xf32>, vector<16x96xf32> -> vector<16x96xf32>
    %c0_3 = arith.constant 0 : index
    %c0_4 = arith.constant 0 : index
    %3 = vector.load %arg3[%c0_3, %c0_4] : memref<1x96xf32, #tpu.memory_space<vmem>>, vector<1x96xf32>
    %4 = vector.broadcast %3 : vector<1x96xf32> to vector<16x96xf32>
    %5 = arith.addf %2, %4 : vector<16x96xf32>
    %c0_5 = arith.constant 0 : index
    %c0_6 = arith.constant 0 : index
    %6 = vector.load %arg4[%c0_5, %c0_6] : memref<16x96xf32, #tpu.memory_space<vmem>>, vector<16x96xf32>
    tpu.vector_store %arg4[%c0_5, %c0_6], %5 {strides = array<i32>} : memref<16x96xf32, #tpu.memory_space<vmem>>, vector<16x96xf32>,
    return
  }
  func.func @transform_0(%arg0: i32) -> (i32, i32) {
    %c0_i32 = arith.constant 0 : i32
    %c0_i32_0 = arith.constant 0 : i32
    %c0_i32_1 = arith.constant 0 : i32
    return %c0_i32, %c0_i32_0 : i32, i32
  }
  func.func @transform_1(%arg0: i32) -> (i32, i32) {
    %c0_i32 = arith.constant 0 : i32
    %c0_i32_0 = arith.constant 0 : i32
    %c0_i32_1 = arith.constant 0 : i32
    return %c0_i32, %c0_i32_0 : i32, i32
  }
  func.func @transform_2(%arg0: i32) -> (i32, i32) {
    %c0_i32 = arith.constant 0 : i32
    %c0_i32_0 = arith.constant 0 : i32
    %c0_i32_1 = arith.constant 0 : i32
    return %c0_i32, %c0_i32_0 : i32, i32
  }
  func.func @transform_3(%arg0: i32) -> (i32, i32) {
    %c0_i32 = arith.constant 0 : i32
    %c0_i32_0 = arith.constant 0 : i32
    %c0_i32_1 = arith.constant 0 : i32
    return %c0_i32, %c0_i32_0 : i32, i32
  }
}

module attributes {stable_mosaic.version = 11 : i64} {
  func.func @input_proj_kernel(%arg0: i32, %arg1: memref<16x4xf32, #tpu.memory_space<vmem>>, %arg2: memref<4x96xf32, #tpu.memory_space<vmem>>, %arg3: memref<1x96xf32, #tpu.memory_space<vmem>>, %arg4: memref<16x96xf32, #tpu.memory_space<vmem>>) attributes {dimension_semantics = [#tpu.dimension_semantics<arbitrary>], iteration_bounds = array<i64: 1>, scalar_prefetch = 0 : i64, scratch_operands = 0 : i64, tpu.core_type = #tpu.core_type<tc>, window_params = [{pipeline_mode = #tpu.pipeline_mode<synchronous>, transform_indices = @transform_0, window_bounds = array<i64: 16, 4>}, {pipeline_mode = #tpu.pipeline_mode<synchronous>, transform_indices = @transform_1, window_bounds = array<i64: 4, 96>}, {pipeline_mode = #tpu.pipeline_mode<synchronous>, transform_indices = @transform_2, window_bounds = array<i64: 1, 96>}, {pipeline_mode = #tpu.pipeline_mode<synchronous>, transform_indices = @transform_3, window_bounds = array<i64: 16, 96>}]} {
    %c0 = arith.constant 0 : index
    %c0_0 = arith.constant 0 : index
    %0 = vector.load %arg1[%c0, %c0_0] : memref<16x4xf32, #tpu.memory_space<vmem>>, vector<16x4xf32>
    %c0_1 = arith.constant 0 : index
    %c0_2 = arith.constant 0 : index
    %1 = vector.load %arg2[%c0_1, %c0_2] : memref<4x96xf32, #tpu.memory_space<vmem>>, vector<4x96xf32>
    %cst = arith.constant dense<0.000000e+00> : vector<16x96xf32>
    %2 = tpu.matmul %0, %1, %cst {dimension_numbers = #tpu.dot_dimension_numbers<[1], [0], [0], [1], [0, 0, 1, 1], [], []>} : vector<16x4xf32>, vector<4x96xf32>, vector<16x96xf32> -> vector<16x96xf32>
    %c0_3 = arith.constant 0 : index
    %c0_4 = arith.constant 0 : index
    %3 = vector.load %arg3[%c0_3, %c0_4] : memref<1x96xf32, #tpu.memory_space<vmem>>, vector<1x96xf32>
    %4 = vector.broadcast %3 : vector<1x96xf32> to vector<16x96xf32>
    %5 = arith.addf %2, %4 : vector<16x96xf32>
    %c0_5 = arith.constant 0 : index
    %c0_6 = arith.constant 0 : index
    %6 = vector.load %arg4[%c0_5, %c0_6] : memref<16x96xf32, #tpu.memory_space<vmem>>, vector<16x96xf32>
    tpu.vector_store %arg4[%c0_5, %c0_6], %5 {strides = array<i32>} : memref<16x96xf32, #tpu.memory_space<vmem>>, vector<16x96xf32>,
    return
  }
  func.func @transform_0(%arg0: i32) -> (i32, i32) {
    %c0_i32 = arith.constant 0 : i32
    %c0_i32_0 = arith.constant 0 : i32
    %c0_i32_1 = arith.constant 0 : i32
    return %c0_i32, %c0_i32_0 : i32, i32
  }
  func.func @transform_1(%arg0: i32) -> (i32, i32) {
    %c0_i32 = arith.constant 0 : i32
    %c0_i32_0 = arith.constant 0 : i32
    %c0_i32_1 = arith.constant 0 : i32
    return %c0_i32, %c0_i32_0 : i32, i32
  }
  func.func @transform_2(%arg0: i32) -> (i32, i32) {
    %c0_i32 = arith.constant 0 : i32
    %c0_i32_0 = arith.constant 0 : i32
    %c0_i32_1 = arith.constant 0 : i32
    return %c0_i32, %c0_i32_0 : i32, i32
  }
  func.func @transform_3(%arg0: i32) -> (i32, i32) {
    %c0_i32 = arith.constant 0 : i32
    %c0_i32_0 = arith.constant 0 : i32
    %c0_i32_1 = arith.constant 0 : i32
    return %c0_i32, %c0_i32_0 : i32, i32
  }
}

module attributes {stable_mosaic.version = 11 : i64} {
  func.func @gru_recurrence_kernel(%arg0: i32, %arg1: memref<8x2x96xf32, #tpu.memory_space<vmem>>, %arg2: memref<32x96xf32, #tpu.memory_space<vmem>>, %arg3: memref<1x32xf32, #tpu.memory_space<vmem>>, %arg4: memref<8x2x32xf32, #tpu.memory_space<vmem>>) attributes {dimension_semantics = [#tpu.dimension_semantics<arbitrary>], iteration_bounds = array<i64: 1>, scalar_prefetch = 0 : i64, scratch_operands = 0 : i64, tpu.core_type = #tpu.core_type<tc>, window_params = [{pipeline_mode = #tpu.pipeline_mode<synchronous>, transform_indices = @transform_0, window_bounds = array<i64: 8, 2, 96>}, {pipeline_mode = #tpu.pipeline_mode<synchronous>, transform_indices = @transform_1, window_bounds = array<i64: 32, 96>}, {pipeline_mode = #tpu.pipeline_mode<synchronous>, transform_indices = @transform_2, window_bounds = array<i64: 1, 32>}, {pipeline_mode = #tpu.pipeline_mode<synchronous>, transform_indices = @transform_3, window_bounds = array<i64: 8, 2, 32>}]} {
    %c0 = arith.constant 0 : index
    %c0_0 = arith.constant 0 : index
    %0 = vector.load %arg2[%c0, %c0_0] : memref<32x96xf32, #tpu.memory_space<vmem>>, vector<32x96xf32>
    %c0_1 = arith.constant 0 : index
    %c0_2 = arith.constant 0 : index
    %1 = vector.load %arg3[%c0_1, %c0_2] : memref<1x32xf32, #tpu.memory_space<vmem>>, vector<1x32xf32>
    %cst = arith.constant 0.000000e+00 : f32
    %2 = vector.broadcast %cst : f32 to vector<2x32xf32>
    %c0_i32 = arith.constant 0 : i32
    %3 = arith.index_cast %c0_i32 : i32 to index
    %c0_3 = arith.constant 0 : index
    %c0_4 = arith.constant 0 : index
    %4 = vector.load %arg1[%3, %c0_3, %c0_4] : memref<8x2x96xf32, #tpu.memory_space<vmem>>, vector<1x2x96xf32>
    %5 = vector.shape_cast %4 : vector<1x2x96xf32> to vector<2x96xf32>
    %cst_5 = arith.constant dense<0.000000e+00> : vector<2x96xf32>
    %6 = tpu.matmul %2, %0, %cst_5 {dimension_numbers = #tpu.dot_dimension_numbers<[1], [0], [0], [1], [0, 0, 1, 1], [], []>} : vector<2x32xf32>, vector<32x96xf32>, vector<2x96xf32> -> vector<2x96xf32>
    %7 = vector.extract_strided_slice %5 {offsets = [0, 0], sizes = [2, 32], strides = [1, 1]} : vector<2x96xf32> to vector<2x32xf32>
    %8 = vector.extract_strided_slice %6 {offsets = [0, 0], sizes = [2, 32], strides = [1, 1]} : vector<2x96xf32> to vector<2x32xf32>
    %9 = arith.addf %7, %8 : vector<2x32xf32>
    %10 = arith.negf %9 : vector<2x32xf32>
    %11 = math.exp %10 : vector<2x32xf32>
    %cst_6 = arith.constant 1.000000e+00 : f32
    %12 = vector.broadcast %cst_6 : f32 to vector<2x32xf32>
    %13 = arith.addf %12, %11 : vector<2x32xf32>
    %14 = arith.divf %12, %13 : vector<2x32xf32>
    %15 = vector.extract_strided_slice %5 {offsets = [0, 32], sizes = [2, 32], strides = [1, 1]} : vector<2x96xf32> to vector<2x32xf32>
    %16 = vector.extract_strided_slice %6 {offsets = [0, 32], sizes = [2, 32], strides = [1, 1]} : vector<2x96xf32> to vector<2x32xf32>
    %17 = arith.addf %15, %16 : vector<2x32xf32>
    %18 = arith.negf %17 : vector<2x32xf32>
    %19 = math.exp %18 : vector<2x32xf32>
    %cst_7 = arith.constant 1.000000e+00 : f32
    %20 = vector.broadcast %cst_7 : f32 to vector<2x32xf32>
    %21 = arith.addf %20, %19 : vector<2x32xf32>
    %22 = arith.divf %20, %21 : vector<2x32xf32>
    %23 = vector.extract_strided_slice %5 {offsets = [0, 64], sizes = [2, 32], strides = [1, 1]} : vector<2x96xf32> to vector<2x32xf32>
    %24 = vector.extract_strided_slice %6 {offsets = [0, 64], sizes = [2, 32], strides = [1, 1]} : vector<2x96xf32> to vector<2x32xf32>
    %25 = vector.broadcast %1 : vector<1x32xf32> to vector<2x32xf32>
    %26 = arith.addf %24, %25 : vector<2x32xf32>
    %27 = arith.mulf %14, %26 : vector<2x32xf32>
    %28 = arith.addf %23, %27 : vector<2x32xf32>
    %29 = math.tanh %28 : vector<2x32xf32>
    %cst_8 = arith.constant 1.000000e+00 : f32
    %30 = vector.broadcast %cst_8 : f32 to vector<2x32xf32>
    %31 = arith.subf %30, %22 : vector<2x32xf32>
    %32 = arith.mulf %31, %29 : vector<2x32xf32>
    %33 = arith.mulf %22, %2 : vector<2x32xf32>
    %34 = arith.addf %32, %33 : vector<2x32xf32>
    %35 = arith.index_cast %c0_i32 : i32 to index
    %c0_9 = arith.constant 0 : index
    %c0_10 = arith.constant 0 : index
    %36 = vector.load %arg4[%35, %c0_9, %c0_10] : memref<8x2x32xf32, #tpu.memory_space<vmem>>, vector<1x2x32xf32>
    %37 = vector.shape_cast %36 : vector<1x2x32xf32> to vector<2x32xf32>
    %38 = vector.shape_cast %34 : vector<2x32xf32> to vector<1x2x32xf32>
    tpu.vector_store %arg4[%35, %c0_9, %c0_10], %38 {strides = array<i32>} : memref<8x2x32xf32, #tpu.memory_space<vmem>>, vector<1x2x32xf32>,
    %c1_i32 = arith.constant 1 : i32
    %39 = arith.index_cast %c1_i32 : i32 to index
    %c0_11 = arith.constant 0 : index
    %c0_12 = arith.constant 0 : index
    %40 = vector.load %arg1[%39, %c0_11, %c0_12] : memref<8x2x96xf32, #tpu.memory_space<vmem>>, vector<1x2x96xf32>
    %41 = vector.shape_cast %40 : vector<1x2x96xf32> to vector<2x96xf32>
    %cst_13 = arith.constant dense<0.000000e+00> : vector<2x96xf32>
    %42 = tpu.matmul %34, %0, %cst_13 {dimension_numbers = #tpu.dot_dimension_numbers<[1], [0], [0], [1], [0, 0, 1, 1], [], []>} : vector<2x32xf32>, vector<32x96xf32>, vector<2x96xf32> -> vector<2x96xf32>
    %43 = vector.extract_strided_slice %41 {offsets = [0, 0], sizes = [2, 32], strides = [1, 1]} : vector<2x96xf32> to vector<2x32xf32>
    %44 = vector.extract_strided_slice %42 {offsets = [0, 0], sizes = [2, 32], strides = [1, 1]} : vector<2x96xf32> to vector<2x32xf32>
    %45 = arith.addf %43, %44 : vector<2x32xf32>
    %46 = arith.negf %45 : vector<2x32xf32>
    %47 = math.exp %46 : vector<2x32xf32>
    %cst_14 = arith.constant 1.000000e+00 : f32
    %48 = vector.broadcast %cst_14 : f32 to vector<2x32xf32>
    %49 = arith.addf %48, %47 : vector<2x32xf32>
    %50 = arith.divf %48, %49 : vector<2x32xf32>
    %51 = vector.extract_strided_slice %41 {offsets = [0, 32], sizes = [2, 32], strides = [1, 1]} : vector<2x96xf32> to vector<2x32xf32>
    %52 = vector.extract_strided_slice %42 {offsets = [0, 32], sizes = [2, 32], strides = [1, 1]} : vector<2x96xf32> to vector<2x32xf32>
    %53 = arith.addf %51, %52 : vector<2x32xf32>
    %54 = arith.negf %53 : vector<2x32xf32>
    %55 = math.exp %54 : vector<2x32xf32>
    %cst_15 = arith.constant 1.000000e+00 : f32
    %56 = vector.broadcast %cst_15 : f32 to vector<2x32xf32>
    %57 = arith.addf %56, %55 : vector<2x32xf32>
    %58 = arith.divf %56, %57 : vector<2x32xf32>
    %59 = vector.extract_strided_slice %41 {offsets = [0, 64], sizes = [2, 32], strides = [1, 1]} : vector<2x96xf32> to vector<2x32xf32>
    %60 = vector.extract_strided_slice %42 {offsets = [0, 64], sizes = [2, 32], strides = [1, 1]} : vector<2x96xf32> to vector<2x32xf32>
    %61 = vector.broadcast %1 : vector<1x32xf32> to vector<2x32xf32>
    %62 = arith.addf %60, %61 : vector<2x32xf32>
    %63 = arith.mulf %50, %62 : vector<2x32xf32>
    %64 = arith.addf %59, %63 : vector<2x32xf32>
    %65 = math.tanh %64 : vector<2x32xf32>
    %cst_16 = arith.constant 1.000000e+00 : f32
    %66 = vector.broadcast %cst_16 : f32 to vector<2x32xf32>
    %67 = arith.subf %66, %58 : vector<2x32xf32>
    %68 = arith.mulf %67, %65 : vector<2x32xf32>
    %69 = arith.mulf %58, %34 : vector<2x32xf32>
    %70 = arith.addf %68, %69 : vector<2x32xf32>
    %71 = arith.index_cast %c1_i32 : i32 to index
    %c0_17 = arith.constant 0 : index
    %c0_18 = arith.constant 0 : index
    %72 = vector.load %arg4[%71, %c0_17, %c0_18] : memref<8x2x32xf32, #tpu.memory_space<vmem>>, vector<1x2x32xf32>
    %73 = vector.shape_cast %72 : vector<1x2x32xf32> to vector<2x32xf32>
    %74 = vector.shape_cast %70 : vector<2x32xf32> to vector<1x2x32xf32>
    tpu.vector_store %arg4[%71, %c0_17, %c0_18], %74 {strides = array<i32>} : memref<8x2x32xf32, #tpu.memory_space<vmem>>, vector<1x2x32xf32>,
    %c2_i32 = arith.constant 2 : i32
    %75 = arith.index_cast %c2_i32 : i32 to index
    %c0_19 = arith.constant 0 : index
    %c0_20 = arith.constant 0 : index
    %76 = vector.load %arg1[%75, %c0_19, %c0_20] : memref<8x2x96xf32, #tpu.memory_space<vmem>>, vector<1x2x96xf32>
    %77 = vector.shape_cast %76 : vector<1x2x96xf32> to vector<2x96xf32>
    %cst_21 = arith.constant dense<0.000000e+00> : vector<2x96xf32>
    %78 = tpu.matmul %70, %0, %cst_21 {dimension_numbers = #tpu.dot_dimension_numbers<[1], [0], [0], [1], [0, 0, 1, 1], [], []>} : vector<2x32xf32>, vector<32x96xf32>, vector<2x96xf32> -> vector<2x96xf32>
    %79 = vector.extract_strided_slice %77 {offsets = [0, 0], sizes = [2, 32], strides = [1, 1]} : vector<2x96xf32> to vector<2x32xf32>
    %80 = vector.extract_strided_slice %78 {offsets = [0, 0], sizes = [2, 32], strides = [1, 1]} : vector<2x96xf32> to vector<2x32xf32>
    %81 = arith.addf %79, %80 : vector<2x32xf32>
    %82 = arith.negf %81 : vector<2x32xf32>
    %83 = math.exp %82 : vector<2x32xf32>
    %cst_22 = arith.constant 1.000000e+00 : f32
    %84 = vector.broadcast %cst_22 : f32 to vector<2x32xf32>
    %85 = arith.addf %84, %83 : vector<2x32xf32>
    %86 = arith.divf %84, %85 : vector<2x32xf32>
    %87 = vector.extract_strided_slice %77 {offsets = [0, 32], sizes = [2, 32], strides = [1, 1]} : vector<2x96xf32> to vector<2x32xf32>
    %88 = vector.extract_strided_slice %78 {offsets = [0, 32], sizes = [2, 32], strides = [1, 1]} : vector<2x96xf32> to vector<2x32xf32>
    %89 = arith.addf %87, %88 : vector<2x32xf32>
    %90 = arith.negf %89 : vector<2x32xf32>
    %91 = math.exp %90 : vector<2x32xf32>
    %cst_23 = arith.constant 1.000000e+00 : f32
    %92 = vector.broadcast %cst_23 : f32 to vector<2x32xf32>
    %93 = arith.addf %92, %91 : vector<2x32xf32>
    %94 = arith.divf %92, %93 : vector<2x32xf32>
    %95 = vector.extract_strided_slice %77 {offsets = [0, 64], sizes = [2, 32], strides = [1, 1]} : vector<2x96xf32> to vector<2x32xf32>
    %96 = vector.extract_strided_slice %78 {offsets = [0, 64], sizes = [2, 32], strides = [1, 1]} : vector<2x96xf32> to vector<2x32xf32>
    %97 = vector.broadcast %1 : vector<1x32xf32> to vector<2x32xf32>
    %98 = arith.addf %96, %97 : vector<2x32xf32>
    %99 = arith.mulf %86, %98 : vector<2x32xf32>
    %100 = arith.addf %95, %99 : vector<2x32xf32>
    %101 = math.tanh %100 : vector<2x32xf32>
    %cst_24 = arith.constant 1.000000e+00 : f32
    %102 = vector.broadcast %cst_24 : f32 to vector<2x32xf32>
    %103 = arith.subf %102, %94 : vector<2x32xf32>
    %104 = arith.mulf %103, %101 : vector<2x32xf32>
    %105 = arith.mulf %94, %70 : vector<2x32xf32>
    %106 = arith.addf %104, %105 : vector<2x32xf32>
    %107 = arith.index_cast %c2_i32 : i32 to index
    %c0_25 = arith.constant 0 : index
    %c0_26 = arith.constant 0 : index
    %108 = vector.load %arg4[%107, %c0_25, %c0_26] : memref<8x2x32xf32, #tpu.memory_space<vmem>>, vector<1x2x32xf32>
    %109 = vector.shape_cast %108 : vector<1x2x32xf32> to vector<2x32xf32>
    %110 = vector.shape_cast %106 : vector<2x32xf32> to vector<1x2x32xf32>
    tpu.vector_store %arg4[%107, %c0_25, %c0_26], %110 {strides = array<i32>} : memref<8x2x32xf32, #tpu.memory_space<vmem>>, vector<1x2x32xf32>,
    %c3_i32 = arith.constant 3 : i32
    %111 = arith.index_cast %c3_i32 : i32 to index
    %c0_27 = arith.constant 0 : index
    %c0_28 = arith.constant 0 : index
    %112 = vector.load %arg1[%111, %c0_27, %c0_28] : memref<8x2x96xf32, #tpu.memory_space<vmem>>, vector<1x2x96xf32>
    %113 = vector.shape_cast %112 : vector<1x2x96xf32> to vector<2x96xf32>
    %cst_29 = arith.constant dense<0.000000e+00> : vector<2x96xf32>
    %114 = tpu.matmul %106, %0, %cst_29 {dimension_numbers = #tpu.dot_dimension_numbers<[1], [0], [0], [1], [0, 0, 1, 1], [], []>} : vector<2x32xf32>, vector<32x96xf32>, vector<2x96xf32> -> vector<2x96xf32>
    %115 = vector.extract_strided_slice %113 {offsets = [0, 0], sizes = [2, 32], strides = [1, 1]} : vector<2x96xf32> to vector<2x32xf32>
    %116 = vector.extract_strided_slice %114 {offsets = [0, 0], sizes = [2, 32], strides = [1, 1]} : vector<2x96xf32> to vector<2x32xf32>
    %117 = arith.addf %115, %116 : vector<2x32xf32>
    %118 = arith.negf %117 : vector<2x32xf32>
    %119 = math.exp %118 : vector<2x32xf32>
    %cst_30 = arith.constant 1.000000e+00 : f32
    %120 = vector.broadcast %cst_30 : f32 to vector<2x32xf32>
    %121 = arith.addf %120, %119 : vector<2x32xf32>
    %122 = arith.divf %120, %121 : vector<2x32xf32>
    %123 = vector.extract_strided_slice %113 {offsets = [0, 32], sizes = [2, 32], strides = [1, 1]} : vector<2x96xf32> to vector<2x32xf32>
    %124 = vector.extract_strided_slice %114 {offsets = [0, 32], sizes = [2, 32], strides = [1, 1]} : vector<2x96xf32> to vector<2x32xf32>
    %125 = arith.addf %123, %124 : vector<2x32xf32>
    %126 = arith.negf %125 : vector<2x32xf32>
    %127 = math.exp %126 : vector<2x32xf32>
    %cst_31 = arith.constant 1.000000e+00 : f32
    %128 = vector.broadcast %cst_31 : f32 to vector<2x32xf32>
    %129 = arith.addf %128, %127 : vector<2x32xf32>
    %130 = arith.divf %128, %129 : vector<2x32xf32>
    %131 = vector.extract_strided_slice %113 {offsets = [0, 64], sizes = [2, 32], strides = [1, 1]} : vector<2x96xf32> to vector<2x32xf32>
    %132 = vector.extract_strided_slice %114 {offsets = [0, 64], sizes = [2, 32], strides = [1, 1]} : vector<2x96xf32> to vector<2x32xf32>
    %133 = vector.broadcast %1 : vector<1x32xf32> to vector<2x32xf32>
    %134 = arith.addf %132, %133 : vector<2x32xf32>
    %135 = arith.mulf %122, %134 : vector<2x32xf32>
    %136 = arith.addf %131, %135 : vector<2x32xf32>
    %137 = math.tanh %136 : vector<2x32xf32>
    %cst_32 = arith.constant 1.000000e+00 : f32
    %138 = vector.broadcast %cst_32 : f32 to vector<2x32xf32>
    %139 = arith.subf %138, %130 : vector<2x32xf32>
    %140 = arith.mulf %139, %137 : vector<2x32xf32>
    %141 = arith.mulf %130, %106 : vector<2x32xf32>
    %142 = arith.addf %140, %141 : vector<2x32xf32>
    %143 = arith.index_cast %c3_i32 : i32 to index
    %c0_33 = arith.constant 0 : index
    %c0_34 = arith.constant 0 : index
    %144 = vector.load %arg4[%143, %c0_33, %c0_34] : memref<8x2x32xf32, #tpu.memory_space<vmem>>, vector<1x2x32xf32>
    %145 = vector.shape_cast %144 : vector<1x2x32xf32> to vector<2x32xf32>
    %146 = vector.shape_cast %142 : vector<2x32xf32> to vector<1x2x32xf32>
    tpu.vector_store %arg4[%143, %c0_33, %c0_34], %146 {strides = array<i32>} : memref<8x2x32xf32, #tpu.memory_space<vmem>>, vector<1x2x32xf32>,
    %c4_i32 = arith.constant 4 : i32
    %147 = arith.index_cast %c4_i32 : i32 to index
    %c0_35 = arith.constant 0 : index
    %c0_36 = arith.constant 0 : index
    %148 = vector.load %arg1[%147, %c0_35, %c0_36] : memref<8x2x96xf32, #tpu.memory_space<vmem>>, vector<1x2x96xf32>
    %149 = vector.shape_cast %148 : vector<1x2x96xf32> to vector<2x96xf32>
    %cst_37 = arith.constant dense<0.000000e+00> : vector<2x96xf32>
    %150 = tpu.matmul %142, %0, %cst_37 {dimension_numbers = #tpu.dot_dimension_numbers<[1], [0], [0], [1], [0, 0, 1, 1], [], []>} : vector<2x32xf32>, vector<32x96xf32>, vector<2x96xf32> -> vector<2x96xf32>
    %151 = vector.extract_strided_slice %149 {offsets = [0, 0], sizes = [2, 32], strides = [1, 1]} : vector<2x96xf32> to vector<2x32xf32>
    %152 = vector.extract_strided_slice %150 {offsets = [0, 0], sizes = [2, 32], strides = [1, 1]} : vector<2x96xf32> to vector<2x32xf32>
    %153 = arith.addf %151, %152 : vector<2x32xf32>
    %154 = arith.negf %153 : vector<2x32xf32>
    %155 = math.exp %154 : vector<2x32xf32>
    %cst_38 = arith.constant 1.000000e+00 : f32
    %156 = vector.broadcast %cst_38 : f32 to vector<2x32xf32>
    %157 = arith.addf %156, %155 : vector<2x32xf32>
    %158 = arith.divf %156, %157 : vector<2x32xf32>
    %159 = vector.extract_strided_slice %149 {offsets = [0, 32], sizes = [2, 32], strides = [1, 1]} : vector<2x96xf32> to vector<2x32xf32>
    %160 = vector.extract_strided_slice %150 {offsets = [0, 32], sizes = [2, 32], strides = [1, 1]} : vector<2x96xf32> to vector<2x32xf32>
    %161 = arith.addf %159, %160 : vector<2x32xf32>
    %162 = arith.negf %161 : vector<2x32xf32>
    %163 = math.exp %162 : vector<2x32xf32>
    %cst_39 = arith.constant 1.000000e+00 : f32
    %164 = vector.broadcast %cst_39 : f32 to vector<2x32xf32>
    %165 = arith.addf %164, %163 : vector<2x32xf32>
    %166 = arith.divf %164, %165 : vector<2x32xf32>
    %167 = vector.extract_strided_slice %149 {offsets = [0, 64], sizes = [2, 32], strides = [1, 1]} : vector<2x96xf32> to vector<2x32xf32>
    %168 = vector.extract_strided_slice %150 {offsets = [0, 64], sizes = [2, 32], strides = [1, 1]} : vector<2x96xf32> to vector<2x32xf32>
    %169 = vector.broadcast %1 : vector<1x32xf32> to vector<2x32xf32>
    %170 = arith.addf %168, %169 : vector<2x32xf32>
    %171 = arith.mulf %158, %170 : vector<2x32xf32>
    %172 = arith.addf %167, %171 : vector<2x32xf32>
    %173 = math.tanh %172 : vector<2x32xf32>
    %cst_40 = arith.constant 1.000000e+00 : f32
    %174 = vector.broadcast %cst_40 : f32 to vector<2x32xf32>
    %175 = arith.subf %174, %166 : vector<2x32xf32>
    %176 = arith.mulf %175, %173 : vector<2x32xf32>
    %177 = arith.mulf %166, %142 : vector<2x32xf32>
    %178 = arith.addf %176, %177 : vector<2x32xf32>
    %179 = arith.index_cast %c4_i32 : i32 to index
    %c0_41 = arith.constant 0 : index
    %c0_42 = arith.constant 0 : index
    %180 = vector.load %arg4[%179, %c0_41, %c0_42] : memref<8x2x32xf32, #tpu.memory_space<vmem>>, vector<1x2x32xf32>
    %181 = vector.shape_cast %180 : vector<1x2x32xf32> to vector<2x32xf32>
    %182 = vector.shape_cast %178 : vector<2x32xf32> to vector<1x2x32xf32>
    tpu.vector_store %arg4[%179, %c0_41, %c0_42], %182 {strides = array<i32>} : memref<8x2x32xf32, #tpu.memory_space<vmem>>, vector<1x2x32xf32>,
    %c5_i32 = arith.constant 5 : i32
    %183 = arith.index_cast %c5_i32 : i32 to index
    %c0_43 = arith.constant 0 : index
    %c0_44 = arith.constant 0 : index
    %184 = vector.load %arg1[%183, %c0_43, %c0_44] : memref<8x2x96xf32, #tpu.memory_space<vmem>>, vector<1x2x96xf32>
    %185 = vector.shape_cast %184 : vector<1x2x96xf32> to vector<2x96xf32>
    %cst_45 = arith.constant dense<0.000000e+00> : vector<2x96xf32>
    %186 = tpu.matmul %178, %0, %cst_45 {dimension_numbers = #tpu.dot_dimension_numbers<[1], [0], [0], [1], [0, 0, 1, 1], [], []>} : vector<2x32xf32>, vector<32x96xf32>, vector<2x96xf32> -> vector<2x96xf32>
    %187 = vector.extract_strided_slice %185 {offsets = [0, 0], sizes = [2, 32], strides = [1, 1]} : vector<2x96xf32> to vector<2x32xf32>
    %188 = vector.extract_strided_slice %186 {offsets = [0, 0], sizes = [2, 32], strides = [1, 1]} : vector<2x96xf32> to vector<2x32xf32>
    %189 = arith.addf %187, %188 : vector<2x32xf32>
    %190 = arith.negf %189 : vector<2x32xf32>
    %191 = math.exp %190 : vector<2x32xf32>
    %cst_46 = arith.constant 1.000000e+00 : f32
    %192 = vector.broadcast %cst_46 : f32 to vector<2x32xf32>
    %193 = arith.addf %192, %191 : vector<2x32xf32>
    %194 = arith.divf %192, %193 : vector<2x32xf32>
    %195 = vector.extract_strided_slice %185 {offsets = [0, 32], sizes = [2, 32], strides = [1, 1]} : vector<2x96xf32> to vector<2x32xf32>
    %196 = vector.extract_strided_slice %186 {offsets = [0, 32], sizes = [2, 32], strides = [1, 1]} : vector<2x96xf32> to vector<2x32xf32>
    %197 = arith.addf %195, %196 : vector<2x32xf32>
    %198 = arith.negf %197 : vector<2x32xf32>
    %199 = math.exp %198 : vector<2x32xf32>
    %cst_47 = arith.constant 1.000000e+00 : f32
    %200 = vector.broadcast %cst_47 : f32 to vector<2x32xf32>
    %201 = arith.addf %200, %199 : vector<2x32xf32>
    %202 = arith.divf %200, %201 : vector<2x32xf32>
    %203 = vector.extract_strided_slice %185 {offsets = [0, 64], sizes = [2, 32], strides = [1, 1]} : vector<2x96xf32> to vector<2x32xf32>
    %204 = vector.extract_strided_slice %186 {offsets = [0, 64], sizes = [2, 32], strides = [1, 1]} : vector<2x96xf32> to vector<2x32xf32>
    %205 = vector.broadcast %1 : vector<1x32xf32> to vector<2x32xf32>
    %206 = arith.addf %204, %205 : vector<2x32xf32>
    %207 = arith.mulf %194, %206 : vector<2x32xf32>
    %208 = arith.addf %203, %207 : vector<2x32xf32>
    %209 = math.tanh %208 : vector<2x32xf32>
    %cst_48 = arith.constant 1.000000e+00 : f32
    %210 = vector.broadcast %cst_48 : f32 to vector<2x32xf32>
    %211 = arith.subf %210, %202 : vector<2x32xf32>
    %212 = arith.mulf %211, %209 : vector<2x32xf32>
    %213 = arith.mulf %202, %178 : vector<2x32xf32>
    %214 = arith.addf %212, %213 : vector<2x32xf32>
    %215 = arith.index_cast %c5_i32 : i32 to index
    %c0_49 = arith.constant 0 : index
    %c0_50 = arith.constant 0 : index
    %216 = vector.load %arg4[%215, %c0_49, %c0_50] : memref<8x2x32xf32, #tpu.memory_space<vmem>>, vector<1x2x32xf32>
    %217 = vector.shape_cast %216 : vector<1x2x32xf32> to vector<2x32xf32>
    %218 = vector.shape_cast %214 : vector<2x32xf32> to vector<1x2x32xf32>
    tpu.vector_store %arg4[%215, %c0_49, %c0_50], %218 {strides = array<i32>} : memref<8x2x32xf32, #tpu.memory_space<vmem>>, vector<1x2x32xf32>,
    %c6_i32 = arith.constant 6 : i32
    %219 = arith.index_cast %c6_i32 : i32 to index
    %c0_51 = arith.constant 0 : index
    %c0_52 = arith.constant 0 : index
    %220 = vector.load %arg1[%219, %c0_51, %c0_52] : memref<8x2x96xf32, #tpu.memory_space<vmem>>, vector<1x2x96xf32>
    %221 = vector.shape_cast %220 : vector<1x2x96xf32> to vector<2x96xf32>
    %cst_53 = arith.constant dense<0.000000e+00> : vector<2x96xf32>
    %222 = tpu.matmul %214, %0, %cst_53 {dimension_numbers = #tpu.dot_dimension_numbers<[1], [0], [0], [1], [0, 0, 1, 1], [], []>} : vector<2x32xf32>, vector<32x96xf32>, vector<2x96xf32> -> vector<2x96xf32>
    %223 = vector.extract_strided_slice %221 {offsets = [0, 0], sizes = [2, 32], strides = [1, 1]} : vector<2x96xf32> to vector<2x32xf32>
    %224 = vector.extract_strided_slice %222 {offsets = [0, 0], sizes = [2, 32], strides = [1, 1]} : vector<2x96xf32> to vector<2x32xf32>
    %225 = arith.addf %223, %224 : vector<2x32xf32>
    %226 = arith.negf %225 : vector<2x32xf32>
    %227 = math.exp %226 : vector<2x32xf32>
    %cst_54 = arith.constant 1.000000e+00 : f32
    %228 = vector.broadcast %cst_54 : f32 to vector<2x32xf32>
    %229 = arith.addf %228, %227 : vector<2x32xf32>
    %230 = arith.divf %228, %229 : vector<2x32xf32>
    %231 = vector.extract_strided_slice %221 {offsets = [0, 32], sizes = [2, 32], strides = [1, 1]} : vector<2x96xf32> to vector<2x32xf32>
    %232 = vector.extract_strided_slice %222 {offsets = [0, 32], sizes = [2, 32], strides = [1, 1]} : vector<2x96xf32> to vector<2x32xf32>
    %233 = arith.addf %231, %232 : vector<2x32xf32>
    %234 = arith.negf %233 : vector<2x32xf32>
    %235 = math.exp %234 : vector<2x32xf32>
    %cst_55 = arith.constant 1.000000e+00 : f32
    %236 = vector.broadcast %cst_55 : f32 to vector<2x32xf32>
    %237 = arith.addf %236, %235 : vector<2x32xf32>
    %238 = arith.divf %236, %237 : vector<2x32xf32>
    %239 = vector.extract_strided_slice %221 {offsets = [0, 64], sizes = [2, 32], strides = [1, 1]} : vector<2x96xf32> to vector<2x32xf32>
    %240 = vector.extract_strided_slice %222 {offsets = [0, 64], sizes = [2, 32], strides = [1, 1]} : vector<2x96xf32> to vector<2x32xf32>
    %241 = vector.broadcast %1 : vector<1x32xf32> to vector<2x32xf32>
    %242 = arith.addf %240, %241 : vector<2x32xf32>
    %243 = arith.mulf %230, %242 : vector<2x32xf32>
    %244 = arith.addf %239, %243 : vector<2x32xf32>
    %245 = math.tanh %244 : vector<2x32xf32>
    %cst_56 = arith.constant 1.000000e+00 : f32
    %246 = vector.broadcast %cst_56 : f32 to vector<2x32xf32>
    %247 = arith.subf %246, %238 : vector<2x32xf32>
    %248 = arith.mulf %247, %245 : vector<2x32xf32>
    %249 = arith.mulf %238, %214 : vector<2x32xf32>
    %250 = arith.addf %248, %249 : vector<2x32xf32>
    %251 = arith.index_cast %c6_i32 : i32 to index
    %c0_57 = arith.constant 0 : index
    %c0_58 = arith.constant 0 : index
    %252 = vector.load %arg4[%251, %c0_57, %c0_58] : memref<8x2x32xf32, #tpu.memory_space<vmem>>, vector<1x2x32xf32>
    %253 = vector.shape_cast %252 : vector<1x2x32xf32> to vector<2x32xf32>
    %254 = vector.shape_cast %250 : vector<2x32xf32> to vector<1x2x32xf32>
    tpu.vector_store %arg4[%251, %c0_57, %c0_58], %254 {strides = array<i32>} : memref<8x2x32xf32, #tpu.memory_space<vmem>>, vector<1x2x32xf32>,
    %c7_i32 = arith.constant 7 : i32
    %255 = arith.index_cast %c7_i32 : i32 to index
    %c0_59 = arith.constant 0 : index
    %c0_60 = arith.constant 0 : index
    %256 = vector.load %arg1[%255, %c0_59, %c0_60] : memref<8x2x96xf32, #tpu.memory_space<vmem>>, vector<1x2x96xf32>
    %257 = vector.shape_cast %256 : vector<1x2x96xf32> to vector<2x96xf32>
    %cst_61 = arith.constant dense<0.000000e+00> : vector<2x96xf32>
    %258 = tpu.matmul %250, %0, %cst_61 {dimension_numbers = #tpu.dot_dimension_numbers<[1], [0], [0], [1], [0, 0, 1, 1], [], []>} : vector<2x32xf32>, vector<32x96xf32>, vector<2x96xf32> -> vector<2x96xf32>
    %259 = vector.extract_strided_slice %257 {offsets = [0, 0], sizes = [2, 32], strides = [1, 1]} : vector<2x96xf32> to vector<2x32xf32>
    %260 = vector.extract_strided_slice %258 {offsets = [0, 0], sizes = [2, 32], strides = [1, 1]} : vector<2x96xf32> to vector<2x32xf32>
    %261 = arith.addf %259, %260 : vector<2x32xf32>
    %262 = arith.negf %261 : vector<2x32xf32>
    %263 = math.exp %262 : vector<2x32xf32>
    %cst_62 = arith.constant 1.000000e+00 : f32
    %264 = vector.broadcast %cst_62 : f32 to vector<2x32xf32>
    %265 = arith.addf %264, %263 : vector<2x32xf32>
    %266 = arith.divf %264, %265 : vector<2x32xf32>
    %267 = vector.extract_strided_slice %257 {offsets = [0, 32], sizes = [2, 32], strides = [1, 1]} : vector<2x96xf32> to vector<2x32xf32>
    %268 = vector.extract_strided_slice %258 {offsets = [0, 32], sizes = [2, 32], strides = [1, 1]} : vector<2x96xf32> to vector<2x32xf32>
    %269 = arith.addf %267, %268 : vector<2x32xf32>
    %270 = arith.negf %269 : vector<2x32xf32>
    %271 = math.exp %270 : vector<2x32xf32>
    %cst_63 = arith.constant 1.000000e+00 : f32
    %272 = vector.broadcast %cst_63 : f32 to vector<2x32xf32>
    %273 = arith.addf %272, %271 : vector<2x32xf32>
    %274 = arith.divf %272, %273 : vector<2x32xf32>
    %275 = vector.extract_strided_slice %257 {offsets = [0, 64], sizes = [2, 32], strides = [1, 1]} : vector<2x96xf32> to vector<2x32xf32>
    %276 = vector.extract_strided_slice %258 {offsets = [0, 64], sizes = [2, 32], strides = [1, 1]} : vector<2x96xf32> to vector<2x32xf32>
    %277 = vector.broadcast %1 : vector<1x32xf32> to vector<2x32xf32>
    %278 = arith.addf %276, %277 : vector<2x32xf32>
    %279 = arith.mulf %266, %278 : vector<2x32xf32>
    %280 = arith.addf %275, %279 : vector<2x32xf32>
    %281 = math.tanh %280 : vector<2x32xf32>
    %cst_64 = arith.constant 1.000000e+00 : f32
    %282 = vector.broadcast %cst_64 : f32 to vector<2x32xf32>
    %283 = arith.subf %282, %274 : vector<2x32xf32>
    %284 = arith.mulf %283, %281 : vector<2x32xf32>
    %285 = arith.mulf %274, %250 : vector<2x32xf32>
    %286 = arith.addf %284, %285 : vector<2x32xf32>
    %287 = arith.index_cast %c7_i32 : i32 to index
    %c0_65 = arith.constant 0 : index
    %c0_66 = arith.constant 0 : index
    %288 = vector.load %arg4[%287, %c0_65, %c0_66] : memref<8x2x32xf32, #tpu.memory_space<vmem>>, vector<1x2x32xf32>
    %289 = vector.shape_cast %288 : vector<1x2x32xf32> to vector<2x32xf32>
    %290 = vector.shape_cast %286 : vector<2x32xf32> to vector<1x2x32xf32>
    tpu.vector_store %arg4[%287, %c0_65, %c0_66], %290 {strides = array<i32>} : memref<8x2x32xf32, #tpu.memory_space<vmem>>, vector<1x2x32xf32>,
    %c8_i32 = arith.constant 8 : i32
    return
  }
  func.func @transform_0(%arg0: i32) -> (i32, i32, i32) {
    %c0_i32 = arith.constant 0 : i32
    %c0_i32_0 = arith.constant 0 : i32
    %c0_i32_1 = arith.constant 0 : i32
    %c0_i32_2 = arith.constant 0 : i32
    return %c0_i32, %c0_i32_0, %c0_i32_1 : i32, i32, i32
  }
  func.func @transform_1(%arg0: i32) -> (i32, i32) {
    %c0_i32 = arith.constant 0 : i32
    %c0_i32_0 = arith.constant 0 : i32
    %c0_i32_1 = arith.constant 0 : i32
    return %c0_i32, %c0_i32_0 : i32, i32
  }
  func.func @transform_2(%arg0: i32) -> (i32, i32) {
    %c0_i32 = arith.constant 0 : i32
    %c0_i32_0 = arith.constant 0 : i32
    %c0_i32_1 = arith.constant 0 : i32
    return %c0_i32, %c0_i32_0 : i32, i32
  }
  func.func @transform_3(%arg0: i32) -> (i32, i32, i32) {
    %c0_i32 = arith.constant 0 : i32
    %c0_i32_0 = arith.constant 0 : i32
    %c0_i32_1 = arith.constant 0 : i32
    %c0_i32_2 = arith.constant 0 : i32
    return %c0_i32, %c0_i32_0, %c0_i32_1 : i32, i32, i32
  }
}

module attributes {stable_mosaic.version = 11 : i64} {
  func.func @gru_final_kernel(%arg0: i32, %arg1: memref<8x2x96xf32, #tpu.memory_space<vmem>>, %arg2: memref<32x96xf32, #tpu.memory_space<vmem>>, %arg3: memref<1x32xf32, #tpu.memory_space<vmem>>, %arg4: memref<32x1xf32, #tpu.memory_space<vmem>>, %arg5: memref<1x1xf32, #tpu.memory_space<vmem>>, %arg6: memref<2x1xf32, #tpu.memory_space<vmem>>) attributes {dimension_semantics = [#tpu.dimension_semantics<arbitrary>], iteration_bounds = array<i64: 1>, scalar_prefetch = 0 : i64, scratch_operands = 0 : i64, tpu.core_type = #tpu.core_type<tc>, window_params = [{pipeline_mode = #tpu.pipeline_mode<synchronous>, transform_indices = @transform_0, window_bounds = array<i64: 8, 2, 96>}, {pipeline_mode = #tpu.pipeline_mode<synchronous>, transform_indices = @transform_1, window_bounds = array<i64: 32, 96>}, {pipeline_mode = #tpu.pipeline_mode<synchronous>, transform_indices = @transform_2, window_bounds = array<i64: 1, 32>}, {pipeline_mode = #tpu.pipeline_mode<synchronous>, transform_indices = @transform_3, window_bounds = array<i64: 32, 1>}, {pipeline_mode = #tpu.pipeline_mode<synchronous>, transform_indices = @transform_4, window_bounds = array<i64: 1, 1>}, {pipeline_mode = #tpu.pipeline_mode<synchronous>, transform_indices = @transform_5, window_bounds = array<i64: 2, 1>}]} {
    %c0 = arith.constant 0 : index
    %c0_0 = arith.constant 0 : index
    %0 = vector.load %arg2[%c0, %c0_0] : memref<32x96xf32, #tpu.memory_space<vmem>>, vector<32x96xf32>
    %c0_1 = arith.constant 0 : index
    %c0_2 = arith.constant 0 : index
    %1 = vector.load %arg3[%c0_1, %c0_2] : memref<1x32xf32, #tpu.memory_space<vmem>>, vector<1x32xf32>
    %cst = arith.constant 0.000000e+00 : f32
    %2 = vector.broadcast %cst : f32 to vector<2x32xf32>
    %c0_i32 = arith.constant 0 : i32
    %3 = arith.index_cast %c0_i32 : i32 to index
    %c0_3 = arith.constant 0 : index
    %c0_4 = arith.constant 0 : index
    %4 = vector.load %arg1[%3, %c0_3, %c0_4] : memref<8x2x96xf32, #tpu.memory_space<vmem>>, vector<1x2x96xf32>
    %5 = vector.shape_cast %4 : vector<1x2x96xf32> to vector<2x96xf32>
    %cst_5 = arith.constant dense<0.000000e+00> : vector<2x96xf32>
    %6 = tpu.matmul %2, %0, %cst_5 {dimension_numbers = #tpu.dot_dimension_numbers<[1], [0], [0], [1], [0, 0, 1, 1], [], []>} : vector<2x32xf32>, vector<32x96xf32>, vector<2x96xf32> -> vector<2x96xf32>
    %7 = vector.extract_strided_slice %5 {offsets = [0, 0], sizes = [2, 32], strides = [1, 1]} : vector<2x96xf32> to vector<2x32xf32>
    %8 = vector.extract_strided_slice %6 {offsets = [0, 0], sizes = [2, 32], strides = [1, 1]} : vector<2x96xf32> to vector<2x32xf32>
    %9 = arith.addf %7, %8 : vector<2x32xf32>
    %10 = arith.negf %9 : vector<2x32xf32>
    %11 = math.exp %10 : vector<2x32xf32>
    %cst_6 = arith.constant 1.000000e+00 : f32
    %12 = vector.broadcast %cst_6 : f32 to vector<2x32xf32>
    %13 = arith.addf %12, %11 : vector<2x32xf32>
    %14 = arith.divf %12, %13 : vector<2x32xf32>
    %15 = vector.extract_strided_slice %5 {offsets = [0, 32], sizes = [2, 32], strides = [1, 1]} : vector<2x96xf32> to vector<2x32xf32>
    %16 = vector.extract_strided_slice %6 {offsets = [0, 32], sizes = [2, 32], strides = [1, 1]} : vector<2x96xf32> to vector<2x32xf32>
    %17 = arith.addf %15, %16 : vector<2x32xf32>
    %18 = arith.negf %17 : vector<2x32xf32>
    %19 = math.exp %18 : vector<2x32xf32>
    %cst_7 = arith.constant 1.000000e+00 : f32
    %20 = vector.broadcast %cst_7 : f32 to vector<2x32xf32>
    %21 = arith.addf %20, %19 : vector<2x32xf32>
    %22 = arith.divf %20, %21 : vector<2x32xf32>
    %23 = vector.extract_strided_slice %5 {offsets = [0, 64], sizes = [2, 32], strides = [1, 1]} : vector<2x96xf32> to vector<2x32xf32>
    %24 = vector.extract_strided_slice %6 {offsets = [0, 64], sizes = [2, 32], strides = [1, 1]} : vector<2x96xf32> to vector<2x32xf32>
    %25 = vector.broadcast %1 : vector<1x32xf32> to vector<2x32xf32>
    %26 = arith.addf %24, %25 : vector<2x32xf32>
    %27 = arith.mulf %14, %26 : vector<2x32xf32>
    %28 = arith.addf %23, %27 : vector<2x32xf32>
    %29 = math.tanh %28 : vector<2x32xf32>
    %cst_8 = arith.constant 1.000000e+00 : f32
    %30 = vector.broadcast %cst_8 : f32 to vector<2x32xf32>
    %31 = arith.subf %30, %22 : vector<2x32xf32>
    %32 = arith.mulf %31, %29 : vector<2x32xf32>
    %33 = arith.mulf %22, %2 : vector<2x32xf32>
    %34 = arith.addf %32, %33 : vector<2x32xf32>
    %c1_i32 = arith.constant 1 : i32
    %35 = arith.index_cast %c1_i32 : i32 to index
    %c0_9 = arith.constant 0 : index
    %c0_10 = arith.constant 0 : index
    %36 = vector.load %arg1[%35, %c0_9, %c0_10] : memref<8x2x96xf32, #tpu.memory_space<vmem>>, vector<1x2x96xf32>
    %37 = vector.shape_cast %36 : vector<1x2x96xf32> to vector<2x96xf32>
    %cst_11 = arith.constant dense<0.000000e+00> : vector<2x96xf32>
    %38 = tpu.matmul %34, %0, %cst_11 {dimension_numbers = #tpu.dot_dimension_numbers<[1], [0], [0], [1], [0, 0, 1, 1], [], []>} : vector<2x32xf32>, vector<32x96xf32>, vector<2x96xf32> -> vector<2x96xf32>
    %39 = vector.extract_strided_slice %37 {offsets = [0, 0], sizes = [2, 32], strides = [1, 1]} : vector<2x96xf32> to vector<2x32xf32>
    %40 = vector.extract_strided_slice %38 {offsets = [0, 0], sizes = [2, 32], strides = [1, 1]} : vector<2x96xf32> to vector<2x32xf32>
    %41 = arith.addf %39, %40 : vector<2x32xf32>
    %42 = arith.negf %41 : vector<2x32xf32>
    %43 = math.exp %42 : vector<2x32xf32>
    %cst_12 = arith.constant 1.000000e+00 : f32
    %44 = vector.broadcast %cst_12 : f32 to vector<2x32xf32>
    %45 = arith.addf %44, %43 : vector<2x32xf32>
    %46 = arith.divf %44, %45 : vector<2x32xf32>
    %47 = vector.extract_strided_slice %37 {offsets = [0, 32], sizes = [2, 32], strides = [1, 1]} : vector<2x96xf32> to vector<2x32xf32>
    %48 = vector.extract_strided_slice %38 {offsets = [0, 32], sizes = [2, 32], strides = [1, 1]} : vector<2x96xf32> to vector<2x32xf32>
    %49 = arith.addf %47, %48 : vector<2x32xf32>
    %50 = arith.negf %49 : vector<2x32xf32>
    %51 = math.exp %50 : vector<2x32xf32>
    %cst_13 = arith.constant 1.000000e+00 : f32
    %52 = vector.broadcast %cst_13 : f32 to vector<2x32xf32>
    %53 = arith.addf %52, %51 : vector<2x32xf32>
    %54 = arith.divf %52, %53 : vector<2x32xf32>
    %55 = vector.extract_strided_slice %37 {offsets = [0, 64], sizes = [2, 32], strides = [1, 1]} : vector<2x96xf32> to vector<2x32xf32>
    %56 = vector.extract_strided_slice %38 {offsets = [0, 64], sizes = [2, 32], strides = [1, 1]} : vector<2x96xf32> to vector<2x32xf32>
    %57 = vector.broadcast %1 : vector<1x32xf32> to vector<2x32xf32>
    %58 = arith.addf %56, %57 : vector<2x32xf32>
    %59 = arith.mulf %46, %58 : vector<2x32xf32>
    %60 = arith.addf %55, %59 : vector<2x32xf32>
    %61 = math.tanh %60 : vector<2x32xf32>
    %cst_14 = arith.constant 1.000000e+00 : f32
    %62 = vector.broadcast %cst_14 : f32 to vector<2x32xf32>
    %63 = arith.subf %62, %54 : vector<2x32xf32>
    %64 = arith.mulf %63, %61 : vector<2x32xf32>
    %65 = arith.mulf %54, %34 : vector<2x32xf32>
    %66 = arith.addf %64, %65 : vector<2x32xf32>
    %c2_i32 = arith.constant 2 : i32
    %67 = arith.index_cast %c2_i32 : i32 to index
    %c0_15 = arith.constant 0 : index
    %c0_16 = arith.constant 0 : index
    %68 = vector.load %arg1[%67, %c0_15, %c0_16] : memref<8x2x96xf32, #tpu.memory_space<vmem>>, vector<1x2x96xf32>
    %69 = vector.shape_cast %68 : vector<1x2x96xf32> to vector<2x96xf32>
    %cst_17 = arith.constant dense<0.000000e+00> : vector<2x96xf32>
    %70 = tpu.matmul %66, %0, %cst_17 {dimension_numbers = #tpu.dot_dimension_numbers<[1], [0], [0], [1], [0, 0, 1, 1], [], []>} : vector<2x32xf32>, vector<32x96xf32>, vector<2x96xf32> -> vector<2x96xf32>
    %71 = vector.extract_strided_slice %69 {offsets = [0, 0], sizes = [2, 32], strides = [1, 1]} : vector<2x96xf32> to vector<2x32xf32>
    %72 = vector.extract_strided_slice %70 {offsets = [0, 0], sizes = [2, 32], strides = [1, 1]} : vector<2x96xf32> to vector<2x32xf32>
    %73 = arith.addf %71, %72 : vector<2x32xf32>
    %74 = arith.negf %73 : vector<2x32xf32>
    %75 = math.exp %74 : vector<2x32xf32>
    %cst_18 = arith.constant 1.000000e+00 : f32
    %76 = vector.broadcast %cst_18 : f32 to vector<2x32xf32>
    %77 = arith.addf %76, %75 : vector<2x32xf32>
    %78 = arith.divf %76, %77 : vector<2x32xf32>
    %79 = vector.extract_strided_slice %69 {offsets = [0, 32], sizes = [2, 32], strides = [1, 1]} : vector<2x96xf32> to vector<2x32xf32>
    %80 = vector.extract_strided_slice %70 {offsets = [0, 32], sizes = [2, 32], strides = [1, 1]} : vector<2x96xf32> to vector<2x32xf32>
    %81 = arith.addf %79, %80 : vector<2x32xf32>
    %82 = arith.negf %81 : vector<2x32xf32>
    %83 = math.exp %82 : vector<2x32xf32>
    %cst_19 = arith.constant 1.000000e+00 : f32
    %84 = vector.broadcast %cst_19 : f32 to vector<2x32xf32>
    %85 = arith.addf %84, %83 : vector<2x32xf32>
    %86 = arith.divf %84, %85 : vector<2x32xf32>
    %87 = vector.extract_strided_slice %69 {offsets = [0, 64], sizes = [2, 32], strides = [1, 1]} : vector<2x96xf32> to vector<2x32xf32>
    %88 = vector.extract_strided_slice %70 {offsets = [0, 64], sizes = [2, 32], strides = [1, 1]} : vector<2x96xf32> to vector<2x32xf32>
    %89 = vector.broadcast %1 : vector<1x32xf32> to vector<2x32xf32>
    %90 = arith.addf %88, %89 : vector<2x32xf32>
    %91 = arith.mulf %78, %90 : vector<2x32xf32>
    %92 = arith.addf %87, %91 : vector<2x32xf32>
    %93 = math.tanh %92 : vector<2x32xf32>
    %cst_20 = arith.constant 1.000000e+00 : f32
    %94 = vector.broadcast %cst_20 : f32 to vector<2x32xf32>
    %95 = arith.subf %94, %86 : vector<2x32xf32>
    %96 = arith.mulf %95, %93 : vector<2x32xf32>
    %97 = arith.mulf %86, %66 : vector<2x32xf32>
    %98 = arith.addf %96, %97 : vector<2x32xf32>
    %c3_i32 = arith.constant 3 : i32
    %99 = arith.index_cast %c3_i32 : i32 to index
    %c0_21 = arith.constant 0 : index
    %c0_22 = arith.constant 0 : index
    %100 = vector.load %arg1[%99, %c0_21, %c0_22] : memref<8x2x96xf32, #tpu.memory_space<vmem>>, vector<1x2x96xf32>
    %101 = vector.shape_cast %100 : vector<1x2x96xf32> to vector<2x96xf32>
    %cst_23 = arith.constant dense<0.000000e+00> : vector<2x96xf32>
    %102 = tpu.matmul %98, %0, %cst_23 {dimension_numbers = #tpu.dot_dimension_numbers<[1], [0], [0], [1], [0, 0, 1, 1], [], []>} : vector<2x32xf32>, vector<32x96xf32>, vector<2x96xf32> -> vector<2x96xf32>
    %103 = vector.extract_strided_slice %101 {offsets = [0, 0], sizes = [2, 32], strides = [1, 1]} : vector<2x96xf32> to vector<2x32xf32>
    %104 = vector.extract_strided_slice %102 {offsets = [0, 0], sizes = [2, 32], strides = [1, 1]} : vector<2x96xf32> to vector<2x32xf32>
    %105 = arith.addf %103, %104 : vector<2x32xf32>
    %106 = arith.negf %105 : vector<2x32xf32>
    %107 = math.exp %106 : vector<2x32xf32>
    %cst_24 = arith.constant 1.000000e+00 : f32
    %108 = vector.broadcast %cst_24 : f32 to vector<2x32xf32>
    %109 = arith.addf %108, %107 : vector<2x32xf32>
    %110 = arith.divf %108, %109 : vector<2x32xf32>
    %111 = vector.extract_strided_slice %101 {offsets = [0, 32], sizes = [2, 32], strides = [1, 1]} : vector<2x96xf32> to vector<2x32xf32>
    %112 = vector.extract_strided_slice %102 {offsets = [0, 32], sizes = [2, 32], strides = [1, 1]} : vector<2x96xf32> to vector<2x32xf32>
    %113 = arith.addf %111, %112 : vector<2x32xf32>
    %114 = arith.negf %113 : vector<2x32xf32>
    %115 = math.exp %114 : vector<2x32xf32>
    %cst_25 = arith.constant 1.000000e+00 : f32
    %116 = vector.broadcast %cst_25 : f32 to vector<2x32xf32>
    %117 = arith.addf %116, %115 : vector<2x32xf32>
    %118 = arith.divf %116, %117 : vector<2x32xf32>
    %119 = vector.extract_strided_slice %101 {offsets = [0, 64], sizes = [2, 32], strides = [1, 1]} : vector<2x96xf32> to vector<2x32xf32>
    %120 = vector.extract_strided_slice %102 {offsets = [0, 64], sizes = [2, 32], strides = [1, 1]} : vector<2x96xf32> to vector<2x32xf32>
    %121 = vector.broadcast %1 : vector<1x32xf32> to vector<2x32xf32>
    %122 = arith.addf %120, %121 : vector<2x32xf32>
    %123 = arith.mulf %110, %122 : vector<2x32xf32>
    %124 = arith.addf %119, %123 : vector<2x32xf32>
    %125 = math.tanh %124 : vector<2x32xf32>
    %cst_26 = arith.constant 1.000000e+00 : f32
    %126 = vector.broadcast %cst_26 : f32 to vector<2x32xf32>
    %127 = arith.subf %126, %118 : vector<2x32xf32>
    %128 = arith.mulf %127, %125 : vector<2x32xf32>
    %129 = arith.mulf %118, %98 : vector<2x32xf32>
    %130 = arith.addf %128, %129 : vector<2x32xf32>
    %c4_i32 = arith.constant 4 : i32
    %131 = arith.index_cast %c4_i32 : i32 to index
    %c0_27 = arith.constant 0 : index
    %c0_28 = arith.constant 0 : index
    %132 = vector.load %arg1[%131, %c0_27, %c0_28] : memref<8x2x96xf32, #tpu.memory_space<vmem>>, vector<1x2x96xf32>
    %133 = vector.shape_cast %132 : vector<1x2x96xf32> to vector<2x96xf32>
    %cst_29 = arith.constant dense<0.000000e+00> : vector<2x96xf32>
    %134 = tpu.matmul %130, %0, %cst_29 {dimension_numbers = #tpu.dot_dimension_numbers<[1], [0], [0], [1], [0, 0, 1, 1], [], []>} : vector<2x32xf32>, vector<32x96xf32>, vector<2x96xf32> -> vector<2x96xf32>
    %135 = vector.extract_strided_slice %133 {offsets = [0, 0], sizes = [2, 32], strides = [1, 1]} : vector<2x96xf32> to vector<2x32xf32>
    %136 = vector.extract_strided_slice %134 {offsets = [0, 0], sizes = [2, 32], strides = [1, 1]} : vector<2x96xf32> to vector<2x32xf32>
    %137 = arith.addf %135, %136 : vector<2x32xf32>
    %138 = arith.negf %137 : vector<2x32xf32>
    %139 = math.exp %138 : vector<2x32xf32>
    %cst_30 = arith.constant 1.000000e+00 : f32
    %140 = vector.broadcast %cst_30 : f32 to vector<2x32xf32>
    %141 = arith.addf %140, %139 : vector<2x32xf32>
    %142 = arith.divf %140, %141 : vector<2x32xf32>
    %143 = vector.extract_strided_slice %133 {offsets = [0, 32], sizes = [2, 32], strides = [1, 1]} : vector<2x96xf32> to vector<2x32xf32>
    %144 = vector.extract_strided_slice %134 {offsets = [0, 32], sizes = [2, 32], strides = [1, 1]} : vector<2x96xf32> to vector<2x32xf32>
    %145 = arith.addf %143, %144 : vector<2x32xf32>
    %146 = arith.negf %145 : vector<2x32xf32>
    %147 = math.exp %146 : vector<2x32xf32>
    %cst_31 = arith.constant 1.000000e+00 : f32
    %148 = vector.broadcast %cst_31 : f32 to vector<2x32xf32>
    %149 = arith.addf %148, %147 : vector<2x32xf32>
    %150 = arith.divf %148, %149 : vector<2x32xf32>
    %151 = vector.extract_strided_slice %133 {offsets = [0, 64], sizes = [2, 32], strides = [1, 1]} : vector<2x96xf32> to vector<2x32xf32>
    %152 = vector.extract_strided_slice %134 {offsets = [0, 64], sizes = [2, 32], strides = [1, 1]} : vector<2x96xf32> to vector<2x32xf32>
    %153 = vector.broadcast %1 : vector<1x32xf32> to vector<2x32xf32>
    %154 = arith.addf %152, %153 : vector<2x32xf32>
    %155 = arith.mulf %142, %154 : vector<2x32xf32>
    %156 = arith.addf %151, %155 : vector<2x32xf32>
    %157 = math.tanh %156 : vector<2x32xf32>
    %cst_32 = arith.constant 1.000000e+00 : f32
    %158 = vector.broadcast %cst_32 : f32 to vector<2x32xf32>
    %159 = arith.subf %158, %150 : vector<2x32xf32>
    %160 = arith.mulf %159, %157 : vector<2x32xf32>
    %161 = arith.mulf %150, %130 : vector<2x32xf32>
    %162 = arith.addf %160, %161 : vector<2x32xf32>
    %c5_i32 = arith.constant 5 : i32
    %163 = arith.index_cast %c5_i32 : i32 to index
    %c0_33 = arith.constant 0 : index
    %c0_34 = arith.constant 0 : index
    %164 = vector.load %arg1[%163, %c0_33, %c0_34] : memref<8x2x96xf32, #tpu.memory_space<vmem>>, vector<1x2x96xf32>
    %165 = vector.shape_cast %164 : vector<1x2x96xf32> to vector<2x96xf32>
    %cst_35 = arith.constant dense<0.000000e+00> : vector<2x96xf32>
    %166 = tpu.matmul %162, %0, %cst_35 {dimension_numbers = #tpu.dot_dimension_numbers<[1], [0], [0], [1], [0, 0, 1, 1], [], []>} : vector<2x32xf32>, vector<32x96xf32>, vector<2x96xf32> -> vector<2x96xf32>
    %167 = vector.extract_strided_slice %165 {offsets = [0, 0], sizes = [2, 32], strides = [1, 1]} : vector<2x96xf32> to vector<2x32xf32>
    %168 = vector.extract_strided_slice %166 {offsets = [0, 0], sizes = [2, 32], strides = [1, 1]} : vector<2x96xf32> to vector<2x32xf32>
    %169 = arith.addf %167, %168 : vector<2x32xf32>
    %170 = arith.negf %169 : vector<2x32xf32>
    %171 = math.exp %170 : vector<2x32xf32>
    %cst_36 = arith.constant 1.000000e+00 : f32
    %172 = vector.broadcast %cst_36 : f32 to vector<2x32xf32>
    %173 = arith.addf %172, %171 : vector<2x32xf32>
    %174 = arith.divf %172, %173 : vector<2x32xf32>
    %175 = vector.extract_strided_slice %165 {offsets = [0, 32], sizes = [2, 32], strides = [1, 1]} : vector<2x96xf32> to vector<2x32xf32>
    %176 = vector.extract_strided_slice %166 {offsets = [0, 32], sizes = [2, 32], strides = [1, 1]} : vector<2x96xf32> to vector<2x32xf32>
    %177 = arith.addf %175, %176 : vector<2x32xf32>
    %178 = arith.negf %177 : vector<2x32xf32>
    %179 = math.exp %178 : vector<2x32xf32>
    %cst_37 = arith.constant 1.000000e+00 : f32
    %180 = vector.broadcast %cst_37 : f32 to vector<2x32xf32>
    %181 = arith.addf %180, %179 : vector<2x32xf32>
    %182 = arith.divf %180, %181 : vector<2x32xf32>
    %183 = vector.extract_strided_slice %165 {offsets = [0, 64], sizes = [2, 32], strides = [1, 1]} : vector<2x96xf32> to vector<2x32xf32>
    %184 = vector.extract_strided_slice %166 {offsets = [0, 64], sizes = [2, 32], strides = [1, 1]} : vector<2x96xf32> to vector<2x32xf32>
    %185 = vector.broadcast %1 : vector<1x32xf32> to vector<2x32xf32>
    %186 = arith.addf %184, %185 : vector<2x32xf32>
    %187 = arith.mulf %174, %186 : vector<2x32xf32>
    %188 = arith.addf %183, %187 : vector<2x32xf32>
    %189 = math.tanh %188 : vector<2x32xf32>
    %cst_38 = arith.constant 1.000000e+00 : f32
    %190 = vector.broadcast %cst_38 : f32 to vector<2x32xf32>
    %191 = arith.subf %190, %182 : vector<2x32xf32>
    %192 = arith.mulf %191, %189 : vector<2x32xf32>
    %193 = arith.mulf %182, %162 : vector<2x32xf32>
    %194 = arith.addf %192, %193 : vector<2x32xf32>
    %c6_i32 = arith.constant 6 : i32
    %195 = arith.index_cast %c6_i32 : i32 to index
    %c0_39 = arith.constant 0 : index
    %c0_40 = arith.constant 0 : index
    %196 = vector.load %arg1[%195, %c0_39, %c0_40] : memref<8x2x96xf32, #tpu.memory_space<vmem>>, vector<1x2x96xf32>
    %197 = vector.shape_cast %196 : vector<1x2x96xf32> to vector<2x96xf32>
    %cst_41 = arith.constant dense<0.000000e+00> : vector<2x96xf32>
    %198 = tpu.matmul %194, %0, %cst_41 {dimension_numbers = #tpu.dot_dimension_numbers<[1], [0], [0], [1], [0, 0, 1, 1], [], []>} : vector<2x32xf32>, vector<32x96xf32>, vector<2x96xf32> -> vector<2x96xf32>
    %199 = vector.extract_strided_slice %197 {offsets = [0, 0], sizes = [2, 32], strides = [1, 1]} : vector<2x96xf32> to vector<2x32xf32>
    %200 = vector.extract_strided_slice %198 {offsets = [0, 0], sizes = [2, 32], strides = [1, 1]} : vector<2x96xf32> to vector<2x32xf32>
    %201 = arith.addf %199, %200 : vector<2x32xf32>
    %202 = arith.negf %201 : vector<2x32xf32>
    %203 = math.exp %202 : vector<2x32xf32>
    %cst_42 = arith.constant 1.000000e+00 : f32
    %204 = vector.broadcast %cst_42 : f32 to vector<2x32xf32>
    %205 = arith.addf %204, %203 : vector<2x32xf32>
    %206 = arith.divf %204, %205 : vector<2x32xf32>
    %207 = vector.extract_strided_slice %197 {offsets = [0, 32], sizes = [2, 32], strides = [1, 1]} : vector<2x96xf32> to vector<2x32xf32>
    %208 = vector.extract_strided_slice %198 {offsets = [0, 32], sizes = [2, 32], strides = [1, 1]} : vector<2x96xf32> to vector<2x32xf32>
    %209 = arith.addf %207, %208 : vector<2x32xf32>
    %210 = arith.negf %209 : vector<2x32xf32>
    %211 = math.exp %210 : vector<2x32xf32>
    %cst_43 = arith.constant 1.000000e+00 : f32
    %212 = vector.broadcast %cst_43 : f32 to vector<2x32xf32>
    %213 = arith.addf %212, %211 : vector<2x32xf32>
    %214 = arith.divf %212, %213 : vector<2x32xf32>
    %215 = vector.extract_strided_slice %197 {offsets = [0, 64], sizes = [2, 32], strides = [1, 1]} : vector<2x96xf32> to vector<2x32xf32>
    %216 = vector.extract_strided_slice %198 {offsets = [0, 64], sizes = [2, 32], strides = [1, 1]} : vector<2x96xf32> to vector<2x32xf32>
    %217 = vector.broadcast %1 : vector<1x32xf32> to vector<2x32xf32>
    %218 = arith.addf %216, %217 : vector<2x32xf32>
    %219 = arith.mulf %206, %218 : vector<2x32xf32>
    %220 = arith.addf %215, %219 : vector<2x32xf32>
    %221 = math.tanh %220 : vector<2x32xf32>
    %cst_44 = arith.constant 1.000000e+00 : f32
    %222 = vector.broadcast %cst_44 : f32 to vector<2x32xf32>
    %223 = arith.subf %222, %214 : vector<2x32xf32>
    %224 = arith.mulf %223, %221 : vector<2x32xf32>
    %225 = arith.mulf %214, %194 : vector<2x32xf32>
    %226 = arith.addf %224, %225 : vector<2x32xf32>
    %c7_i32 = arith.constant 7 : i32
    %227 = arith.index_cast %c7_i32 : i32 to index
    %c0_45 = arith.constant 0 : index
    %c0_46 = arith.constant 0 : index
    %228 = vector.load %arg1[%227, %c0_45, %c0_46] : memref<8x2x96xf32, #tpu.memory_space<vmem>>, vector<1x2x96xf32>
    %229 = vector.shape_cast %228 : vector<1x2x96xf32> to vector<2x96xf32>
    %cst_47 = arith.constant dense<0.000000e+00> : vector<2x96xf32>
    %230 = tpu.matmul %226, %0, %cst_47 {dimension_numbers = #tpu.dot_dimension_numbers<[1], [0], [0], [1], [0, 0, 1, 1], [], []>} : vector<2x32xf32>, vector<32x96xf32>, vector<2x96xf32> -> vector<2x96xf32>
    %231 = vector.extract_strided_slice %229 {offsets = [0, 0], sizes = [2, 32], strides = [1, 1]} : vector<2x96xf32> to vector<2x32xf32>
    %232 = vector.extract_strided_slice %230 {offsets = [0, 0], sizes = [2, 32], strides = [1, 1]} : vector<2x96xf32> to vector<2x32xf32>
    %233 = arith.addf %231, %232 : vector<2x32xf32>
    %234 = arith.negf %233 : vector<2x32xf32>
    %235 = math.exp %234 : vector<2x32xf32>
    %cst_48 = arith.constant 1.000000e+00 : f32
    %236 = vector.broadcast %cst_48 : f32 to vector<2x32xf32>
    %237 = arith.addf %236, %235 : vector<2x32xf32>
    %238 = arith.divf %236, %237 : vector<2x32xf32>
    %239 = vector.extract_strided_slice %229 {offsets = [0, 32], sizes = [2, 32], strides = [1, 1]} : vector<2x96xf32> to vector<2x32xf32>
    %240 = vector.extract_strided_slice %230 {offsets = [0, 32], sizes = [2, 32], strides = [1, 1]} : vector<2x96xf32> to vector<2x32xf32>
    %241 = arith.addf %239, %240 : vector<2x32xf32>
    %242 = arith.negf %241 : vector<2x32xf32>
    %243 = math.exp %242 : vector<2x32xf32>
    %cst_49 = arith.constant 1.000000e+00 : f32
    %244 = vector.broadcast %cst_49 : f32 to vector<2x32xf32>
    %245 = arith.addf %244, %243 : vector<2x32xf32>
    %246 = arith.divf %244, %245 : vector<2x32xf32>
    %247 = vector.extract_strided_slice %229 {offsets = [0, 64], sizes = [2, 32], strides = [1, 1]} : vector<2x96xf32> to vector<2x32xf32>
    %248 = vector.extract_strided_slice %230 {offsets = [0, 64], sizes = [2, 32], strides = [1, 1]} : vector<2x96xf32> to vector<2x32xf32>
    %249 = vector.broadcast %1 : vector<1x32xf32> to vector<2x32xf32>
    %250 = arith.addf %248, %249 : vector<2x32xf32>
    %251 = arith.mulf %238, %250 : vector<2x32xf32>
    %252 = arith.addf %247, %251 : vector<2x32xf32>
    %253 = math.tanh %252 : vector<2x32xf32>
    %cst_50 = arith.constant 1.000000e+00 : f32
    %254 = vector.broadcast %cst_50 : f32 to vector<2x32xf32>
    %255 = arith.subf %254, %246 : vector<2x32xf32>
    %256 = arith.mulf %255, %253 : vector<2x32xf32>
    %257 = arith.mulf %246, %226 : vector<2x32xf32>
    %258 = arith.addf %256, %257 : vector<2x32xf32>
    %c8_i32 = arith.constant 8 : i32
    %c0_51 = arith.constant 0 : index
    %c0_52 = arith.constant 0 : index
    %259 = vector.load %arg4[%c0_51, %c0_52] : memref<32x1xf32, #tpu.memory_space<vmem>>, vector<32x1xf32>
    %cst_53 = arith.constant dense<0.000000e+00> : vector<2x1xf32>
    %260 = tpu.matmul %258, %259, %cst_53 {dimension_numbers = #tpu.dot_dimension_numbers<[1], [0], [0], [1], [0, 0, 1, 1], [], []>} : vector<2x32xf32>, vector<32x1xf32>, vector<2x1xf32> -> vector<2x1xf32>
    %c0_54 = arith.constant 0 : index
    %c0_55 = arith.constant 0 : index
    %261 = vector.load %arg5[%c0_54, %c0_55] : memref<1x1xf32, #tpu.memory_space<vmem>>, vector<1x1xf32>
    %262 = vector.broadcast %261 : vector<1x1xf32> to vector<2x1xf32>
    %263 = arith.addf %260, %262 : vector<2x1xf32>
    %c0_56 = arith.constant 0 : index
    %c0_57 = arith.constant 0 : index
    %264 = vector.load %arg6[%c0_56, %c0_57] : memref<2x1xf32, #tpu.memory_space<vmem>>, vector<2x1xf32>
    tpu.vector_store %arg6[%c0_56, %c0_57], %263 {strides = array<i32>} : memref<2x1xf32, #tpu.memory_space<vmem>>, vector<2x1xf32>,
    return
  }
  func.func @transform_0(%arg0: i32) -> (i32, i32, i32) {
    %c0_i32 = arith.constant 0 : i32
    %c0_i32_0 = arith.constant 0 : i32
    %c0_i32_1 = arith.constant 0 : i32
    %c0_i32_2 = arith.constant 0 : i32
    return %c0_i32, %c0_i32_0, %c0_i32_1 : i32, i32, i32
  }
  func.func @transform_1(%arg0: i32) -> (i32, i32) {
    %c0_i32 = arith.constant 0 : i32
    %c0_i32_0 = arith.constant 0 : i32
    %c0_i32_1 = arith.constant 0 : i32
    return %c0_i32, %c0_i32_0 : i32, i32
  }
  func.func @transform_2(%arg0: i32) -> (i32, i32) {
    %c0_i32 = arith.constant 0 : i32
    %c0_i32_0 = arith.constant 0 : i32
    %c0_i32_1 = arith.constant 0 : i32
    return %c0_i32, %c0_i32_0 : i32, i32
  }
  func.func @transform_3(%arg0: i32) -> (i32, i32) {
    %c0_i32 = arith.constant 0 : i32
    %c0_i32_0 = arith.constant 0 : i32
    %c0_i32_1 = arith.constant 0 : i32
    return %c0_i32, %c0_i32_0 : i32, i32
  }
  func.func @transform_4(%arg0: i32) -> (i32, i32) {
    %c0_i32 = arith.constant 0 : i32
    %c0_i32_0 = arith.constant 0 : i32
    %c0_i32_1 = arith.constant 0 : i32
    return %c0_i32, %c0_i32_0 : i32, i32
  }
  func.func @transform_5(%arg0: i32) -> (i32, i32) {
    %c0_i32 = arith.constant 0 : i32
    %c0_i32_0 = arith.constant 0 : i32
    %c0_i32_1 = arith.constant 0 : i32
    return %c0_i32, %c0_i32_0 : i32, i32
  }
}

</mosaic_0001>

<llo_original>
// kernel: gru_forecast_forward.4
$region0: #{gru_forecast_forward.4}
  #allocation0 [shape = 'u32[]', space=smem, size = 0x4, offset = 0x4, fixed_abs, tag = 'smem constant byte address 0x4 - core index']
  #allocation1 [shape = 'u32[144,128]{1,0:T(1,128)}', space=vmem, size = 0x12000, scoped, tag = 'internal scratch']
  %s0 = inlined_call_operand.vmem [shape: f32[16,4], index: 0, kind: input, shape index: {}]
  %s1 = inlined_call_operand.vmem [shape: f32[4,96], index: 1, kind: input, shape index: {}]
  %s2 = inlined_call_operand.vmem [shape: f32[1,96], index: 2, kind: input, shape index: {}]
  %s3 = inlined_call_operand.vmem [shape: f32[16,96], index: 3, kind: output, shape index: {}]
  %s4 = sld [smem:[#allocation0]]
  $region22: #{gru_forecast_forward.4} parent=0
    _
  %s6 = ssub.s32 1, %s4
  %s7 = scalar_select 0, %s6, %s4
  // Predicated region
  $region2: #{gru_forecast_forward.4} parent=0 // pred_check
    _
  $region3: #{gru_forecast_forward.4} parent=0 // pred_check_branch
    %9 = sbr.rel (0) target = $region5
  $region4: #{gru_forecast_forward.4} parent=0 // pred_region
    _
  $region5: #{gru_forecast_forward.4} parent=0 // pred_fallthru
    _
  // Predicated region
  $region6: #{gru_forecast_forward.4} parent=0 // pred_check
    _
  $region7: #{gru_forecast_forward.4} parent=0 // pred_check_branch
    %11 = sbr.rel (0) target = $region9
  $region8: #{gru_forecast_forward.4} parent=0 // pred_region
    _
  $region9: #{gru_forecast_forward.4} parent=0 // pred_fallthru
    _
  // Predicated region
  $region10: #{gru_forecast_forward.4} parent=0 // pred_check
    _
  $region11: #{gru_forecast_forward.4} parent=0 // pred_check_branch
    %13 = sbr.rel (0) target = $region13
  $region12: #{gru_forecast_forward.4} parent=0 // pred_region
    _
  $region13: #{gru_forecast_forward.4} parent=0 // pred_fallthru
    _
  %v14 = vld [vmem:[%s0] sm:$0xff]
  %v15 = vld [vmem:[%s0 + $0x8] sm:$0xff]
  %v16 = vld [vmem:[%s1] sm:$0xf]
  %v17 = vld [vmem:[%s2] sm:$0x1]
  %v19 = vlaneseq
  %v20 = vshrl.u32 %v19, 7
  %v21 = vsub.s32 0, %v20
  %v22 = vrot.slane %v17, %v21
  %vm24 = vcmask 31744
  %v26 = vsel %vm24, %v14, 0
  %v29 = vsel %vm24, %v15, 0
  %vm31 = vcmask 1043456
  %v33 = vsel %vm31, %v16, 0
  %35 = vmatprep.subr.mxu0 0.0
  %36 = vmatpush1.msra.mxu0 0.0
  %37 = vmatprep.subr.mxu0 0.0
  %38 = vmatpush1.msra.mxu0 0.0
  %39 = vmatprep.subr.mxu0 0.0
  %40 = vmatpush1.msra.mxu0 0.0
  %41 = vmatprep.subr.mxu0 0.0
  %42 = vmatpush1.msra.mxu0 0.0
  %43 = vmatprep.subr.mxu0 0.0
  %44 = vmatpush1.msra.mxu0 0.0
  %45 = vmatprep.subr.mxu0 0.0
  %46 = vmatpush1.msra.mxu0 0.0
  %47 = vmatprep.subr.mxu0 0.0
  %48 = vmatpush1.msra.mxu0 0.0
  %49 = vmatprep.subr.mxu0 0.0
  %50 = vmatpush1.msra.mxu0 0.0
  %51 = vmatprep.subr.mxu0 0.0
  %52 = vmatpush1.msra.mxu0 0.0
  %53 = vmatprep.subr.mxu0 0.0
  %54 = vmatpush1.msra.mxu0 0.0
  %55 = vmatprep.subr.mxu0 0.0
  %56 = vmatpush1.msra.mxu0 0.0
  %57 = vmatprep.subr.mxu0 0.0
  %58 = vmatpush1.msra.mxu0 0.0
  %59 = vmatprep.subr.mxu0 0.0
  %60 = vmatpush1.msra.mxu0 0.0
  %61 = vmatprep.subr.mxu0 0.0
  %62 = vmatpush1.msra.mxu0 0.0
  %63 = vmatprep.subr.mxu0 0.0
  %64 = vmatpush1.msra.mxu0 0.0
  %65 = vmatprep.subr.mxu0 0.0
  %66 = vmatpush1.msra.mxu0 %v33
  %67 = vmatprep.subr.mxu0 0.0
  %68 = vmatpush2.msra.mxu0 0.0
  %69 = vmatprep.subr.mxu0 0.0
  %70 = vmatpush2.msra.mxu0 0.0
  %71 = vmatprep.subr.mxu0 0.0
  %72 = vmatpush2.msra.mxu0 0.0
  %73 = vmatprep.subr.mxu0 0.0
  %74 = vmatpush2.msra.mxu0 0.0
  %75 = vmatprep.subr.mxu0 0.0
  %76 = vmatpush2.msra.mxu0 0.0
  %77 = vmatprep.subr.mxu0 0.0
  %78 = vmatpush2.msra.mxu0 0.0
  %79 = vmatprep.subr.mxu0 0.0
  %80 = vmatpush2.msra.mxu0 0.0
  %81 = vmatprep.subr.mxu0 0.0
  %82 = vmatpush2.msra.mxu0 0.0
  %83 = vmatprep.subr.mxu0 0.0
  %84 = vmatpush2.msra.mxu0 0.0
  %85 = vmatprep.subr.mxu0 0.0
  %86 = vmatpush2.msra.mxu0 0.0
  %87 = vmatprep.subr.mxu0 0.0
  %88 = vmatpush2.msra.mxu0 0.0
  %89 = vmatprep.subr.mxu0 0.0
  %90 = vmatpush2.msra.mxu0 0.0
  %91 = vmatprep.subr.mxu0 0.0
  %92 = vmatpush2.msra.mxu0 0.0
  %93 = vmatprep.subr.mxu0 0.0
  %94 = vmatpush2.msra.mxu0 0.0
  %95 = vmatprep.subr.mxu0 0.0
  %96 = vmatpush2.msra.mxu0 0.0
  %97 = vmatprep.subr.mxu0 0.0
  %98 = vmatpush2.msra.mxu0 0.0
  %99 = vmatprep.mubr.f32.mxu0 0.0
  %100 = vmatmul.mubr.f32.gmra.mxu0 %v26
  %v101 = vpop.f32.mrf.mxu0
  %v102 = vadd.f32 %v22, %v101
  %v103 = vpop.f32.mrf.mxu0
  %104 = vmatprep.mubr.f32.mxu0 0.0
  %105 = vmatmul.mubr.f32.gmra.mxu0 %v29
  %v106 = vpop.f32.mrf.mxu0
  %v107 = vadd.f32 %v22, %v106
  %v108 = vpop.f32.mrf.mxu0
  %109 = vdwg.mxu0
  %vm110 = vcmask 785408
  %111 = vst.msk [vmem:[%s3] sm:$0xff] %vm110, %v102
  %112 = vst.msk [vmem:[%s3 + $0x8] sm:$0xff] %vm110, %v107
  // Predicated region
  $region14: #{gru_forecast_forward.4} parent=0 // pred_check
    _
  $region15: #{gru_forecast_forward.4} parent=0 // pred_check_branch
    %114 = sbr.rel (0) target = $region17
  $region16: #{gru_forecast_forward.4} parent=0 // pred_region
    _
  $region17: #{gru_forecast_forward.4} parent=0 // pred_fallthru
    _
  // Predicated region
  $region18: #{gru_forecast_forward.4} parent=0 // pred_check
    _
  $region19: #{gru_forecast_forward.4} parent=0 // pred_check_branch
    %116 = sbr.rel (0) target = $region21
  $region20: #{gru_forecast_forward.4} parent=0 // pred_region
    _
  $region21: #{gru_forecast_forward.4} parent=0 // pred_fallthru
    _

// kernel: gru_forecast_forward.6
$region0: #{gru_forecast_forward.6}
  #allocation0 [shape = 'u32[]', space=smem, size = 0x4, offset = 0x4, fixed_abs, tag = 'smem constant byte address 0x4 - core index']
  #allocation1 [shape = 'u32[144,128]{1,0:T(1,128)}', space=vmem, size = 0x12000, scoped, tag = 'internal scratch']
  %s0 = inlined_call_operand.vmem [shape: f32[16,32], index: 0, kind: input, shape index: {}]
  %s1 = inlined_call_operand.vmem [shape: f32[32,96], index: 1, kind: input, shape index: {}]
  %s2 = inlined_call_operand.vmem [shape: f32[1,96], index: 2, kind: input, shape index: {}]
  %s3 = inlined_call_operand.vmem [shape: f32[16,96], index: 3, kind: output, shape index: {}]
  %s4 = sld [smem:[#allocation0]]
  $region22: #{gru_forecast_forward.6} parent=0
    _
  %s6 = ssub.s32 1, %s4
  %s7 = scalar_select 0, %s6, %s4
  // Predicated region
  $region2: #{gru_forecast_forward.6} parent=0 // pred_check
    _
  $region3: #{gru_forecast_forward.6} parent=0 // pred_check_branch
    %9 = sbr.rel (0) target = $region5
  $region4: #{gru_forecast_forward.6} parent=0 // pred_region
    _
  $region5: #{gru_forecast_forward.6} parent=0 // pred_fallthru
    _
  // Predicated region
  $region6: #{gru_forecast_forward.6} parent=0 // pred_check
    _
  $region7: #{gru_forecast_forward.6} parent=0 // pred_check_branch
    %11 = sbr.rel (0) target = $region9
  $region8: #{gru_forecast_forward.6} parent=0 // pred_region
    _
  $region9: #{gru_forecast_forward.6} parent=0 // pred_fallthru
    _
  // Predicated region
  $region10: #{gru_forecast_forward.6} parent=0 // pred_check
    _
  $region11: #{gru_forecast_forward.6} parent=0 // pred_check_branch
    %13 = sbr.rel (0) target = $region13
  $region12: #{gru_forecast_forward.6} parent=0 // pred_region
    _
  $region13: #{gru_forecast_forward.6} parent=0 // pred_fallthru
    _
  %v14 = vld [vmem:[%s0] sm:$0xff]
  %v15 = vld [vmem:[%s0 + $0x8] sm:$0xff]
  %v16 = vld [vmem:[%s1] sm:$0xff]
  %v17 = vld [vmem:[%s1 + $0x8] sm:$0xff]
  %v18 = vld [vmem:[%s1 + $0x10] sm:$0xff]
  %v19 = vld [vmem:[%s1 + $0x18] sm:$0xff]
  %v20 = vld [vmem:[%s2] sm:$0x1]
  %v22 = vlaneseq
  %v23 = vshrl.u32 %v22, 7
  %v24 = vsub.s32 0, %v23
  %v25 = vrot.slane %v20, %v24
  %vm27 = vcmask 261120
  %v29 = vsel %vm27, %v14, 0
  %v32 = vsel %vm27, %v15, 0
  %34 = vmatprep.subr.mxu0 0.0
  %35 = vmatpush1.msra.mxu0 0.0
  %36 = vmatprep.subr.mxu0 0.0
  %37 = vmatpush1.msra.mxu0 0.0
  %38 = vmatprep.subr.mxu0 0.0
  %39 = vmatpush1.msra.mxu0 0.0
  %40 = vmatprep.subr.mxu0 0.0
  %41 = vmatpush1.msra.mxu0 0.0
  %42 = vmatprep.subr.mxu0 0.0
  %43 = vmatpush1.msra.mxu0 0.0
  %44 = vmatprep.subr.mxu0 0.0
  %45 = vmatpush1.msra.mxu0 0.0
  %46 = vmatprep.subr.mxu0 0.0
  %47 = vmatpush1.msra.mxu0 0.0
  %48 = vmatprep.subr.mxu0 0.0
  %49 = vmatpush1.msra.mxu0 0.0
  %50 = vmatprep.subr.mxu0 0.0
  %51 = vmatpush1.msra.mxu0 0.0
  %52 = vmatprep.subr.mxu0 0.0
  %53 = vmatpush1.msra.mxu0 0.0
  %54 = vmatprep.subr.mxu0 0.0
  %55 = vmatpush1.msra.mxu0 0.0
  %56 = vmatprep.subr.mxu0 0.0
  %57 = vmatpush1.msra.mxu0 0.0
  %58 = vmatprep.subr.mxu0 0.0
  %59 = vmatpush1.msra.mxu0 %v19
  %60 = vmatprep.subr.mxu0 0.0
  %61 = vmatpush1.msra.mxu0 %v18
  %62 = vmatprep.subr.mxu0 0.0
  %63 = vmatpush1.msra.mxu0 %v17
  %64 = vmatprep.subr.mxu0 0.0
  %65 = vmatpush1.msra.mxu0 %v16
  %66 = vmatprep.subr.mxu0 0.0
  %67 = vmatpush2.msra.mxu0 0.0
  %68 = vmatprep.subr.mxu0 0.0
  %69 = vmatpush2.msra.mxu0 0.0
  %70 = vmatprep.subr.mxu0 0.0
  %71 = vmatpush2.msra.mxu0 0.0
  %72 = vmatprep.subr.mxu0 0.0
  %73 = vmatpush2.msra.mxu0 0.0
  %74 = vmatprep.subr.mxu0 0.0
  %75 = vmatpush2.msra.mxu0 0.0
  %76 = vmatprep.subr.mxu0 0.0
  %77 = vmatpush2.msra.mxu0 0.0
  %78 = vmatprep.subr.mxu0 0.0
  %79 = vmatpush2.msra.mxu0 0.0
  %80 = vmatprep.subr.mxu0 0.0
  %81 = vmatpush2.msra.mxu0 0.0
  %82 = vmatprep.subr.mxu0 0.0
  %83 = vmatpush2.msra.mxu0 0.0
  %84 = vmatprep.subr.mxu0 0.0
  %85 = vmatpush2.msra.mxu0 0.0
  %86 = vmatprep.subr.mxu0 0.0
  %87 = vmatpush2.msra.mxu0 0.0
  %88 = vmatprep.subr.mxu0 0.0
  %89 = vmatpush2.msra.mxu0 0.0
  %90 = vmatprep.subr.mxu0 0.0
  %91 = vmatpush2.msra.mxu0 0.0
  %92 = vmatprep.subr.mxu0 0.0
  %93 = vmatpush2.msra.mxu0 0.0
  %94 = vmatprep.subr.mxu0 0.0
  %95 = vmatpush2.msra.mxu0 0.0
  %96 = vmatprep.subr.mxu0 0.0
  %97 = vmatpush2.msra.mxu0 0.0
  %98 = vmatprep.mubr.f32.mxu0 0.0
  %99 = vmatmul.mubr.f32.gmra.mxu0 %v29
  %v100 = vpop.f32.mrf.mxu0
  %v101 = vadd.f32 %v25, %v100
  %v102 = vpop.f32.mrf.mxu0
  %103 = vmatprep.mubr.f32.mxu0 0.0
  %104 = vmatmul.mubr.f32.gmra.mxu0 %v32
  %v105 = vpop.f32.mrf.mxu0
  %v106 = vadd.f32 %v25, %v105
  %v107 = vpop.f32.mrf.mxu0
  %108 = vdwg.mxu0
  %vm109 = vcmask 785408
  %110 = vst.msk [vmem:[%s3] sm:$0xff] %vm109, %v101
  %111 = vst.msk [vmem:[%s3 + $0x8] sm:$0xff] %vm109, %v106
  // Predicated region
  $region14: #{gru_forecast_forward.6} parent=0 // pred_check
    _
  $region15: #{gru_forecast_forward.6} parent=0 // pred_check_branch
    %113 = sbr.rel (0) target = $region17
  $region16: #{gru_forecast_forward.6} parent=0 // pred_region
    _
  $region17: #{gru_forecast_forward.6} parent=0 // pred_fallthru
    _
  // Predicated region
  $region18: #{gru_forecast_forward.6} parent=0 // pred_check
    _
  $region19: #{gru_forecast_forward.6} parent=0 // pred_check_branch
    %115 = sbr.rel (0) target = $region21
  $region20: #{gru_forecast_forward.6} parent=0 // pred_region
    _
  $region21: #{gru_forecast_forward.6} parent=0 // pred_fallthru
    _

// kernel: gru_forecast_forward.5
$region0: #{gru_forecast_forward.5}
  #allocation0 [shape = 'u32[]', space=smem, size = 0x4, offset = 0x4, fixed_abs, tag = 'smem constant byte address 0x4 - core index']
  #allocation1 [shape = 'u32[144,128]{1,0:T(1,128)}', space=vmem, size = 0x12000, scoped, tag = 'internal scratch']
  %s0 = inlined_call_operand.vmem [shape: f32[8,2,96], index: 0, kind: input, shape index: {}]
  %s1 = inlined_call_operand.vmem [shape: f32[32,96], index: 1, kind: input, shape index: {}]
  %s2 = inlined_call_operand.vmem [shape: f32[1,32], index: 2, kind: input, shape index: {}]
  %s3 = inlined_call_operand.vmem [shape: f32[8,2,32], index: 3, kind: output, shape index: {}]
  %s4 = sld [smem:[#allocation0]]
  $region22: #{gru_forecast_forward.5} parent=0
    _
  %s6 = ssub.s32 1, %s4
  %s7 = scalar_select 0, %s6, %s4
  // Predicated region
  $region2: #{gru_forecast_forward.5} parent=0 // pred_check
    _
  $region3: #{gru_forecast_forward.5} parent=0 // pred_check_branch
    %9 = sbr.rel (0) target = $region5
  $region4: #{gru_forecast_forward.5} parent=0 // pred_region
    _
  $region5: #{gru_forecast_forward.5} parent=0 // pred_fallthru
    _
  // Predicated region
  $region6: #{gru_forecast_forward.5} parent=0 // pred_check
    _
  $region7: #{gru_forecast_forward.5} parent=0 // pred_check_branch
    %11 = sbr.rel (0) target = $region9
  $region8: #{gru_forecast_forward.5} parent=0 // pred_region
    _
  $region9: #{gru_forecast_forward.5} parent=0 // pred_fallthru
    _
  // Predicated region
  $region10: #{gru_forecast_forward.5} parent=0 // pred_check
    _
  $region11: #{gru_forecast_forward.5} parent=0 // pred_check_branch
    %13 = sbr.rel (0) target = $region13
  $region12: #{gru_forecast_forward.5} parent=0 // pred_region
    _
  $region13: #{gru_forecast_forward.5} parent=0 // pred_fallthru
    _
  %v14 = vld [vmem:[%s1] sm:$0xff]
  %v15 = vld [vmem:[%s1 + $0x8] sm:$0xff]
  %v16 = vld [vmem:[%s1 + $0x10] sm:$0xff]
  %v17 = vld [vmem:[%s1 + $0x18] sm:$0xff]
  %v18 = vld [vmem:[%s2] sm:$0x1]
  %v19 = vld [vmem:[%s0] sm:$0x3]
  %vm20 = vcmask 261120
  %v22 = vsel %vm20, 0.0, 0
  %24 = vmatprep.subr.mxu0 0.0
  %25 = vmatpush1.msra.mxu0 0.0
  %26 = vmatprep.subr.mxu0 0.0
  %27 = vmatpush1.msra.mxu0 0.0
  %28 = vmatprep.subr.mxu0 0.0
  %29 = vmatpush1.msra.mxu0 0.0
  %30 = vmatprep.subr.mxu0 0.0
  %31 = vmatpush1.msra.mxu0 0.0
  %32 = vmatprep.subr.mxu0 0.0
  %33 = vmatpush1.msra.mxu0 0.0
  %34 = vmatprep.subr.mxu0 0.0
  %35 = vmatpush1.msra.mxu0 0.0
  %36 = vmatprep.subr.mxu0 0.0
  %37 = vmatpush1.msra.mxu0 0.0
  %38 = vmatprep.subr.mxu0 0.0
  %39 = vmatpush1.msra.mxu0 0.0
  %40 = vmatprep.subr.mxu0 0.0
  %41 = vmatpush1.msra.mxu0 0.0
  %42 = vmatprep.subr.mxu0 0.0
  %43 = vmatpush1.msra.mxu0 0.0
  %44 = vmatprep.subr.mxu0 0.0
  %45 = vmatpush1.msra.mxu0 0.0
  %46 = vmatprep.subr.mxu0 0.0
  %47 = vmatpush1.msra.mxu0 0.0
  %48 = vmatprep.subr.mxu0 0.0
  %49 = vmatpush1.msra.mxu0 %v17
  %50 = vmatprep.subr.mxu0 0.0
  %51 = vmatpush1.msra.mxu0 %v16
  %52 = vmatprep.subr.mxu0 0.0
  %53 = vmatpush1.msra.mxu0 %v15
  %54 = vmatprep.subr.mxu0 0.0
  %55 = vmatpush1.msra.mxu0 %v14
  %56 = vmatprep.subr.mxu0 0.0
  %57 = vmatpush2.msra.mxu0 0.0
  %58 = vmatprep.subr.mxu0 0.0
  %59 = vmatpush2.msra.mxu0 0.0
  %60 = vmatprep.subr.mxu0 0.0
  %61 = vmatpush2.msra.mxu0 0.0
  %62 = vmatprep.subr.mxu0 0.0
  %63 = vmatpush2.msra.mxu0 0.0
  %64 = vmatprep.subr.mxu0 0.0
  %65 = vmatpush2.msra.mxu0 0.0
  %66 = vmatprep.subr.mxu0 0.0
  %67 = vmatpush2.msra.mxu0 0.0
  %68 = vmatprep.subr.mxu0 0.0
  %69 = vmatpush2.msra.mxu0 0.0
  %70 = vmatprep.subr.mxu0 0.0
  %71 = vmatpush2.msra.mxu0 0.0
  %72 = vmatprep.subr.mxu0 0.0
  %73 = vmatpush2.msra.mxu0 0.0
  %74 = vmatprep.subr.mxu0 0.0
  %75 = vmatpush2.msra.mxu0 0.0
  %76 = vmatprep.subr.mxu0 0.0
  %77 = vmatpush2.msra.mxu0 0.0
  %78 = vmatprep.subr.mxu0 0.0
  %79 = vmatpush2.msra.mxu0 0.0
  %80 = vmatprep.subr.mxu0 0.0
  %81 = vmatpush2.msra.mxu0 0.0
  %82 = vmatprep.subr.mxu0 0.0
  %83 = vmatpush2.msra.mxu0 0.0
  %84 = vmatprep.subr.mxu0 0.0
  %85 = vmatpush2.msra.mxu0 0.0
  %86 = vmatprep.subr.mxu0 0.0
  %87 = vmatpush2.msra.mxu0 0.0
  %88 = vmatprep.mubr.f32.mxu0 0.0
  %89 = vmatmul.mubr.f32.gmra.mxu0 %v22
  %v90 = vpop.f32.mrf.mxu0
  %v91 = vadd.f32 0.0, %v90
  %v92 = vpop.f32.mrf.mxu0
  %93 = vdwg.mxu0
  %v94 = vadd.f32 %v19, %v91
  %v95 = vxor.u32 %v94, 2147483648
  %v96 = vmul.f32 %v95, 1.442695
  %v97 = vpow.pop %v96
  %v98 = vadd.f32 %v97, 1.0
  %v99 = vrcp.pop %v98
  %v100 = vmul.f32 1.0, %v99
  %v102 = vlaneseq
  %v103 = vshrl.u32 %v102, 7
  %v104 = vsub.s32 0, %v103
  %v105 = vrot.slane %v18, %v104
  %106 = vrot.lane.b32.xlu0 %v105, 64
  %v107 = vpop.permute.xlu0 %106
  %v109 = vadd.f32 %v91, %v107
  %111 = vrot.lane.b32.xlu0 %v109, 64
  %v112 = vpop.permute.xlu0 %111
  %v114 = vmul.f32 %v100, %v112
  %116 = vrot.lane.b32.xlu0 %v114, 64
  %v117 = vpop.permute.xlu0 %116
  %v119 = vadd.f32 %v19, %v117
  %v120 = vtanh.pop %v119
  %v121 = vsub.f32 1.0, %v100
  %123 = vrot.lane.b32.xlu0 %v120, 96
  %v124 = vpop.permute.xlu0 %123
  %v126 = vmul.f32 %v121, %v124
  %v127 = vmul.f32 %v100, 0.0
  %v128 = vadd.f32 %v126, %v127
  %130 = vrot.lane.b32.xlu0 %v128, 96
  %v131 = vpop.permute.xlu0 %130
  %vm133 = vcmask 254976
  %134 = vst.msk [vmem:[%s3] sm:$0x3] %vm133, %v131
  %s135 = scalar_lea.vmem %s0, 2
  %v136 = vld [vmem:[%s135] sm:$0x3]
  %v137 = vsel %vm20, %v131, 0
  %139 = vmatprep.subr.mxu0 0.0
  %140 = vmatpush1.msra.mxu0 0.0
  %141 = vmatprep.subr.mxu0 0.0
  %142 = vmatpush1.msra.mxu0 0.0
  %143 = vmatprep.subr.mxu0 0.0
  %144 = vmatpush1.msra.mxu0 0.0
  %145 = vmatprep.subr.mxu0 0.0
  %146 = vmatpush1.msra.mxu0 0.0
  %147 = vmatprep.subr.mxu0 0.0
  %148 = vmatpush1.msra.mxu0 0.0
  %149 = vmatprep.subr.mxu0 0.0
  %150 = vmatpush1.msra.mxu0 0.0
  %151 = vmatprep.subr.mxu0 0.0
  %152 = vmatpush1.msra.mxu0 0.0
  %153 = vmatprep.subr.mxu0 0.0
  %154 = vmatpush1.msra.mxu0 0.0
  %155 = vmatprep.subr.mxu0 0.0
  %156 = vmatpush1.msra.mxu0 0.0
  %157 = vmatprep.subr.mxu0 0.0
  %158 = vmatpush1.msra.mxu0 0.0
  %159 = vmatprep.subr.mxu0 0.0
  %160 = vmatpush1.msra.mxu0 0.0
  %161 = vmatprep.subr.mxu0 0.0
  %162 = vmatpush1.msra.mxu0 0.0
  %163 = vmatprep.subr.mxu0 0.0
  %164 = vmatpush1.msra.mxu0 %v17
  %165 = vmatprep.subr.mxu0 0.0
  %166 = vmatpush1.msra.mxu0 %v16
  %167 = vmatprep.subr.mxu0 0.0
  %168 = vmatpush1.msra.mxu0 %v15
  %169 = vmatprep.subr.mxu0 0.0
  %170 = vmatpush1.msra.mxu0 %v14
  %171 = vmatprep.subr.mxu0 0.0
  %172 = vmatpush2.msra.mxu0 0.0
  %173 = vmatprep.subr.mxu0 0.0
  %174 = vmatpush2.msra.mxu0 0.0
  %175 = vmatprep.subr.mxu0 0.0
  %176 = vmatpush2.msra.mxu0 0.0
  %177 = vmatprep.subr.mxu0 0.0
  %178 = vmatpush2.msra.mxu0 0.0
  %179 = vmatprep.subr.mxu0 0.0
  %180 = vmatpush2.msra.mxu0 0.0
  %181 = vmatprep.subr.mxu0 0.0
  %182 = vmatpush2.msra.mxu0 0.0
  %183 = vmatprep.subr.mxu0 0.0
  %184 = vmatpush2.msra.mxu0 0.0
  %185 = vmatprep.subr.mxu0 0.0
  %186 = vmatpush2.msra.mxu0 0.0
  %187 = vmatprep.subr.mxu0 0.0
  %188 = vmatpush2.msra.mxu0 0.0
  %189 = vmatprep.subr.mxu0 0.0
  %190 = vmatpush2.msra.mxu0 0.0
  %191 = vmatprep.subr.mxu0 0.0
  %192 = vmatpush2.msra.mxu0 0.0
  %193 = vmatprep.subr.mxu0 0.0
  %194 = vmatpush2.msra.mxu0 0.0
  %195 = vmatprep.subr.mxu0 0.0
  %196 = vmatpush2.msra.mxu0 0.0
  %197 = vmatprep.subr.mxu0 0.0
  %198 = vmatpush2.msra.mxu0 0.0
  %199 = vmatprep.subr.mxu0 0.0
  %200 = vmatpush2.msra.mxu0 0.0
  %201 = vmatprep.subr.mxu0 0.0
  %202 = vmatpush2.msra.mxu0 0.0
  %203 = vmatprep.mubr.f32.mxu0 0.0
  %204 = vmatmul.mubr.f32.gmra.mxu0 %v137
  %v205 = vpop.f32.mrf.mxu0
  %v206 = vadd.f32 0.0, %v205
  %v207 = vpop.f32.mrf.mxu0
  %208 = vdwg.mxu0
  %v209 = vadd.f32 %v136, %v206
  %v210 = vxor.u32 %v209, 2147483648
  %v211 = vmul.f32 %v210, 1.442695
  %v212 = vpow.pop %v211
  %v213 = vadd.f32 %v212, 1.0
  %v214 = vrcp.pop %v213
  %v215 = vmul.f32 1.0, %v214
  %v216 = vadd.f32 %v206, %v107
  %218 = vrot.lane.b32.xlu0 %v216, 64
  %v219 = vpop.permute.xlu0 %218
  %v221 = vmul.f32 %v215, %v219
  %223 = vrot.lane.b32.xlu0 %v221, 64
  %v224 = vpop.permute.xlu0 %223
  %v226 = vadd.f32 %v136, %v224
  %v227 = vtanh.pop %v226
  %v228 = vsub.f32 1.0, %v215
  %230 = vrot.lane.b32.xlu0 %v227, 96
  %v231 = vpop.permute.xlu0 %230
  %v233 = vmul.f32 %v228, %v231
  %v234 = vmul.f32 %v215, %v128
  %v235 = vadd.f32 %v233, %v234
  %237 = vrot.lane.b32.xlu0 %v235, 96
  %v238 = vpop.permute.xlu0 %237
  %s240 = scalar_lea.vmem %s3, 2
  %241 = vst.msk [vmem:[%s240] sm:$0x3] %vm133, %v238
  %s242 = scalar_lea.vmem %s0, 4
  %v243 = vld [vmem:[%s242] sm:$0x3]
  %v244 = vsel %vm20, %v238, 0
  %246 = vmatprep.subr.mxu0 0.0
  %247 = vmatpush1.msra.mxu0 0.0
  %248 = vmatprep.subr.mxu0 0.0
  %249 = vmatpush1.msra.mxu0 0.0
  %250 = vmatprep.subr.mxu0 0.0
  %251 = vmatpush1.msra.mxu0 0.0
  %252 = vmatprep.subr.mxu0 0.0
  %253 = vmatpush1.msra.mxu0 0.0
  %254 = vmatprep.subr.mxu0 0.0
  %255 = vmatpush1.msra.mxu0 0.0
  %256 = vmatprep.subr.mxu0 0.0
  %257 = vmatpush1.msra.mxu0 0.0
  %258 = vmatprep.subr.mxu0 0.0
  %259 = vmatpush1.msra.mxu0 0.0
  %260 = vmatprep.subr.mxu0 0.0
  %261 = vmatpush1.msra.mxu0 0.0
  %262 = vmatprep.subr.mxu0 0.0
  %263 = vmatpush1.msra.mxu0 0.0
  %264 = vmatprep.subr.mxu0 0.0
  %265 = vmatpush1.msra.mxu0 0.0
  %266 = vmatprep.subr.mxu0 0.0
  %267 = vmatpush1.msra.mxu0 0.0
  %268 = vmatprep.subr.mxu0 0.0
  %269 = vmatpush1.msra.mxu0 0.0
  %270 = vmatprep.subr.mxu0 0.0
  %271 = vmatpush1.msra.mxu0 %v17
  %272 = vmatprep.subr.mxu0 0.0
  %273 = vmatpush1.msra.mxu0 %v16
  %274 = vmatprep.subr.mxu0 0.0
  %275 = vmatpush1.msra.mxu0 %v15
  %276 = vmatprep.subr.mxu0 0.0
  %277 = vmatpush1.msra.mxu0 %v14
  %278 = vmatprep.subr.mxu0 0.0
  %279 = vmatpush2.msra.mxu0 0.0
  %280 = vmatprep.subr.mxu0 0.0
  %281 = vmatpush2.msra.mxu0 0.0
  %282 = vmatprep.subr.mxu0 0.0
  %283 = vmatpush2.msra.mxu0 0.0
  %284 = vmatprep.subr.mxu0 0.0
  %285 = vmatpush2.msra.mxu0 0.0
  %286 = vmatprep.subr.mxu0 0.0
  %287 = vmatpush2.msra.mxu0 0.0
  %288 = vmatprep.subr.mxu0 0.0
  %289 = vmatpush2.msra.mxu0 0.0
  %290 = vmatprep.subr.mxu0 0.0
  %291 = vmatpush2.msra.mxu0 0.0
  %292 = vmatprep.subr.mxu0 0.0
  %293 = vmatpush2.msra.mxu0 0.0
  %294 = vmatprep.subr.mxu0 0.0
  %295 = vmatpush2.msra.mxu0 0.0
  %296 = vmatprep.subr.mxu0 0.0
  %297 = vmatpush2.msra.mxu0 0.0
  %298 = vmatprep.subr.mxu0 0.0
  %299 = vmatpush2.msra.mxu0 0.0
  %300 = vmatprep.subr.mxu0 0.0
  %301 = vmatpush2.msra.mxu0 0.0
  %302 = vmatprep.subr.mxu0 0.0
  %303 = vmatpush2.msra.mxu0 0.0
  %304 = vmatprep.subr.mxu0 0.0
  %305 = vmatpush2.msra.mxu0 0.0
  %306 = vmatprep.subr.mxu0 0.0
  %307 = vmatpush2.msra.mxu0 0.0
  %308 = vmatprep.subr.mxu0 0.0
  %309 = vmatpush2.msra.mxu0 0.0
  %310 = vmatprep.mubr.f32.mxu0 0.0
  %311 = vmatmul.mubr.f32.gmra.mxu0 %v244
  %v312 = vpop.f32.mrf.mxu0
  %v313 = vadd.f32 0.0, %v312
  %v314 = vpop.f32.mrf.mxu0
  %315 = vdwg.mxu0
  %v316 = vadd.f32 %v243, %v313
  %v317 = vxor.u32 %v316, 2147483648
  %v318 = vmul.f32 %v317, 1.442695
  %v319 = vpow.pop %v318
  %v320 = vadd.f32 %v319, 1.0
  %v321 = vrcp.pop %v320
  %v322 = vmul.f32 1.0, %v321
  %v323 = vadd.f32 %v313, %v107
  %325 = vrot.lane.b32.xlu0 %v323, 64
  %v326 = vpop.permute.xlu0 %325
  %v328 = vmul.f32 %v322, %v326
  %330 = vrot.lane.b32.xlu0 %v328, 64
  %v331 = vpop.permute.xlu0 %330
  %v333 = vadd.f32 %v243, %v331
  %v334 = vtanh.pop %v333
  %v335 = vsub.f32 1.0, %v322
  %337 = vrot.lane.b32.xlu0 %v334, 96
  %v338 = vpop.permute.xlu0 %337
  %v340 = vmul.f32 %v335, %v338
  %v341 = vmul.f32 %v322, %v235
  %v342 = vadd.f32 %v340, %v341
  %344 = vrot.lane.b32.xlu0 %v342, 96
  %v345 = vpop.permute.xlu0 %344
  %s347 = scalar_lea.vmem %s3, 4
  %348 = vst.msk [vmem:[%s347] sm:$0x3] %vm133, %v345
  %s349 = scalar_lea.vmem %s0, 6
  %v350 = vld [vmem:[%s349] sm:$0x3]
  %v351 = vsel %vm20, %v345, 0
  %353 = vmatprep.subr.mxu0 0.0
  %354 = vmatpush1.msra.mxu0 0.0
  %355 = vmatprep.subr.mxu0 0.0
  %356 = vmatpush1.msra.mxu0 0.0
  %357 = vmatprep.subr.mxu0 0.0
  %358 = vmatpush1.msra.mxu0 0.0
  %359 = vmatprep.subr.mxu0 0.0
  %360 = vmatpush1.msra.mxu0 0.0
  %361 = vmatprep.subr.mxu0 0.0
  %362 = vmatpush1.msra.mxu0 0.0
  %363 = vmatprep.subr.mxu0 0.0
  %364 = vmatpush1.msra.mxu0 0.0
  %365 = vmatprep.subr.mxu0 0.0
  %366 = vmatpush1.msra.mxu0 0.0
  %367 = vmatprep.subr.mxu0 0.0
  %368 = vmatpush1.msra.mxu0 0.0
  %369 = vmatprep.subr.mxu0 0.0
  %370 = vmatpush1.msra.mxu0 0.0
  %371 = vmatprep.subr.mxu0 0.0
  %372 = vmatpush1.msra.mxu0 0.0
  %373 = vmatprep.subr.mxu0 0.0
  %374 = vmatpush1.msra.mxu0 0.0
  %375 = vmatprep.subr.mxu0 0.0
  %376 = vmatpush1.msra.mxu0 0.0
  %377 = vmatprep.subr.mxu0 0.0
  %378 = vmatpush1.msra.mxu0 %v17
  %379 = vmatprep.subr.mxu0 0.0
  %380 = vmatpush1.msra.mxu0 %v16
  %381 = vmatprep.subr.mxu0 0.0
  %382 = vmatpush1.msra.mxu0 %v15
  %383 = vmatprep.subr.mxu0 0.0
  %384 = vmatpush1.msra.mxu0 %v14
  %385 = vmatprep.subr.mxu0 0.0
  %386 = vmatpush2.msra.mxu0 0.0
  %387 = vmatprep.subr.mxu0 0.0
  %388 = vmatpush2.msra.mxu0 0.0
  %389 = vmatprep.subr.mxu0 0.0
  %390 = vmatpush2.msra.mxu0 0.0
  %391 = vmatprep.subr.mxu0 0.0
  %392 = vmatpush2.msra.mxu0 0.0
  %393 = vmatprep.subr.mxu0 0.0
  %394 = vmatpush2.msra.mxu0 0.0
  %395 = vmatprep.subr.mxu0 0.0
  %396 = vmatpush2.msra.mxu0 0.0
  %397 = vmatprep.subr.mxu0 0.0
  %398 = vmatpush2.msra.mxu0 0.0
  %399 = vmatprep.subr.mxu0 0.0
  %400 = vmatpush2.msra.mxu0 0.0
  %401 = vmatprep.subr.mxu0 0.0
  %402 = vmatpush2.msra.mxu0 0.0
  %403 = vmatprep.subr.mxu0 0.0
  %404 = vmatpush2.msra.mxu0 0.0
  %405 = vmatprep.subr.mxu0 0.0
  %406 = vmatpush2.msra.mxu0 0.0
  %407 = vmatprep.subr.mxu0 0.0
  %408 = vmatpush2.msra.mxu0 0.0
  %409 = vmatprep.subr.mxu0 0.0
  %410 = vmatpush2.msra.mxu0 0.0
  %411 = vmatprep.subr.mxu0 0.0
  %412 = vmatpush2.msra.mxu0 0.0
  %413 = vmatprep.subr.mxu0 0.0
  %414 = vmatpush2.msra.mxu0 0.0
  %415 = vmatprep.subr.mxu0 0.0
  %416 = vmatpush2.msra.mxu0 0.0
  %417 = vmatprep.mubr.f32.mxu0 0.0
  %418 = vmatmul.mubr.f32.gmra.mxu0 %v351
  %v419 = vpop.f32.mrf.mxu0
  %v420 = vadd.f32 0.0, %v419
  %v421 = vpop.f32.mrf.mxu0
  %422 = vdwg.mxu0
  %v423 = vadd.f32 %v350, %v420
  %v424 = vxor.u32 %v423, 2147483648
  %v425 = vmul.f32 %v424, 1.442695
  %v426 = vpow.pop %v425
  %v427 = vadd.f32 %v426, 1.0
  %v428 = vrcp.pop %v427
  %v429 = vmul.f32 1.0, %v428
  %v430 = vadd.f32 %v420, %v107
  %432 = vrot.lane.b32.xlu0 %v430, 64
  %v433 = vpop.permute.xlu0 %432
  %v435 = vmul.f32 %v429, %v433
  %437 = vrot.lane.b32.xlu0 %v435, 64
  %v438 = vpop.permute.xlu0 %437
  %v440 = vadd.f32 %v350, %v438
  %v441 = vtanh.pop %v440
  %v442 = vsub.f32 1.0, %v429
  %444 = vrot.lane.b32.xlu0 %v441, 96
  %v445 = vpop.permute.xlu0 %444
  %v447 = vmul.f32 %v442, %v445
  %v448 = vmul.f32 %v429, %v342
  %v449 = vadd.f32 %v447, %v448
  %451 = vrot.lane.b32.xlu0 %v449, 96
  %v452 = vpop.permute.xlu0 %451
  %s454 = scalar_lea.vmem %s3, 6
  %455 = vst.msk [vmem:[%s454] sm:$0x3] %vm133, %v452
  %s456 = scalar_lea.vmem %s0, 8
  %v457 = vld [vmem:[%s456] sm:$0x3]
  %v458 = vsel %vm20, %v452, 0
  %460 = vmatprep.subr.mxu0 0.0
  %461 = vmatpush1.msra.mxu0 0.0
  %462 = vmatprep.subr.mxu0 0.0
  %463 = vmatpush1.msra.mxu0 0.0
  %464 = vmatprep.subr.mxu0 0.0
  %465 = vmatpush1.msra.mxu0 0.0
  %466 = vmatprep.subr.mxu0 0.0
  %467 = vmatpush1.msra.mxu0 0.0
  %468 = vmatprep.subr.mxu0 0.0
  %469 = vmatpush1.msra.mxu0 0.0
  %470 = vmatprep.subr.mxu0 0.0
  %471 = vmatpush1.msra.mxu0 0.0
  %472 = vmatprep.subr.mxu0 0.0
  %473 = vmatpush1.msra.mxu0 0.0
  %474 = vmatprep.subr.mxu0 0.0
  %475 = vmatpush1.msra.mxu0 0.0
  %476 = vmatprep.subr.mxu0 0.0
  %477 = vmatpush1.msra.mxu0 0.0
  %478 = vmatprep.subr.mxu0 0.0
  %479 = vmatpush1.msra.mxu0 0.0
  %480 = vmatprep.subr.mxu0 0.0
  %481 = vmatpush1.msra.mxu0 0.0
  %482 = vmatprep.subr.mxu0 0.0
  %483 = vmatpush1.msra.mxu0 0.0
  %484 = vmatprep.subr.mxu0 0.0
  %485 = vmatpush1.msra.mxu0 %v17
  %486 = vmatprep.subr.mxu0 0.0
  %487 = vmatpush1.msra.mxu0 %v16
  %488 = vmatprep.subr.mxu0 0.0
  %489 = vmatpush1.msra.mxu0 %v15
  %490 = vmatprep.subr.mxu0 0.0
  %491 = vmatpush1.msra.mxu0 %v14
  %492 = vmatprep.subr.mxu0 0.0
  %493 = vmatpush2.msra.mxu0 0.0
  %494 = vmatprep.subr.mxu0 0.0
  %495 = vmatpush2.msra.mxu0 0.0
  %496 = vmatprep.subr.mxu0 0.0
  %497 = vmatpush2.msra.mxu0 0.0
  %498 = vmatprep.subr.mxu0 0.0
  %499 = vmatpush2.msra.mxu0 0.0
  %500 = vmatprep.subr.mxu0 0.0
  %501 = vmatpush2.msra.mxu0 0.0
  %502 = vmatprep.subr.mxu0 0.0
  %503 = vmatpush2.msra.mxu0 0.0
  %504 = vmatprep.subr.mxu0 0.0
  %505 = vmatpush2.msra.mxu0 0.0
  %506 = vmatprep.subr.mxu0 0.0
  %507 = vmatpush2.msra.mxu0 0.0
  %508 = vmatprep.subr.mxu0 0.0
  %509 = vmatpush2.msra.mxu0 0.0
  %510 = vmatprep.subr.mxu0 0.0
  %511 = vmatpush2.msra.mxu0 0.0
  %512 = vmatprep.subr.mxu0 0.0
  %513 = vmatpush2.msra.mxu0 0.0
  %514 = vmatprep.subr.mxu0 0.0
  %515 = vmatpush2.msra.mxu0 0.0
  %516 = vmatprep.subr.mxu0 0.0
  %517 = vmatpush2.msra.mxu0 0.0
  %518 = vmatprep.subr.mxu0 0.0
  %519 = vmatpush2.msra.mxu0 0.0
  %520 = vmatprep.subr.mxu0 0.0
  %521 = vmatpush2.msra.mxu0 0.0
  %522 = vmatprep.subr.mxu0 0.0
  %523 = vmatpush2.msra.mxu0 0.0
  %524 = vmatprep.mubr.f32.mxu0 0.0
  %525 = vmatmul.mubr.f32.gmra.mxu0 %v458
  %v526 = vpop.f32.mrf.mxu0
  %v527 = vadd.f32 0.0, %v526
  %v528 = vpop.f32.mrf.mxu0
  %529 = vdwg.mxu0
  %v530 = vadd.f32 %v457, %v527
  %v531 = vxor.u32 %v530, 2147483648
  %v532 = vmul.f32 %v531, 1.442695
  %v533 = vpow.pop %v532
  %v534 = vadd.f32 %v533, 1.0
  %v535 = vrcp.pop %v534
  %v536 = vmul.f32 1.0, %v535
  %v537 = vadd.f32 %v527, %v107
  %539 = vrot.lane.b32.xlu0 %v537, 64
  %v540 = vpop.permute.xlu0 %539
  %v542 = vmul.f32 %v536, %v540
  %544 = vrot.lane.b32.xlu0 %v542, 64
  %v545 = vpop.permute.xlu0 %544
  %v547 = vadd.f32 %v457, %v545
  %v548 = vtanh.pop %v547
  %v549 = vsub.f32 1.0, %v536
  %551 = vrot.lane.b32.xlu0 %v548, 96
  %v552 = vpop.permute.xlu0 %551
  %v554 = vmul.f32 %v549, %v552
  %v555 = vmul.f32 %v536, %v449
  %v556 = vadd.f32 %v554, %v555
  %558 = vrot.lane.b32.xlu0 %v556, 96
  %v559 = vpop.permute.xlu0 %558
  %s561 = scalar_lea.vmem %s3, 8
  %562 = vst.msk [vmem:[%s561] sm:$0x3] %vm133, %v559
  %s563 = scalar_lea.vmem %s0, 10
  %v564 = vld [vmem:[%s563] sm:$0x3]
  %v565 = vsel %vm20, %v559, 0
  %567 = vmatprep.subr.mxu0 0.0
  %568 = vmatpush1.msra.mxu0 0.0
  %569 = vmatprep.subr.mxu0 0.0
  %570 = vmatpush1.msra.mxu0 0.0
  %571 = vmatprep.subr.mxu0 0.0
  %572 = vmatpush1.msra.mxu0 0.0
  %573 = vmatprep.subr.mxu0 0.0
  %574 = vmatpush1.msra.mxu0 0.0
  %575 = vmatprep.subr.mxu0 0.0
  %576 = vmatpush1.msra.mxu0 0.0
  %577 = vmatprep.subr.mxu0 0.0
  %578 = vmatpush1.msra.mxu0 0.0
  %579 = vmatprep.subr.mxu0 0.0
  %580 = vmatpush1.msra.mxu0 0.0
  %581 = vmatprep.subr.mxu0 0.0
  %582 = vmatpush1.msra.mxu0 0.0
  %583 = vmatprep.subr.mxu0 0.0
  %584 = vmatpush1.msra.mxu0 0.0
  %585 = vmatprep.subr.mxu0 0.0
  %586 = vmatpush1.msra.mxu0 0.0
  %587 = vmatprep.subr.mxu0 0.0
  %588 = vmatpush1.msra.mxu0 0.0
  %589 = vmatprep.subr.mxu0 0.0
  %590 = vmatpush1.msra.mxu0 0.0
  %591 = vmatprep.subr.mxu0 0.0
  %592 = vmatpush1.msra.mxu0 %v17
  %593 = vmatprep.subr.mxu0 0.0
  %594 = vmatpush1.msra.mxu0 %v16
  %595 = vmatprep.subr.mxu0 0.0
  %596 = vmatpush1.msra.mxu0 %v15
  %597 = vmatprep.subr.mxu0 0.0
  %598 = vmatpush1.msra.mxu0 %v14
  %599 = vmatprep.subr.mxu0 0.0
  %600 = vmatpush2.msra.mxu0 0.0
  %601 = vmatprep.subr.mxu0 0.0
  %602 = vmatpush2.msra.mxu0 0.0
  %603 = vmatprep.subr.mxu0 0.0
  %604 = vmatpush2.msra.mxu0 0.0
  %605 = vmatprep.subr.mxu0 0.0
  %606 = vmatpush2.msra.mxu0 0.0
  %607 = vmatprep.subr.mxu0 0.0
  %608 = vmatpush2.msra.mxu0 0.0
  %609 = vmatprep.subr.mxu0 0.0
  %610 = vmatpush2.msra.mxu0 0.0
  %611 = vmatprep.subr.mxu0 0.0
  %612 = vmatpush2.msra.mxu0 0.0
  %613 = vmatprep.subr.mxu0 0.0
  %614 = vmatpush2.msra.mxu0 0.0
  %615 = vmatprep.subr.mxu0 0.0
  %616 = vmatpush2.msra.mxu0 0.0
  %617 = vmatprep.subr.mxu0 0.0
  %618 = vmatpush2.msra.mxu0 0.0
  %619 = vmatprep.subr.mxu0 0.0
  %620 = vmatpush2.msra.mxu0 0.0
  %621 = vmatprep.subr.mxu0 0.0
  %622 = vmatpush2.msra.mxu0 0.0
  %623 = vmatprep.subr.mxu0 0.0
  %624 = vmatpush2.msra.mxu0 0.0
  %625 = vmatprep.subr.mxu0 0.0
  %626 = vmatpush2.msra.mxu0 0.0
  %627 = vmatprep.subr.mxu0 0.0
  %628 = vmatpush2.msra.mxu0 0.0
  %629 = vmatprep.subr.mxu0 0.0
  %630 = vmatpush2.msra.mxu0 0.0
  %631 = vmatprep.mubr.f32.mxu0 0.0
  %632 = vmatmul.mubr.f32.gmra.mxu0 %v565
  %v633 = vpop.f32.mrf.mxu0
  %v634 = vadd.f32 0.0, %v633
  %v635 = vpop.f32.mrf.mxu0
  %636 = vdwg.mxu0
  %v637 = vadd.f32 %v564, %v634
  %v638 = vxor.u32 %v637, 2147483648
  %v639 = vmul.f32 %v638, 1.442695
  %v640 = vpow.pop %v639
  %v641 = vadd.f32 %v640, 1.0
  %v642 = vrcp.pop %v641
  %v643 = vmul.f32 1.0, %v642
  %v644 = vadd.f32 %v634, %v107
  %646 = vrot.lane.b32.xlu0 %v644, 64
  %v647 = vpop.permute.xlu0 %646
  %v649 = vmul.f32 %v643, %v647
  %651 = vrot.lane.b32.xlu0 %v649, 64
  %v652 = vpop.permute.xlu0 %651
  %v654 = vadd.f32 %v564, %v652
  %v655 = vtanh.pop %v654
  %v656 = vsub.f32 1.0, %v643
  %658 = vrot.lane.b32.xlu0 %v655, 96
  %v659 = vpop.permute.xlu0 %658
  %v661 = vmul.f32 %v656, %v659
  %v662 = vmul.f32 %v643, %v556
  %v663 = vadd.f32 %v661, %v662
  %665 = vrot.lane.b32.xlu0 %v663, 96
  %v666 = vpop.permute.xlu0 %665
  %s668 = scalar_lea.vmem %s3, 10
  %669 = vst.msk [vmem:[%s668] sm:$0x3] %vm133, %v666
  %s670 = scalar_lea.vmem %s0, 12
  %v671 = vld [vmem:[%s670] sm:$0x3]
  %v672 = vsel %vm20, %v666, 0
  %674 = vmatprep.subr.mxu0 0.0
  %675 = vmatpush1.msra.mxu0 0.0
  %676 = vmatprep.subr.mxu0 0.0
  %677 = vmatpush1.msra.mxu0 0.0
  %678 = vmatprep.subr.mxu0 0.0
  %679 = vmatpush1.msra.mxu0 0.0
  %680 = vmatprep.subr.mxu0 0.0
  %681 = vmatpush1.msra.mxu0 0.0
  %682 = vmatprep.subr.mxu0 0.0
  %683 = vmatpush1.msra.mxu0 0.0
  %684 = vmatprep.subr.mxu0 0.0
  %685 = vmatpush1.msra.mxu0 0.0
  %686 = vmatprep.subr.mxu0 0.0
  %687 = vmatpush1.msra.mxu0 0.0
  %688 = vmatprep.subr.mxu0 0.0
  %689 = vmatpush1.msra.mxu0 0.0
  %690 = vmatprep.subr.mxu0 0.0
  %691 = vmatpush1.msra.mxu0 0.0
  %692 = vmatprep.subr.mxu0 0.0
  %693 = vmatpush1.msra.mxu0 0.0
  %694 = vmatprep.subr.mxu0 0.0
  %695 = vmatpush1.msra.mxu0 0.0
  %696 = vmatprep.subr.mxu0 0.0
  %697 = vmatpush1.msra.mxu0 0.0
  %698 = vmatprep.subr.mxu0 0.0
  %699 = vmatpush1.msra.mxu0 %v17
  %700 = vmatprep.subr.mxu0 0.0
  %701 = vmatpush1.msra.mxu0 %v16
  %702 = vmatprep.subr.mxu0 0.0
  %703 = vmatpush1.msra.mxu0 %v15
  %704 = vmatprep.subr.mxu0 0.0
  %705 = vmatpush1.msra.mxu0 %v14
  %706 = vmatprep.subr.mxu0 0.0
  %707 = vmatpush2.msra.mxu0 0.0
  %708 = vmatprep.subr.mxu0 0.0
  %709 = vmatpush2.msra.mxu0 0.0
  %710 = vmatprep.subr.mxu0 0.0
  %711 = vmatpush2.msra.mxu0 0.0
  %712 = vmatprep.subr.mxu0 0.0
  %713 = vmatpush2.msra.mxu0 0.0
  %714 = vmatprep.subr.mxu0 0.0
  %715 = vmatpush2.msra.mxu0 0.0
  %716 = vmatprep.subr.mxu0 0.0
  %717 = vmatpush2.msra.mxu0 0.0
  %718 = vmatprep.subr.mxu0 0.0
  %719 = vmatpush2.msra.mxu0 0.0
  %720 = vmatprep.subr.mxu0 0.0
  %721 = vmatpush2.msra.mxu0 0.0
  %722 = vmatprep.subr.mxu0 0.0
  %723 = vmatpush2.msra.mxu0 0.0
  %724 = vmatprep.subr.mxu0 0.0
  %725 = vmatpush2.msra.mxu0 0.0
  %726 = vmatprep.subr.mxu0 0.0
  %727 = vmatpush2.msra.mxu0 0.0
  %728 = vmatprep.subr.mxu0 0.0
  %729 = vmatpush2.msra.mxu0 0.0
  %730 = vmatprep.subr.mxu0 0.0
  %731 = vmatpush2.msra.mxu0 0.0
  %732 = vmatprep.subr.mxu0 0.0
  %733 = vmatpush2.msra.mxu0 0.0
  %734 = vmatprep.subr.mxu0 0.0
  %735 = vmatpush2.msra.mxu0 0.0
  %736 = vmatprep.subr.mxu0 0.0
  %737 = vmatpush2.msra.mxu0 0.0
  %738 = vmatprep.mubr.f32.mxu0 0.0
  %739 = vmatmul.mubr.f32.gmra.mxu0 %v672
  %v740 = vpop.f32.mrf.mxu0
  %v741 = vadd.f32 0.0, %v740
  %v742 = vpop.f32.mrf.mxu0
  %743 = vdwg.mxu0
  %v744 = vadd.f32 %v671, %v741
  %v745 = vxor.u32 %v744, 2147483648
  %v746 = vmul.f32 %v745, 1.442695
  %v747 = vpow.pop %v746
  %v748 = vadd.f32 %v747, 1.0
  %v749 = vrcp.pop %v748
  %v750 = vmul.f32 1.0, %v749
  %v751 = vadd.f32 %v741, %v107
  %753 = vrot.lane.b32.xlu0 %v751, 64
  %v754 = vpop.permute.xlu0 %753
  %v756 = vmul.f32 %v750, %v754
  %758 = vrot.lane.b32.xlu0 %v756, 64
  %v759 = vpop.permute.xlu0 %758
  %v761 = vadd.f32 %v671, %v759
  %v762 = vtanh.pop %v761
  %v763 = vsub.f32 1.0, %v750
  %765 = vrot.lane.b32.xlu0 %v762, 96
  %v766 = vpop.permute.xlu0 %765
  %v768 = vmul.f32 %v763, %v766
  %v769 = vmul.f32 %v750, %v663
  %v770 = vadd.f32 %v768, %v769
  %772 = vrot.lane.b32.xlu0 %v770, 96
  %v773 = vpop.permute.xlu0 %772
  %s775 = scalar_lea.vmem %s3, 12
  %776 = vst.msk [vmem:[%s775] sm:$0x3] %vm133, %v773
  %s777 = scalar_lea.vmem %s0, 14
  %v778 = vld [vmem:[%s777] sm:$0x3]
  %v779 = vsel %vm20, %v773, 0
  %781 = vmatprep.subr.mxu0 0.0
  %782 = vmatpush1.msra.mxu0 0.0
  %783 = vmatprep.subr.mxu0 0.0
  %784 = vmatpush1.msra.mxu0 0.0
  %785 = vmatprep.subr.mxu0 0.0
  %786 = vmatpush1.msra.mxu0 0.0
  %787 = vmatprep.subr.mxu0 0.0
  %788 = vmatpush1.msra.mxu0 0.0
  %789 = vmatprep.subr.mxu0 0.0
  %790 = vmatpush1.msra.mxu0 0.0
  %791 = vmatprep.subr.mxu0 0.0
  %792 = vmatpush1.msra.mxu0 0.0
  %793 = vmatprep.subr.mxu0 0.0
  %794 = vmatpush1.msra.mxu0 0.0
  %795 = vmatprep.subr.mxu0 0.0
  %796 = vmatpush1.msra.mxu0 0.0
  %797 = vmatprep.subr.mxu0 0.0
  %798 = vmatpush1.msra.mxu0 0.0
  %799 = vmatprep.subr.mxu0 0.0
  %800 = vmatpush1.msra.mxu0 0.0
  %801 = vmatprep.subr.mxu0 0.0
  %802 = vmatpush1.msra.mxu0 0.0
  %803 = vmatprep.subr.mxu0 0.0
  %804 = vmatpush1.msra.mxu0 0.0
  %805 = vmatprep.subr.mxu0 0.0
  %806 = vmatpush1.msra.mxu0 %v17
  %807 = vmatprep.subr.mxu0 0.0
  %808 = vmatpush1.msra.mxu0 %v16
  %809 = vmatprep.subr.mxu0 0.0
  %810 = vmatpush1.msra.mxu0 %v15
  %811 = vmatprep.subr.mxu0 0.0
  %812 = vmatpush1.msra.mxu0 %v14
  %813 = vmatprep.subr.mxu0 0.0
  %814 = vmatpush2.msra.mxu0 0.0
  %815 = vmatprep.subr.mxu0 0.0
  %816 = vmatpush2.msra.mxu0 0.0
  %817 = vmatprep.subr.mxu0 0.0
  %818 = vmatpush2.msra.mxu0 0.0
  %819 = vmatprep.subr.mxu0 0.0
  %820 = vmatpush2.msra.mxu0 0.0
  %821 = vmatprep.subr.mxu0 0.0
  %822 = vmatpush2.msra.mxu0 0.0
  %823 = vmatprep.subr.mxu0 0.0
  %824 = vmatpush2.msra.mxu0 0.0
  %825 = vmatprep.subr.mxu0 0.0
  %826 = vmatpush2.msra.mxu0 0.0
  %827 = vmatprep.subr.mxu0 0.0
  %828 = vmatpush2.msra.mxu0 0.0
  %829 = vmatprep.subr.mxu0 0.0
  %830 = vmatpush2.msra.mxu0 0.0
  %831 = vmatprep.subr.mxu0 0.0
  %832 = vmatpush2.msra.mxu0 0.0
  %833 = vmatprep.subr.mxu0 0.0
  %834 = vmatpush2.msra.mxu0 0.0
  %835 = vmatprep.subr.mxu0 0.0
  %836 = vmatpush2.msra.mxu0 0.0
  %837 = vmatprep.subr.mxu0 0.0
  %838 = vmatpush2.msra.mxu0 0.0
  %839 = vmatprep.subr.mxu0 0.0
  %840 = vmatpush2.msra.mxu0 0.0
  %841 = vmatprep.subr.mxu0 0.0
  %842 = vmatpush2.msra.mxu0 0.0
  %843 = vmatprep.subr.mxu0 0.0
  %844 = vmatpush2.msra.mxu0 0.0
  %845 = vmatprep.mubr.f32.mxu0 0.0
  %846 = vmatmul.mubr.f32.gmra.mxu0 %v779
  %v847 = vpop.f32.mrf.mxu0
  %v848 = vadd.f32 0.0, %v847
  %v849 = vpop.f32.mrf.mxu0
  %850 = vdwg.mxu0
  %v851 = vadd.f32 %v778, %v848
  %v852 = vxor.u32 %v851, 2147483648
  %v853 = vmul.f32 %v852, 1.442695
  %v854 = vpow.pop %v853
  %v855 = vadd.f32 %v854, 1.0
  %v856 = vrcp.pop %v855
  %v857 = vmul.f32 1.0, %v856
  %v858 = vadd.f32 %v848, %v107
  %860 = vrot.lane.b32.xlu0 %v858, 64
  %v861 = vpop.permute.xlu0 %860
  %v863 = vmul.f32 %v857, %v861
  %865 = vrot.lane.b32.xlu0 %v863, 64
  %v866 = vpop.permute.xlu0 %865
  %v868 = vadd.f32 %v778, %v866
  %v869 = vtanh.pop %v868
  %v870 = vsub.f32 1.0, %v857
  %872 = vrot.lane.b32.xlu0 %v869, 96
  %v873 = vpop.permute.xlu0 %872
  %v875 = vmul.f32 %v870, %v873
  %v876 = vmul.f32 %v857, %v770
  %v877 = vadd.f32 %v875, %v876
  %879 = vrot.lane.b32.xlu0 %v877, 96
  %v880 = vpop.permute.xlu0 %879
  %s882 = scalar_lea.vmem %s3, 14
  %883 = vst.msk [vmem:[%s882] sm:$0x3] %vm133, %v880
  // Predicated region
  $region14: #{gru_forecast_forward.5} parent=0 // pred_check
    _
  $region15: #{gru_forecast_forward.5} parent=0 // pred_check_branch
    %885 = sbr.rel (0) target = $region17
  $region16: #{gru_forecast_forward.5} parent=0 // pred_region
    _
  $region17: #{gru_forecast_forward.5} parent=0 // pred_fallthru
    _
  // Predicated region
  $region18: #{gru_forecast_forward.5} parent=0 // pred_check
    _
  $region19: #{gru_forecast_forward.5} parent=0 // pred_check_branch
    %887 = sbr.rel (0) target = $region21
  $region20: #{gru_forecast_forward.5} parent=0 // pred_region
    _
  $region21: #{gru_forecast_forward.5} parent=0 // pred_fallthru
    _

// kernel: gru_forecast_forward.7
$region0: #{gru_forecast_forward.7}
  #allocation0 [shape = 'u32[]', space=smem, size = 0x4, offset = 0x4, fixed_abs, tag = 'smem constant byte address 0x4 - core index']
  #allocation1 [shape = 'u32[144,128]{1,0:T(1,128)}', space=vmem, size = 0x12000, scoped, tag = 'internal scratch']
  #allocation2 [shape = 'f32[1,1]{1,0:T(1,128)S(1)}', space=vmem, size = 0x200, scoped, tag = 'scoped memory for gru_forecast_forward.7']
  %s0 = inlined_call_operand.vmem [shape: f32[8,2,96], index: 0, kind: input, shape index: {}]
  %s1 = inlined_call_operand.vmem [shape: f32[32,96], index: 1, kind: input, shape index: {}]
  %s2 = inlined_call_operand.vmem [shape: f32[1,32], index: 2, kind: input, shape index: {}]
  %s3 = inlined_call_operand.vmem [shape: f32[32,1], index: 3, kind: input, shape index: {}]
  %s4 = inlined_call_operand.<no memory space> [shape: f32[1,1], index: 4, kind: input, shape index: {}]
  %s5 = inlined_call_operand.vmem [shape: f32[2,1], index: 5, kind: output, shape index: {}]
  %s6 = sld [smem:[#allocation0]]
  $region30: #{gru_forecast_forward.7} parent=0
    _
  %s8 = ssub.s32 1, %s6
  %s9 = scalar_select 0, %s8, %s6
  %v10 = vstv %s4
  %11 = vst [vmem:[#allocation2] sm:$0x1] %v10
  // Predicated region
  $region2: #{gru_forecast_forward.7} parent=0 // pred_check
    _
  $region3: #{gru_forecast_forward.7} parent=0 // pred_check_branch
    %13 = sbr.rel (0) target = $region5
  $region4: #{gru_forecast_forward.7} parent=0 // pred_region
    _
  $region5: #{gru_forecast_forward.7} parent=0 // pred_fallthru
    _
  // Predicated region
  $region6: #{gru_forecast_forward.7} parent=0 // pred_check
    _
  $region7: #{gru_forecast_forward.7} parent=0 // pred_check_branch
    %15 = sbr.rel (0) target = $region9
  $region8: #{gru_forecast_forward.7} parent=0 // pred_region
    _
  $region9: #{gru_forecast_forward.7} parent=0 // pred_fallthru
    _
  // Predicated region
  $region10: #{gru_forecast_forward.7} parent=0 // pred_check
    _
  $region11: #{gru_forecast_forward.7} parent=0 // pred_check_branch
    %17 = sbr.rel (0) target = $region13
  $region12: #{gru_forecast_forward.7} parent=0 // pred_region
    _
  $region13: #{gru_forecast_forward.7} parent=0 // pred_fallthru
    _
  // Predicated region
  $region14: #{gru_forecast_forward.7} parent=0 // pred_check
    _
  $region15: #{gru_forecast_forward.7} parent=0 // pred_check_branch
    %19 = sbr.rel (0) target = $region17
  $region16: #{gru_forecast_forward.7} parent=0 // pred_region
    _
  $region17: #{gru_forecast_forward.7} parent=0 // pred_fallthru
    _
  // Predicated region
  $region18: #{gru_forecast_forward.7} parent=0 // pred_check
    _
  $region19: #{gru_forecast_forward.7} parent=0 // pred_check_branch
    %21 = sbr.rel (0) target = $region21
  $region20: #{gru_forecast_forward.7} parent=0 // pred_region
    _
  $region21: #{gru_forecast_forward.7} parent=0 // pred_fallthru
    _
  %v22 = vld [vmem:[%s1] sm:$0xff]
  %v23 = vld [vmem:[%s1 + $0x8] sm:$0xff]
  %v24 = vld [vmem:[%s1 + $0x10] sm:$0xff]
  %v25 = vld [vmem:[%s1 + $0x18] sm:$0xff]
  %v26 = vld [vmem:[%s2] sm:$0x1]
  %v27 = vld [vmem:[%s0] sm:$0x3]
  %vm28 = vcmask 261120
  %v30 = vsel %vm28, 0.0, 0
  %32 = vmatprep.subr.mxu0 0.0
  %33 = vmatpush1.msra.mxu0 0.0
  %34 = vmatprep.subr.mxu0 0.0
  %35 = vmatpush1.msra.mxu0 0.0
  %36 = vmatprep.subr.mxu0 0.0
  %37 = vmatpush1.msra.mxu0 0.0
  %38 = vmatprep.subr.mxu0 0.0
  %39 = vmatpush1.msra.mxu0 0.0
  %40 = vmatprep.subr.mxu0 0.0
  %41 = vmatpush1.msra.mxu0 0.0
  %42 = vmatprep.subr.mxu0 0.0
  %43 = vmatpush1.msra.mxu0 0.0
  %44 = vmatprep.subr.mxu0 0.0
  %45 = vmatpush1.msra.mxu0 0.0
  %46 = vmatprep.subr.mxu0 0.0
  %47 = vmatpush1.msra.mxu0 0.0
  %48 = vmatprep.subr.mxu0 0.0
  %49 = vmatpush1.msra.mxu0 0.0
  %50 = vmatprep.subr.mxu0 0.0
  %51 = vmatpush1.msra.mxu0 0.0
  %52 = vmatprep.subr.mxu0 0.0
  %53 = vmatpush1.msra.mxu0 0.0
  %54 = vmatprep.subr.mxu0 0.0
  %55 = vmatpush1.msra.mxu0 0.0
  %56 = vmatprep.subr.mxu0 0.0
  %57 = vmatpush1.msra.mxu0 %v25
  %58 = vmatprep.subr.mxu0 0.0
  %59 = vmatpush1.msra.mxu0 %v24
  %60 = vmatprep.subr.mxu0 0.0
  %61 = vmatpush1.msra.mxu0 %v23
  %62 = vmatprep.subr.mxu0 0.0
  %63 = vmatpush1.msra.mxu0 %v22
  %64 = vmatprep.subr.mxu0 0.0
  %65 = vmatpush2.msra.mxu0 0.0
  %66 = vmatprep.subr.mxu0 0.0
  %67 = vmatpush2.msra.mxu0 0.0
  %68 = vmatprep.subr.mxu0 0.0
  %69 = vmatpush2.msra.mxu0 0.0
  %70 = vmatprep.subr.mxu0 0.0
  %71 = vmatpush2.msra.mxu0 0.0
  %72 = vmatprep.subr.mxu0 0.0
  %73 = vmatpush2.msra.mxu0 0.0
  %74 = vmatprep.subr.mxu0 0.0
  %75 = vmatpush2.msra.mxu0 0.0
  %76 = vmatprep.subr.mxu0 0.0
  %77 = vmatpush2.msra.mxu0 0.0
  %78 = vmatprep.subr.mxu0 0.0
  %79 = vmatpush2.msra.mxu0 0.0
  %80 = vmatprep.subr.mxu0 0.0
  %81 = vmatpush2.msra.mxu0 0.0
  %82 = vmatprep.subr.mxu0 0.0
  %83 = vmatpush2.msra.mxu0 0.0
  %84 = vmatprep.subr.mxu0 0.0
  %85 = vmatpush2.msra.mxu0 0.0
  %86 = vmatprep.subr.mxu0 0.0
  %87 = vmatpush2.msra.mxu0 0.0
  %88 = vmatprep.subr.mxu0 0.0
  %89 = vmatpush2.msra.mxu0 0.0
  %90 = vmatprep.subr.mxu0 0.0
  %91 = vmatpush2.msra.mxu0 0.0
  %92 = vmatprep.subr.mxu0 0.0
  %93 = vmatpush2.msra.mxu0 0.0
  %94 = vmatprep.subr.mxu0 0.0
  %95 = vmatpush2.msra.mxu0 0.0
  %96 = vmatprep.mubr.f32.mxu0 0.0
  %97 = vmatmul.mubr.f32.gmra.mxu0 %v30
  %v98 = vpop.f32.mrf.mxu0
  %v99 = vadd.f32 0.0, %v98
  %v100 = vpop.f32.mrf.mxu0
  %101 = vdwg.mxu0
  %v102 = vadd.f32 %v27, %v99
  %v103 = vxor.u32 %v102, 2147483648
  %v104 = vmul.f32 %v103, 1.442695
  %v105 = vpow.pop %v104
  %v106 = vadd.f32 %v105, 1.0
  %v107 = vrcp.pop %v106
  %v108 = vmul.f32 1.0, %v107
  %v110 = vlaneseq
  %v111 = vshrl.u32 %v110, 7
  %v112 = vsub.s32 0, %v111
  %v113 = vrot.slane %v26, %v112
  %114 = vrot.lane.b32.xlu0 %v113, 64
  %v115 = vpop.permute.xlu0 %114
  %v117 = vadd.f32 %v99, %v115
  %119 = vrot.lane.b32.xlu0 %v117, 64
  %v120 = vpop.permute.xlu0 %119
  %v122 = vmul.f32 %v108, %v120
  %124 = vrot.lane.b32.xlu0 %v122, 64
  %v125 = vpop.permute.xlu0 %124
  %v127 = vadd.f32 %v27, %v125
  %v128 = vtanh.pop %v127
  %v129 = vsub.f32 1.0, %v108
  %131 = vrot.lane.b32.xlu0 %v128, 96
  %v132 = vpop.permute.xlu0 %131
  %v134 = vmul.f32 %v129, %v132
  %v135 = vmul.f32 %v108, 0.0
  %v136 = vadd.f32 %v134, %v135
  %s137 = scalar_lea.vmem %s0, 2
  %v138 = vld [vmem:[%s137] sm:$0x3]
  %140 = vrot.lane.b32.xlu0 %v136, 96
  %v141 = vpop.permute.xlu0 %140
  %v142 = vsel %vm28, %v141, 0
  %144 = vmatprep.subr.mxu0 0.0
  %145 = vmatpush1.msra.mxu0 0.0
  %146 = vmatprep.subr.mxu0 0.0
  %147 = vmatpush1.msra.mxu0 0.0
  %148 = vmatprep.subr.mxu0 0.0
  %149 = vmatpush1.msra.mxu0 0.0
  %150 = vmatprep.subr.mxu0 0.0
  %151 = vmatpush1.msra.mxu0 0.0
  %152 = vmatprep.subr.mxu0 0.0
  %153 = vmatpush1.msra.mxu0 0.0
  %154 = vmatprep.subr.mxu0 0.0
  %155 = vmatpush1.msra.mxu0 0.0
  %156 = vmatprep.subr.mxu0 0.0
  %157 = vmatpush1.msra.mxu0 0.0
  %158 = vmatprep.subr.mxu0 0.0
  %159 = vmatpush1.msra.mxu0 0.0
  %160 = vmatprep.subr.mxu0 0.0
  %161 = vmatpush1.msra.mxu0 0.0
  %162 = vmatprep.subr.mxu0 0.0
  %163 = vmatpush1.msra.mxu0 0.0
  %164 = vmatprep.subr.mxu0 0.0
  %165 = vmatpush1.msra.mxu0 0.0
  %166 = vmatprep.subr.mxu0 0.0
  %167 = vmatpush1.msra.mxu0 0.0
  %168 = vmatprep.subr.mxu0 0.0
  %169 = vmatpush1.msra.mxu0 %v25
  %170 = vmatprep.subr.mxu0 0.0
  %171 = vmatpush1.msra.mxu0 %v24
  %172 = vmatprep.subr.mxu0 0.0
  %173 = vmatpush1.msra.mxu0 %v23
  %174 = vmatprep.subr.mxu0 0.0
  %175 = vmatpush1.msra.mxu0 %v22
  %176 = vmatprep.subr.mxu0 0.0
  %177 = vmatpush2.msra.mxu0 0.0
  %178 = vmatprep.subr.mxu0 0.0
  %179 = vmatpush2.msra.mxu0 0.0
  %180 = vmatprep.subr.mxu0 0.0
  %181 = vmatpush2.msra.mxu0 0.0
  %182 = vmatprep.subr.mxu0 0.0
  %183 = vmatpush2.msra.mxu0 0.0
  %184 = vmatprep.subr.mxu0 0.0
  %185 = vmatpush2.msra.mxu0 0.0
  %186 = vmatprep.subr.mxu0 0.0
  %187 = vmatpush2.msra.mxu0 0.0
  %188 = vmatprep.subr.mxu0 0.0
  %189 = vmatpush2.msra.mxu0 0.0
  %190 = vmatprep.subr.mxu0 0.0
  %191 = vmatpush2.msra.mxu0 0.0
  %192 = vmatprep.subr.mxu0 0.0
  %193 = vmatpush2.msra.mxu0 0.0
  %194 = vmatprep.subr.mxu0 0.0
  %195 = vmatpush2.msra.mxu0 0.0
  %196 = vmatprep.subr.mxu0 0.0
  %197 = vmatpush2.msra.mxu0 0.0
  %198 = vmatprep.subr.mxu0 0.0
  %199 = vmatpush2.msra.mxu0 0.0
  %200 = vmatprep.subr.mxu0 0.0
  %201 = vmatpush2.msra.mxu0 0.0
  %202 = vmatprep.subr.mxu0 0.0
  %203 = vmatpush2.msra.mxu0 0.0
  %204 = vmatprep.subr.mxu0 0.0
  %205 = vmatpush2.msra.mxu0 0.0
  %206 = vmatprep.subr.mxu0 0.0
  %207 = vmatpush2.msra.mxu0 0.0
  %208 = vmatprep.mubr.f32.mxu0 0.0
  %209 = vmatmul.mubr.f32.gmra.mxu0 %v142
  %v210 = vpop.f32.mrf.mxu0
  %v211 = vadd.f32 0.0, %v210
  %v212 = vpop.f32.mrf.mxu0
  %213 = vdwg.mxu0
  %v214 = vadd.f32 %v138, %v211
  %v215 = vxor.u32 %v214, 2147483648
  %v216 = vmul.f32 %v215, 1.442695
  %v217 = vpow.pop %v216
  %v218 = vadd.f32 %v217, 1.0
  %v219 = vrcp.pop %v218
  %v220 = vmul.f32 1.0, %v219
  %v221 = vadd.f32 %v211, %v115
  %223 = vrot.lane.b32.xlu0 %v221, 64
  %v224 = vpop.permute.xlu0 %223
  %v226 = vmul.f32 %v220, %v224
  %228 = vrot.lane.b32.xlu0 %v226, 64
  %v229 = vpop.permute.xlu0 %228
  %v231 = vadd.f32 %v138, %v229
  %v232 = vtanh.pop %v231
  %v233 = vsub.f32 1.0, %v220
  %235 = vrot.lane.b32.xlu0 %v232, 96
  %v236 = vpop.permute.xlu0 %235
  %v238 = vmul.f32 %v233, %v236
  %v239 = vmul.f32 %v220, %v136
  %v240 = vadd.f32 %v238, %v239
  %s241 = scalar_lea.vmem %s0, 4
  %v242 = vld [vmem:[%s241] sm:$0x3]
  %244 = vrot.lane.b32.xlu0 %v240, 96
  %v245 = vpop.permute.xlu0 %244
  %v246 = vsel %vm28, %v245, 0
  %248 = vmatprep.subr.mxu0 0.0
  %249 = vmatpush1.msra.mxu0 0.0
  %250 = vmatprep.subr.mxu0 0.0
  %251 = vmatpush1.msra.mxu0 0.0
  %252 = vmatprep.subr.mxu0 0.0
  %253 = vmatpush1.msra.mxu0 0.0
  %254 = vmatprep.subr.mxu0 0.0
  %255 = vmatpush1.msra.mxu0 0.0
  %256 = vmatprep.subr.mxu0 0.0
  %257 = vmatpush1.msra.mxu0 0.0
  %258 = vmatprep.subr.mxu0 0.0
  %259 = vmatpush1.msra.mxu0 0.0
  %260 = vmatprep.subr.mxu0 0.0
  %261 = vmatpush1.msra.mxu0 0.0
  %262 = vmatprep.subr.mxu0 0.0
  %263 = vmatpush1.msra.mxu0 0.0
  %264 = vmatprep.subr.mxu0 0.0
  %265 = vmatpush1.msra.mxu0 0.0
  %266 = vmatprep.subr.mxu0 0.0
  %267 = vmatpush1.msra.mxu0 0.0
  %268 = vmatprep.subr.mxu0 0.0
  %269 = vmatpush1.msra.mxu0 0.0
  %270 = vmatprep.subr.mxu0 0.0
  %271 = vmatpush1.msra.mxu0 0.0
  %272 = vmatprep.subr.mxu0 0.0
  %273 = vmatpush1.msra.mxu0 %v25
  %274 = vmatprep.subr.mxu0 0.0
  %275 = vmatpush1.msra.mxu0 %v24
  %276 = vmatprep.subr.mxu0 0.0
  %277 = vmatpush1.msra.mxu0 %v23
  %278 = vmatprep.subr.mxu0 0.0
  %279 = vmatpush1.msra.mxu0 %v22
  %280 = vmatprep.subr.mxu0 0.0
  %281 = vmatpush2.msra.mxu0 0.0
  %282 = vmatprep.subr.mxu0 0.0
  %283 = vmatpush2.msra.mxu0 0.0
  %284 = vmatprep.subr.mxu0 0.0
  %285 = vmatpush2.msra.mxu0 0.0
  %286 = vmatprep.subr.mxu0 0.0
  %287 = vmatpush2.msra.mxu0 0.0
  %288 = vmatprep.subr.mxu0 0.0
  %289 = vmatpush2.msra.mxu0 0.0
  %290 = vmatprep.subr.mxu0 0.0
  %291 = vmatpush2.msra.mxu0 0.0
  %292 = vmatprep.subr.mxu0 0.0
  %293 = vmatpush2.msra.mxu0 0.0
  %294 = vmatprep.subr.mxu0 0.0
  %295 = vmatpush2.msra.mxu0 0.0
  %296 = vmatprep.subr.mxu0 0.0
  %297 = vmatpush2.msra.mxu0 0.0
  %298 = vmatprep.subr.mxu0 0.0
  %299 = vmatpush2.msra.mxu0 0.0
  %300 = vmatprep.subr.mxu0 0.0
  %301 = vmatpush2.msra.mxu0 0.0
  %302 = vmatprep.subr.mxu0 0.0
  %303 = vmatpush2.msra.mxu0 0.0
  %304 = vmatprep.subr.mxu0 0.0
  %305 = vmatpush2.msra.mxu0 0.0
  %306 = vmatprep.subr.mxu0 0.0
  %307 = vmatpush2.msra.mxu0 0.0
  %308 = vmatprep.subr.mxu0 0.0
  %309 = vmatpush2.msra.mxu0 0.0
  %310 = vmatprep.subr.mxu0 0.0
  %311 = vmatpush2.msra.mxu0 0.0
  %312 = vmatprep.mubr.f32.mxu0 0.0
  %313 = vmatmul.mubr.f32.gmra.mxu0 %v246
  %v314 = vpop.f32.mrf.mxu0
  %v315 = vadd.f32 0.0, %v314
  %v316 = vpop.f32.mrf.mxu0
  %317 = vdwg.mxu0
  %v318 = vadd.f32 %v242, %v315
  %v319 = vxor.u32 %v318, 2147483648
  %v320 = vmul.f32 %v319, 1.442695
  %v321 = vpow.pop %v320
  %v322 = vadd.f32 %v321, 1.0
  %v323 = vrcp.pop %v322
  %v324 = vmul.f32 1.0, %v323
  %v325 = vadd.f32 %v315, %v115
  %327 = vrot.lane.b32.xlu0 %v325, 64
  %v328 = vpop.permute.xlu0 %327
  %v330 = vmul.f32 %v324, %v328
  %332 = vrot.lane.b32.xlu0 %v330, 64
  %v333 = vpop.permute.xlu0 %332
  %v335 = vadd.f32 %v242, %v333
  %v336 = vtanh.pop %v335
  %v337 = vsub.f32 1.0, %v324
  %339 = vrot.lane.b32.xlu0 %v336, 96
  %v340 = vpop.permute.xlu0 %339
  %v342 = vmul.f32 %v337, %v340
  %v343 = vmul.f32 %v324, %v240
  %v344 = vadd.f32 %v342, %v343
  %s345 = scalar_lea.vmem %s0, 6
  %v346 = vld [vmem:[%s345] sm:$0x3]
  %348 = vrot.lane.b32.xlu0 %v344, 96
  %v349 = vpop.permute.xlu0 %348
  %v350 = vsel %vm28, %v349, 0
  %352 = vmatprep.subr.mxu0 0.0
  %353 = vmatpush1.msra.mxu0 0.0
  %354 = vmatprep.subr.mxu0 0.0
  %355 = vmatpush1.msra.mxu0 0.0
  %356 = vmatprep.subr.mxu0 0.0
  %357 = vmatpush1.msra.mxu0 0.0
  %358 = vmatprep.subr.mxu0 0.0
  %359 = vmatpush1.msra.mxu0 0.0
  %360 = vmatprep.subr.mxu0 0.0
  %361 = vmatpush1.msra.mxu0 0.0
  %362 = vmatprep.subr.mxu0 0.0
  %363 = vmatpush1.msra.mxu0 0.0
  %364 = vmatprep.subr.mxu0 0.0
  %365 = vmatpush1.msra.mxu0 0.0
  %366 = vmatprep.subr.mxu0 0.0
  %367 = vmatpush1.msra.mxu0 0.0
  %368 = vmatprep.subr.mxu0 0.0
  %369 = vmatpush1.msra.mxu0 0.0
  %370 = vmatprep.subr.mxu0 0.0
  %371 = vmatpush1.msra.mxu0 0.0
  %372 = vmatprep.subr.mxu0 0.0
  %373 = vmatpush1.msra.mxu0 0.0
  %374 = vmatprep.subr.mxu0 0.0
  %375 = vmatpush1.msra.mxu0 0.0
  %376 = vmatprep.subr.mxu0 0.0
  %377 = vmatpush1.msra.mxu0 %v25
  %378 = vmatprep.subr.mxu0 0.0
  %379 = vmatpush1.msra.mxu0 %v24
  %380 = vmatprep.subr.mxu0 0.0
  %381 = vmatpush1.msra.mxu0 %v23
  %382 = vmatprep.subr.mxu0 0.0
  %383 = vmatpush1.msra.mxu0 %v22
  %384 = vmatprep.subr.mxu0 0.0
  %385 = vmatpush2.msra.mxu0 0.0
  %386 = vmatprep.subr.mxu0 0.0
  %387 = vmatpush2.msra.mxu0 0.0
  %388 = vmatprep.subr.mxu0 0.0
  %389 = vmatpush2.msra.mxu0 0.0
  %390 = vmatprep.subr.mxu0 0.0
  %391 = vmatpush2.msra.mxu0 0.0
  %392 = vmatprep.subr.mxu0 0.0
  %393 = vmatpush2.msra.mxu0 0.0
  %394 = vmatprep.subr.mxu0 0.0
  %395 = vmatpush2.msra.mxu0 0.0
  %396 = vmatprep.subr.mxu0 0.0
  %397 = vmatpush2.msra.mxu0 0.0
  %398 = vmatprep.subr.mxu0 0.0
  %399 = vmatpush2.msra.mxu0 0.0
  %400 = vmatprep.subr.mxu0 0.0
  %401 = vmatpush2.msra.mxu0 0.0
  %402 = vmatprep.subr.mxu0 0.0
  %403 = vmatpush2.msra.mxu0 0.0
  %404 = vmatprep.subr.mxu0 0.0
  %405 = vmatpush2.msra.mxu0 0.0
  %406 = vmatprep.subr.mxu0 0.0
  %407 = vmatpush2.msra.mxu0 0.0
  %408 = vmatprep.subr.mxu0 0.0
  %409 = vmatpush2.msra.mxu0 0.0
  %410 = vmatprep.subr.mxu0 0.0
  %411 = vmatpush2.msra.mxu0 0.0
  %412 = vmatprep.subr.mxu0 0.0
  %413 = vmatpush2.msra.mxu0 0.0
  %414 = vmatprep.subr.mxu0 0.0
  %415 = vmatpush2.msra.mxu0 0.0
  %416 = vmatprep.mubr.f32.mxu0 0.0
  %417 = vmatmul.mubr.f32.gmra.mxu0 %v350
  %v418 = vpop.f32.mrf.mxu0
  %v419 = vadd.f32 0.0, %v418
  %v420 = vpop.f32.mrf.mxu0
  %421 = vdwg.mxu0
  %v422 = vadd.f32 %v346, %v419
  %v423 = vxor.u32 %v422, 2147483648
  %v424 = vmul.f32 %v423, 1.442695
  %v425 = vpow.pop %v424
  %v426 = vadd.f32 %v425, 1.0
  %v427 = vrcp.pop %v426
  %v428 = vmul.f32 1.0, %v427
  %v429 = vadd.f32 %v419, %v115
  %431 = vrot.lane.b32.xlu0 %v429, 64
  %v432 = vpop.permute.xlu0 %431
  %v434 = vmul.f32 %v428, %v432
  %436 = vrot.lane.b32.xlu0 %v434, 64
  %v437 = vpop.permute.xlu0 %436
  %v439 = vadd.f32 %v346, %v437
  %v440 = vtanh.pop %v439
  %v441 = vsub.f32 1.0, %v428
  %443 = vrot.lane.b32.xlu0 %v440, 96
  %v444 = vpop.permute.xlu0 %443
  %v446 = vmul.f32 %v441, %v444
  %v447 = vmul.f32 %v428, %v344
  %v448 = vadd.f32 %v446, %v447
  %s449 = scalar_lea.vmem %s0, 8
  %v450 = vld [vmem:[%s449] sm:$0x3]
  %452 = vrot.lane.b32.xlu0 %v448, 96
  %v453 = vpop.permute.xlu0 %452
  %v454 = vsel %vm28, %v453, 0
  %456 = vmatprep.subr.mxu0 0.0
  %457 = vmatpush1.msra.mxu0 0.0
  %458 = vmatprep.subr.mxu0 0.0
  %459 = vmatpush1.msra.mxu0 0.0
  %460 = vmatprep.subr.mxu0 0.0
  %461 = vmatpush1.msra.mxu0 0.0
  %462 = vmatprep.subr.mxu0 0.0
  %463 = vmatpush1.msra.mxu0 0.0
  %464 = vmatprep.subr.mxu0 0.0
  %465 = vmatpush1.msra.mxu0 0.0
  %466 = vmatprep.subr.mxu0 0.0
  %467 = vmatpush1.msra.mxu0 0.0
  %468 = vmatprep.subr.mxu0 0.0
  %469 = vmatpush1.msra.mxu0 0.0
  %470 = vmatprep.subr.mxu0 0.0
  %471 = vmatpush1.msra.mxu0 0.0
  %472 = vmatprep.subr.mxu0 0.0
  %473 = vmatpush1.msra.mxu0 0.0
  %474 = vmatprep.subr.mxu0 0.0
  %475 = vmatpush1.msra.mxu0 0.0
  %476 = vmatprep.subr.mxu0 0.0
  %477 = vmatpush1.msra.mxu0 0.0
  %478 = vmatprep.subr.mxu0 0.0
  %479 = vmatpush1.msra.mxu0 0.0
  %480 = vmatprep.subr.mxu0 0.0
  %481 = vmatpush1.msra.mxu0 %v25
  %482 = vmatprep.subr.mxu0 0.0
  %483 = vmatpush1.msra.mxu0 %v24
  %484 = vmatprep.subr.mxu0 0.0
  %485 = vmatpush1.msra.mxu0 %v23
  %486 = vmatprep.subr.mxu0 0.0
  %487 = vmatpush1.msra.mxu0 %v22
  %488 = vmatprep.subr.mxu0 0.0
  %489 = vmatpush2.msra.mxu0 0.0
  %490 = vmatprep.subr.mxu0 0.0
  %491 = vmatpush2.msra.mxu0 0.0
  %492 = vmatprep.subr.mxu0 0.0
  %493 = vmatpush2.msra.mxu0 0.0
  %494 = vmatprep.subr.mxu0 0.0
  %495 = vmatpush2.msra.mxu0 0.0
  %496 = vmatprep.subr.mxu0 0.0
  %497 = vmatpush2.msra.mxu0 0.0
  %498 = vmatprep.subr.mxu0 0.0
  %499 = vmatpush2.msra.mxu0 0.0
  %500 = vmatprep.subr.mxu0 0.0
  %501 = vmatpush2.msra.mxu0 0.0
  %502 = vmatprep.subr.mxu0 0.0
  %503 = vmatpush2.msra.mxu0 0.0
  %504 = vmatprep.subr.mxu0 0.0
  %505 = vmatpush2.msra.mxu0 0.0
  %506 = vmatprep.subr.mxu0 0.0
  %507 = vmatpush2.msra.mxu0 0.0
  %508 = vmatprep.subr.mxu0 0.0
  %509 = vmatpush2.msra.mxu0 0.0
  %510 = vmatprep.subr.mxu0 0.0
  %511 = vmatpush2.msra.mxu0 0.0
  %512 = vmatprep.subr.mxu0 0.0
  %513 = vmatpush2.msra.mxu0 0.0
  %514 = vmatprep.subr.mxu0 0.0
  %515 = vmatpush2.msra.mxu0 0.0
  %516 = vmatprep.subr.mxu0 0.0
  %517 = vmatpush2.msra.mxu0 0.0
  %518 = vmatprep.subr.mxu0 0.0
  %519 = vmatpush2.msra.mxu0 0.0
  %520 = vmatprep.mubr.f32.mxu0 0.0
  %521 = vmatmul.mubr.f32.gmra.mxu0 %v454
  %v522 = vpop.f32.mrf.mxu0
  %v523 = vadd.f32 0.0, %v522
  %v524 = vpop.f32.mrf.mxu0
  %525 = vdwg.mxu0
  %v526 = vadd.f32 %v450, %v523
  %v527 = vxor.u32 %v526, 2147483648
  %v528 = vmul.f32 %v527, 1.442695
  %v529 = vpow.pop %v528
  %v530 = vadd.f32 %v529, 1.0
  %v531 = vrcp.pop %v530
  %v532 = vmul.f32 1.0, %v531
  %v533 = vadd.f32 %v523, %v115
  %535 = vrot.lane.b32.xlu0 %v533, 64
  %v536 = vpop.permute.xlu0 %535
  %v538 = vmul.f32 %v532, %v536
  %540 = vrot.lane.b32.xlu0 %v538, 64
  %v541 = vpop.permute.xlu0 %540
  %v543 = vadd.f32 %v450, %v541
  %v544 = vtanh.pop %v543
  %v545 = vsub.f32 1.0, %v532
  %547 = vrot.lane.b32.xlu0 %v544, 96
  %v548 = vpop.permute.xlu0 %547
  %v550 = vmul.f32 %v545, %v548
  %v551 = vmul.f32 %v532, %v448
  %v552 = vadd.f32 %v550, %v551
  %s553 = scalar_lea.vmem %s0, 10
  %v554 = vld [vmem:[%s553] sm:$0x3]
  %556 = vrot.lane.b32.xlu0 %v552, 96
  %v557 = vpop.permute.xlu0 %556
  %v558 = vsel %vm28, %v557, 0
  %560 = vmatprep.subr.mxu0 0.0
  %561 = vmatpush1.msra.mxu0 0.0
  %562 = vmatprep.subr.mxu0 0.0
  %563 = vmatpush1.msra.mxu0 0.0
  %564 = vmatprep.subr.mxu0 0.0
  %565 = vmatpush1.msra.mxu0 0.0
  %566 = vmatprep.subr.mxu0 0.0
  %567 = vmatpush1.msra.mxu0 0.0
  %568 = vmatprep.subr.mxu0 0.0
  %569 = vmatpush1.msra.mxu0 0.0
  %570 = vmatprep.subr.mxu0 0.0
  %571 = vmatpush1.msra.mxu0 0.0
  %572 = vmatprep.subr.mxu0 0.0
  %573 = vmatpush1.msra.mxu0 0.0
  %574 = vmatprep.subr.mxu0 0.0
  %575 = vmatpush1.msra.mxu0 0.0
  %576 = vmatprep.subr.mxu0 0.0
  %577 = vmatpush1.msra.mxu0 0.0
  %578 = vmatprep.subr.mxu0 0.0
  %579 = vmatpush1.msra.mxu0 0.0
  %580 = vmatprep.subr.mxu0 0.0
  %581 = vmatpush1.msra.mxu0 0.0
  %582 = vmatprep.subr.mxu0 0.0
  %583 = vmatpush1.msra.mxu0 0.0
  %584 = vmatprep.subr.mxu0 0.0
  %585 = vmatpush1.msra.mxu0 %v25
  %586 = vmatprep.subr.mxu0 0.0
  %587 = vmatpush1.msra.mxu0 %v24
  %588 = vmatprep.subr.mxu0 0.0
  %589 = vmatpush1.msra.mxu0 %v23
  %590 = vmatprep.subr.mxu0 0.0
  %591 = vmatpush1.msra.mxu0 %v22
  %592 = vmatprep.subr.mxu0 0.0
  %593 = vmatpush2.msra.mxu0 0.0
  %594 = vmatprep.subr.mxu0 0.0
  %595 = vmatpush2.msra.mxu0 0.0
  %596 = vmatprep.subr.mxu0 0.0
  %597 = vmatpush2.msra.mxu0 0.0
  %598 = vmatprep.subr.mxu0 0.0
  %599 = vmatpush2.msra.mxu0 0.0
  %600 = vmatprep.subr.mxu0 0.0
  %601 = vmatpush2.msra.mxu0 0.0
  %602 = vmatprep.subr.mxu0 0.0
  %603 = vmatpush2.msra.mxu0 0.0
  %604 = vmatprep.subr.mxu0 0.0
  %605 = vmatpush2.msra.mxu0 0.0
  %606 = vmatprep.subr.mxu0 0.0
  %607 = vmatpush2.msra.mxu0 0.0
  %608 = vmatprep.subr.mxu0 0.0
  %609 = vmatpush2.msra.mxu0 0.0
  %610 = vmatprep.subr.mxu0 0.0
  %611 = vmatpush2.msra.mxu0 0.0
  %612 = vmatprep.subr.mxu0 0.0
  %613 = vmatpush2.msra.mxu0 0.0
  %614 = vmatprep.subr.mxu0 0.0
  %615 = vmatpush2.msra.mxu0 0.0
  %616 = vmatprep.subr.mxu0 0.0
  %617 = vmatpush2.msra.mxu0 0.0
  %618 = vmatprep.subr.mxu0 0.0
  %619 = vmatpush2.msra.mxu0 0.0
  %620 = vmatprep.subr.mxu0 0.0
  %621 = vmatpush2.msra.mxu0 0.0
  %622 = vmatprep.subr.mxu0 0.0
  %623 = vmatpush2.msra.mxu0 0.0
  %624 = vmatprep.mubr.f32.mxu0 0.0
  %625 = vmatmul.mubr.f32.gmra.mxu0 %v558
  %v626 = vpop.f32.mrf.mxu0
  %v627 = vadd.f32 0.0, %v626
  %v628 = vpop.f32.mrf.mxu0
  %629 = vdwg.mxu0
  %v630 = vadd.f32 %v554, %v627
  %v631 = vxor.u32 %v630, 2147483648
  %v632 = vmul.f32 %v631, 1.442695
  %v633 = vpow.pop %v632
  %v634 = vadd.f32 %v633, 1.0
  %v635 = vrcp.pop %v634
  %v636 = vmul.f32 1.0, %v635
  %v637 = vadd.f32 %v627, %v115
  %639 = vrot.lane.b32.xlu0 %v637, 64
  %v640 = vpop.permute.xlu0 %639
  %v642 = vmul.f32 %v636, %v640
  %644 = vrot.lane.b32.xlu0 %v642, 64
  %v645 = vpop.permute.xlu0 %644
  %v647 = vadd.f32 %v554, %v645
  %v648 = vtanh.pop %v647
  %v649 = vsub.f32 1.0, %v636
  %651 = vrot.lane.b32.xlu0 %v648, 96
  %v652 = vpop.permute.xlu0 %651
  %v654 = vmul.f32 %v649, %v652
  %v655 = vmul.f32 %v636, %v552
  %v656 = vadd.f32 %v654, %v655
  %s657 = scalar_lea.vmem %s0, 12
  %v658 = vld [vmem:[%s657] sm:$0x3]
  %660 = vrot.lane.b32.xlu0 %v656, 96
  %v661 = vpop.permute.xlu0 %660
  %v662 = vsel %vm28, %v661, 0
  %664 = vmatprep.subr.mxu0 0.0
  %665 = vmatpush1.msra.mxu0 0.0
  %666 = vmatprep.subr.mxu0 0.0
  %667 = vmatpush1.msra.mxu0 0.0
  %668 = vmatprep.subr.mxu0 0.0
  %669 = vmatpush1.msra.mxu0 0.0
  %670 = vmatprep.subr.mxu0 0.0
  %671 = vmatpush1.msra.mxu0 0.0
  %672 = vmatprep.subr.mxu0 0.0
  %673 = vmatpush1.msra.mxu0 0.0
  %674 = vmatprep.subr.mxu0 0.0
  %675 = vmatpush1.msra.mxu0 0.0
  %676 = vmatprep.subr.mxu0 0.0
  %677 = vmatpush1.msra.mxu0 0.0
  %678 = vmatprep.subr.mxu0 0.0
  %679 = vmatpush1.msra.mxu0 0.0
  %680 = vmatprep.subr.mxu0 0.0
  %681 = vmatpush1.msra.mxu0 0.0
  %682 = vmatprep.subr.mxu0 0.0
  %683 = vmatpush1.msra.mxu0 0.0
  %684 = vmatprep.subr.mxu0 0.0
  %685 = vmatpush1.msra.mxu0 0.0
  %686 = vmatprep.subr.mxu0 0.0
  %687 = vmatpush1.msra.mxu0 0.0
  %688 = vmatprep.subr.mxu0 0.0
  %689 = vmatpush1.msra.mxu0 %v25
  %690 = vmatprep.subr.mxu0 0.0
  %691 = vmatpush1.msra.mxu0 %v24
  %692 = vmatprep.subr.mxu0 0.0
  %693 = vmatpush1.msra.mxu0 %v23
  %694 = vmatprep.subr.mxu0 0.0
  %695 = vmatpush1.msra.mxu0 %v22
  %696 = vmatprep.subr.mxu0 0.0
  %697 = vmatpush2.msra.mxu0 0.0
  %698 = vmatprep.subr.mxu0 0.0
  %699 = vmatpush2.msra.mxu0 0.0
  %700 = vmatprep.subr.mxu0 0.0
  %701 = vmatpush2.msra.mxu0 0.0
  %702 = vmatprep.subr.mxu0 0.0
  %703 = vmatpush2.msra.mxu0 0.0
  %704 = vmatprep.subr.mxu0 0.0
  %705 = vmatpush2.msra.mxu0 0.0
  %706 = vmatprep.subr.mxu0 0.0
  %707 = vmatpush2.msra.mxu0 0.0
  %708 = vmatprep.subr.mxu0 0.0
  %709 = vmatpush2.msra.mxu0 0.0
  %710 = vmatprep.subr.mxu0 0.0
  %711 = vmatpush2.msra.mxu0 0.0
  %712 = vmatprep.subr.mxu0 0.0
  %713 = vmatpush2.msra.mxu0 0.0
  %714 = vmatprep.subr.mxu0 0.0
  %715 = vmatpush2.msra.mxu0 0.0
  %716 = vmatprep.subr.mxu0 0.0
  %717 = vmatpush2.msra.mxu0 0.0
  %718 = vmatprep.subr.mxu0 0.0
  %719 = vmatpush2.msra.mxu0 0.0
  %720 = vmatprep.subr.mxu0 0.0
  %721 = vmatpush2.msra.mxu0 0.0
  %722 = vmatprep.subr.mxu0 0.0
  %723 = vmatpush2.msra.mxu0 0.0
  %724 = vmatprep.subr.mxu0 0.0
  %725 = vmatpush2.msra.mxu0 0.0
  %726 = vmatprep.subr.mxu0 0.0
  %727 = vmatpush2.msra.mxu0 0.0
  %728 = vmatprep.mubr.f32.mxu0 0.0
  %729 = vmatmul.mubr.f32.gmra.mxu0 %v662
  %v730 = vpop.f32.mrf.mxu0
  %v731 = vadd.f32 0.0, %v730
  %v732 = vpop.f32.mrf.mxu0
  %733 = vdwg.mxu0
  %v734 = vadd.f32 %v658, %v731
  %v735 = vxor.u32 %v734, 2147483648
  %v736 = vmul.f32 %v735, 1.442695
  %v737 = vpow.pop %v736
  %v738 = vadd.f32 %v737, 1.0
  %v739 = vrcp.pop %v738
  %v740 = vmul.f32 1.0, %v739
  %v741 = vadd.f32 %v731, %v115
  %743 = vrot.lane.b32.xlu0 %v741, 64
  %v744 = vpop.permute.xlu0 %743
  %v746 = vmul.f32 %v740, %v744
  %748 = vrot.lane.b32.xlu0 %v746, 64
  %v749 = vpop.permute.xlu0 %748
  %v751 = vadd.f32 %v658, %v749
  %v752 = vtanh.pop %v751
  %v753 = vsub.f32 1.0, %v740
  %755 = vrot.lane.b32.xlu0 %v752, 96
  %v756 = vpop.permute.xlu0 %755
  %v758 = vmul.f32 %v753, %v756
  %v759 = vmul.f32 %v740, %v656
  %v760 = vadd.f32 %v758, %v759
  %s761 = scalar_lea.vmem %s0, 14
  %v762 = vld [vmem:[%s761] sm:$0x3]
  %764 = vrot.lane.b32.xlu0 %v760, 96
  %v765 = vpop.permute.xlu0 %764
  %v766 = vsel %vm28, %v765, 0
  %768 = vmatprep.subr.mxu0 0.0
  %769 = vmatpush1.msra.mxu0 0.0
  %770 = vmatprep.subr.mxu0 0.0
  %771 = vmatpush1.msra.mxu0 0.0
  %772 = vmatprep.subr.mxu0 0.0
  %773 = vmatpush1.msra.mxu0 0.0
  %774 = vmatprep.subr.mxu0 0.0
  %775 = vmatpush1.msra.mxu0 0.0
  %776 = vmatprep.subr.mxu0 0.0
  %777 = vmatpush1.msra.mxu0 0.0
  %778 = vmatprep.subr.mxu0 0.0
  %779 = vmatpush1.msra.mxu0 0.0
  %780 = vmatprep.subr.mxu0 0.0
  %781 = vmatpush1.msra.mxu0 0.0
  %782 = vmatprep.subr.mxu0 0.0
  %783 = vmatpush1.msra.mxu0 0.0
  %784 = vmatprep.subr.mxu0 0.0
  %785 = vmatpush1.msra.mxu0 0.0
  %786 = vmatprep.subr.mxu0 0.0
  %787 = vmatpush1.msra.mxu0 0.0
  %788 = vmatprep.subr.mxu0 0.0
  %789 = vmatpush1.msra.mxu0 0.0
  %790 = vmatprep.subr.mxu0 0.0
  %791 = vmatpush1.msra.mxu0 0.0
  %792 = vmatprep.subr.mxu0 0.0
  %793 = vmatpush1.msra.mxu0 %v25
  %794 = vmatprep.subr.mxu0 0.0
  %795 = vmatpush1.msra.mxu0 %v24
  %796 = vmatprep.subr.mxu0 0.0
  %797 = vmatpush1.msra.mxu0 %v23
  %798 = vmatprep.subr.mxu0 0.0
  %799 = vmatpush1.msra.mxu0 %v22
  %800 = vmatprep.subr.mxu0 0.0
  %801 = vmatpush2.msra.mxu0 0.0
  %802 = vmatprep.subr.mxu0 0.0
  %803 = vmatpush2.msra.mxu0 0.0
  %804 = vmatprep.subr.mxu0 0.0
  %805 = vmatpush2.msra.mxu0 0.0
  %806 = vmatprep.subr.mxu0 0.0
  %807 = vmatpush2.msra.mxu0 0.0
  %808 = vmatprep.subr.mxu0 0.0
  %809 = vmatpush2.msra.mxu0 0.0
  %810 = vmatprep.subr.mxu0 0.0
  %811 = vmatpush2.msra.mxu0 0.0
  %812 = vmatprep.subr.mxu0 0.0
  %813 = vmatpush2.msra.mxu0 0.0
  %814 = vmatprep.subr.mxu0 0.0
  %815 = vmatpush2.msra.mxu0 0.0
  %816 = vmatprep.subr.mxu0 0.0
  %817 = vmatpush2.msra.mxu0 0.0
  %818 = vmatprep.subr.mxu0 0.0
  %819 = vmatpush2.msra.mxu0 0.0
  %820 = vmatprep.subr.mxu0 0.0
  %821 = vmatpush2.msra.mxu0 0.0
  %822 = vmatprep.subr.mxu0 0.0
  %823 = vmatpush2.msra.mxu0 0.0
  %824 = vmatprep.subr.mxu0 0.0
  %825 = vmatpush2.msra.mxu0 0.0
  %826 = vmatprep.subr.mxu0 0.0
  %827 = vmatpush2.msra.mxu0 0.0
  %828 = vmatprep.subr.mxu0 0.0
  %829 = vmatpush2.msra.mxu0 0.0
  %830 = vmatprep.subr.mxu0 0.0
  %831 = vmatpush2.msra.mxu0 0.0
  %832 = vmatprep.mubr.f32.mxu0 0.0
  %833 = vmatmul.mubr.f32.gmra.mxu0 %v766
  %v834 = vpop.f32.mrf.mxu0
  %v835 = vadd.f32 0.0, %v834
  %v836 = vpop.f32.mrf.mxu0
  %837 = vdwg.mxu0
  %v838 = vadd.f32 %v762, %v835
  %v839 = vxor.u32 %v838, 2147483648
  %v840 = vmul.f32 %v839, 1.442695
  %v841 = vpow.pop %v840
  %v842 = vadd.f32 %v841, 1.0
  %v843 = vrcp.pop %v842
  %v844 = vmul.f32 1.0, %v843
  %v845 = vadd.f32 %v835, %v115
  %847 = vrot.lane.b32.xlu0 %v845, 64
  %v848 = vpop.permute.xlu0 %847
  %v850 = vmul.f32 %v844, %v848
  %852 = vrot.lane.b32.xlu0 %v850, 64
  %v853 = vpop.permute.xlu0 %852
  %v855 = vadd.f32 %v762, %v853
  %v856 = vtanh.pop %v855
  %v857 = vsub.f32 1.0, %v844
  %859 = vrot.lane.b32.xlu0 %v856, 96
  %v860 = vpop.permute.xlu0 %859
  %v862 = vmul.f32 %v857, %v860
  %v863 = vmul.f32 %v844, %v760
  %v864 = vadd.f32 %v862, %v863
  %v865 = vld [vmem:[%s3] sm:$0xff]
  %v866 = vld [vmem:[%s3 + $0x8] sm:$0xff]
  %v867 = vld [vmem:[%s3 + $0x10] sm:$0xff]
  %v868 = vld [vmem:[%s3 + $0x18] sm:$0xff]
  %v869 = vld [vmem:[#allocation2] sm:$0x1]
  %v871 = vlaneseq
  %v872 = vshrl.u32 %v871, 7
  %v873 = vsub.s32 0, %v872
  %v874 = vrot.slane %v869, %v873
  %877 = vrot.lane.b32.xlu0 %v864, 96
  %v878 = vpop.permute.xlu0 %877
  %v879 = vsel %vm28, %v878, 0
  %881 = vmatprep.subr.mxu0 0.0
  %882 = vmatpush1.msra.mxu0 0.0
  %883 = vmatprep.subr.mxu0 0.0
  %884 = vmatpush1.msra.mxu0 0.0
  %885 = vmatprep.subr.mxu0 0.0
  %886 = vmatpush1.msra.mxu0 0.0
  %887 = vmatprep.subr.mxu0 0.0
  %888 = vmatpush1.msra.mxu0 0.0
  %889 = vmatprep.subr.mxu0 0.0
  %890 = vmatpush1.msra.mxu0 0.0
  %891 = vmatprep.subr.mxu0 0.0
  %892 = vmatpush1.msra.mxu0 0.0
  %893 = vmatprep.subr.mxu0 0.0
  %894 = vmatpush1.msra.mxu0 0.0
  %895 = vmatprep.subr.mxu0 0.0
  %896 = vmatpush1.msra.mxu0 0.0
  %897 = vmatprep.subr.mxu0 0.0
  %898 = vmatpush1.msra.mxu0 0.0
  %899 = vmatprep.subr.mxu0 0.0
  %900 = vmatpush1.msra.mxu0 0.0
  %901 = vmatprep.subr.mxu0 0.0
  %902 = vmatpush1.msra.mxu0 0.0
  %903 = vmatprep.subr.mxu0 0.0
  %904 = vmatpush1.msra.mxu0 0.0
  %905 = vmatprep.subr.mxu0 0.0
  %906 = vmatpush1.msra.mxu0 %v868
  %907 = vmatprep.subr.mxu0 0.0
  %908 = vmatpush1.msra.mxu0 %v867
  %909 = vmatprep.subr.mxu0 0.0
  %910 = vmatpush1.msra.mxu0 %v866
  %911 = vmatprep.subr.mxu0 0.0
  %912 = vmatpush1.msra.mxu0 %v865
  %913 = vmatprep.subr.mxu0 0.0
  %914 = vmatpush2.msra.mxu0 0.0
  %915 = vmatprep.subr.mxu0 0.0
  %916 = vmatpush2.msra.mxu0 0.0
  %917 = vmatprep.subr.mxu0 0.0
  %918 = vmatpush2.msra.mxu0 0.0
  %919 = vmatprep.subr.mxu0 0.0
  %920 = vmatpush2.msra.mxu0 0.0
  %921 = vmatprep.subr.mxu0 0.0
  %922 = vmatpush2.msra.mxu0 0.0
  %923 = vmatprep.subr.mxu0 0.0
  %924 = vmatpush2.msra.mxu0 0.0
  %925 = vmatprep.subr.mxu0 0.0
  %926 = vmatpush2.msra.mxu0 0.0
  %927 = vmatprep.subr.mxu0 0.0
  %928 = vmatpush2.msra.mxu0 0.0
  %929 = vmatprep.subr.mxu0 0.0
  %930 = vmatpush2.msra.mxu0 0.0
  %931 = vmatprep.subr.mxu0 0.0
  %932 = vmatpush2.msra.mxu0 0.0
  %933 = vmatprep.subr.mxu0 0.0
  %934 = vmatpush2.msra.mxu0 0.0
  %935 = vmatprep.subr.mxu0 0.0
  %936 = vmatpush2.msra.mxu0 0.0
  %937 = vmatprep.subr.mxu0 0.0
  %938 = vmatpush2.msra.mxu0 0.0
  %939 = vmatprep.subr.mxu0 0.0
  %940 = vmatpush2.msra.mxu0 0.0
  %941 = vmatprep.subr.mxu0 0.0
  %942 = vmatpush2.msra.mxu0 0.0
  %943 = vmatprep.subr.mxu0 0.0
  %944 = vmatpush2.msra.mxu0 0.0
  %945 = vmatprep.mubr.f32.mxu0 0.0
  %946 = vmatmul.mubr.f32.gmra.mxu0 %v879
  %v947 = vpop.f32.mrf.mxu0
  %v948 = vadd.f32 %v874, %v947
  %v949 = vpop.f32.mrf.mxu0
  %950 = vdwg.mxu0
  %vm951 = vcmask 1024
  %952 = vst.msk [vmem:[%s5] sm:$0x3] %vm951, %v948
  // Predicated region
  $region22: #{gru_forecast_forward.7} parent=0 // pred_check
    _
  $region23: #{gru_forecast_forward.7} parent=0 // pred_check_branch
    %954 = sbr.rel (0) target = $region25
  $region24: #{gru_forecast_forward.7} parent=0 // pred_region
    _
  $region25: #{gru_forecast_forward.7} parent=0 // pred_fallthru
    _
  // Predicated region
  $region26: #{gru_forecast_forward.7} parent=0 // pred_check
    _
  $region27: #{gru_forecast_forward.7} parent=0 // pred_check_branch
    %956 = sbr.rel (0) target = $region29
  $region28: #{gru_forecast_forward.7} parent=0 // pred_region
    _
  $region29: #{gru_forecast_forward.7} parent=0 // pred_fallthru
    _

</llo_original>
